<compile_context>
chip_gen: v7x
topology: tpu7x:2x2x1
jax: 0.10.0
libtpu: 0.0.40
codegen_flags: <defaults>
</compile_context>

<pallas_src>
import math
from functools import partial

import jax
import jax.numpy as jnp
from jax import lax
from jax.experimental import pallas as pl
from jax.experimental.pallas import tpu as pltpu


# ------------------------------ model config -------------------------------

VOCAB = 100
TYPE_VOCAB = 2
MAX_POS = 16
HIDDEN = 32
NUM_HEADS = 4
HEAD_DIM = HIDDEN // NUM_HEADS
INTERMEDIATE = 64
NUM_LAYERS = 2
NUM_LABELS = 3
LANE = 128          # lane-dense padded width for the classifier output
LN_EPS = 1e-12


# ----------------------------- fused Pallas kernel ---------------------------

def _bert_fused_kernel(
    emb_ref, mask_ref,
    emb_ln_g_ref, emb_ln_b_ref,
    wqkv_ref, bqkv_ref,
    wo_ref, bo_ref, ln1_g_ref, ln1_b_ref,
    wi_ref, bi_ref, wo2_ref, bo2_ref, ln2_g_ref, ln2_b_ref,
    pooler_w_ref, pooler_b_ref,
    cls_w_ref, cls_b_ref,
    out_ref,
    ctx_scratch,
    *, batch, seq,
):
    B, S, H, NH, Dh = batch, seq, HIDDEN, NUM_HEADS, HEAD_DIM
    M = B * S
    scale = 1.0 / math.sqrt(Dh)

    def layernorm(x, g, b):
        mean = jnp.mean(x, axis=-1, keepdims=True)
        diff = x - mean
        var = jnp.mean(diff * diff, axis=-1, keepdims=True)
        return diff * lax.rsqrt(var + LN_EPS) * g + b

    def matmul(x, w_bf16):
        # bf16 MXU operands, f32 accumulate.
        return jnp.dot(x.astype(jnp.bfloat16), w_bf16,
                       preferred_element_type=jnp.float32)

    # ---- embedding LayerNorm ----
    x = layernorm(emb_ref[...], emb_ln_g_ref[...], emb_ln_b_ref[...])   # [M, H] f32

    # ---- encoder layers ----
    for l in range(NUM_LAYERS):
        # fused QKV projection: [M, 3H]
        qkv = matmul(x, wqkv_ref[l]) + bqkv_ref[l]

        # multi-head self-attention, per (batch, head), results assembled in VMEM
        for b in range(B):
            mask_b = mask_ref[b]                                         # [1, S]
            r0, r1 = b * S, (b + 1) * S
            for h in range(NH):
                q = qkv[r0:r1, h * Dh:(h + 1) * Dh]                      # [S, Dh]
                k = qkv[r0:r1, H + h * Dh:H + (h + 1) * Dh]              # [S, Dh]
                v = qkv[r0:r1, 2 * H + h * Dh:2 * H + (h + 1) * Dh]      # [S, Dh]

                # scores = q @ k^T (contract last dims, no explicit transpose)
                s = lax.dot_general(
                    q.astype(jnp.bfloat16), k.astype(jnp.bfloat16),
                    (((1,), (1,)), ((), ())),
                    preferred_element_type=jnp.float32) * scale          # [S, S]
                s = s + mask_b                                           # additive mask
                s = s - jnp.max(s, axis=-1, keepdims=True)
                p = jnp.exp(s)
                denom = jnp.sum(p, axis=-1, keepdims=True)
                p = p * pl.reciprocal(denom, approx=True)                # EUP slot

                ctx = jnp.dot(p.astype(jnp.bfloat16), v.astype(jnp.bfloat16),
                              preferred_element_type=jnp.float32)        # [S, Dh]
                ctx_scratch[r0:r1, h * Dh:(h + 1) * Dh] = ctx

        ctx = ctx_scratch[...]                                           # [M, H]

        # attention output projection + residual + LayerNorm
        attn_out = matmul(ctx, wo_ref[l]) + bo_ref[l]
        x = layernorm(attn_out + x, ln1_g_ref[l], ln1_b_ref[l])

        # feed-forward (GELU, tanh approximation) + residual + LayerNorm
        hmid = matmul(x, wi_ref[l]) + bi_ref[l]
        hmid = 0.5 * hmid * (1.0 + jnp.tanh(
            0.7978845608028654 * (hmid + 0.044715 * hmid * hmid * hmid)))
        ffn = matmul(hmid, wo2_ref[l]) + bo2_ref[l]
        x = layernorm(ffn + x, ln2_g_ref[l], ln2_b_ref[l])

    # ---- pooler (dense + tanh) and classifier head ----
    # Row-wise ops: compute for all tokens; the wrapper keeps only the [CLS] rows.
    pooled = jnp.tanh(matmul(x, pooler_w_ref[...]) + pooler_b_ref[...])  # [M, H]
    out_ref[...] = matmul(pooled, cls_w_ref[...]) + cls_b_ref[...]       # [M, LANE]


# ------------------------------ params --------------------------------------

def init_params(key):
    def normal(key, shape):
        return (0.02 * jax.random.normal(key, shape)).astype(jnp.float32)

    keys = iter(jax.random.split(key, 256))
    p = {
        "word_emb": normal(next(keys), (VOCAB, HIDDEN)),
        "pos_emb": normal(next(keys), (MAX_POS, HIDDEN)),
        "type_emb": normal(next(keys), (TYPE_VOCAB, HIDDEN)),
        "emb_ln_g": jnp.ones((HIDDEN,), jnp.float32),
        "emb_ln_b": jnp.zeros((HIDDEN,), jnp.float32),
        "layers": [],
        "pooler_w": normal(next(keys), (HIDDEN, HIDDEN)),
        "pooler_b": jnp.zeros((HIDDEN,), jnp.float32),
        "cls_w": normal(next(keys), (HIDDEN, NUM_LABELS)),
        "cls_b": jnp.zeros((NUM_LABELS,), jnp.float32),
    }
    for _ in range(NUM_LAYERS):
        layer = {
            "wq": normal(next(keys), (HIDDEN, HIDDEN)), "bq": jnp.zeros((HIDDEN,), jnp.float32),
            "wk": normal(next(keys), (HIDDEN, HIDDEN)), "bk": jnp.zeros((HIDDEN,), jnp.float32),
            "wv": normal(next(keys), (HIDDEN, HIDDEN)), "bv": jnp.zeros((HIDDEN,), jnp.float32),
            "wo": normal(next(keys), (HIDDEN, HIDDEN)), "bo": jnp.zeros((HIDDEN,), jnp.float32),
            "attn_ln_g": jnp.ones((HIDDEN,), jnp.float32),
            "attn_ln_b": jnp.zeros((HIDDEN,), jnp.float32),
            "wi": normal(next(keys), (HIDDEN, INTERMEDIATE)), "bi": jnp.zeros((INTERMEDIATE,), jnp.float32),
            "wo2": normal(next(keys), (INTERMEDIATE, HIDDEN)), "bo2": jnp.zeros((HIDDEN,), jnp.float32),
            "out_ln_g": jnp.ones((HIDDEN,), jnp.float32),
            "out_ln_b": jnp.zeros((HIDDEN,), jnp.float32),
        }
        p["layers"].append(layer)
    return p


def pack_params(p):
    """One-time repack: stack per-layer weights, fuse QKV, cast matmul weights
    to bf16, pad the classifier head to a lane-dense (128-wide) output."""
    def stack(name):
        return jnp.stack([lyr[name] for lyr in p["layers"]], axis=0)

    wqkv = jnp.stack(
        [jnp.concatenate([lyr["wq"], lyr["wk"], lyr["wv"]], axis=1) for lyr in p["layers"]],
        axis=0)                                                          # [L, H, 3H]
    bqkv = jnp.stack(
        [jnp.concatenate([lyr["bq"], lyr["bk"], lyr["bv"]])[None, :] for lyr in p["layers"]],
        axis=0)                                                          # [L, 1, 3H]

    cls_w_pad = jnp.zeros((HIDDEN, LANE), jnp.float32).at[:, :NUM_LABELS].set(p["cls_w"])
    cls_b_pad = jnp.zeros((1, LANE), jnp.float32).at[0, :NUM_LABELS].set(p["cls_b"])

    return {
        "word_emb": p["word_emb"],
        "pos_emb": p["pos_emb"],
        "type_emb": p["type_emb"],
        "emb_ln_g": p["emb_ln_g"][None, :],
        "emb_ln_b": p["emb_ln_b"][None, :],
        "wqkv": wqkv.astype(jnp.bfloat16),
        "bqkv": bqkv,
        "wo": stack("wo").astype(jnp.bfloat16),
        "bo": stack("bo")[:, None, :],
        "ln1_g": stack("attn_ln_g")[:, None, :],
        "ln1_b": stack("attn_ln_b")[:, None, :],
        "wi": stack("wi").astype(jnp.bfloat16),
        "bi": stack("bi")[:, None, :],
        "wo2": stack("wo2").astype(jnp.bfloat16),
        "bo2": stack("bo2")[:, None, :],
        "ln2_g": stack("out_ln_g")[:, None, :],
        "ln2_b": stack("out_ln_b")[:, None, :],
        "pooler_w": p["pooler_w"].astype(jnp.bfloat16),
        "pooler_b": p["pooler_b"][None, :],
        "cls_w": cls_w_pad.astype(jnp.bfloat16),
        "cls_b": cls_b_pad,
    }


# ------------------------------ forward pass --------------------------------

def _zeros_map(nd):
    return lambda i: (0,) * nd


@jax.jit
def bert_classifier_forward(pp, input_ids, attention_mask=None, token_type_ids=None):
    B, S = input_ids.shape
    if attention_mask is None:
        attention_mask = jnp.ones((B, S), jnp.int32)
    if token_type_ids is None:
        token_type_ids = jnp.zeros((B, S), jnp.int32)

    # --- embeddings (index gather stays as XLA glue; everything else is fused) ---
    # TODO(synk): embedding gather (jnp.take) left in XLA; no clean tiny-Pallas equivalent.
    emb = (jnp.take(pp["word_emb"], input_ids, axis=0)
           + pp["pos_emb"][:S][None, :, :]
           + jnp.take(pp["type_emb"], token_type_ids, axis=0))           # [B, S, H]
    emb = emb.reshape(B * S, HIDDEN).astype(jnp.float32)

    # additive attention mask, shaped [B, 1, S] once (no per-head replication)
    mask_add = ((1.0 - attention_mask.astype(jnp.float32)) * -10000.0)[:, None, :]

    args = (emb, mask_add,
            pp["emb_ln_g"], pp["emb_ln_b"],
            pp["wqkv"], pp["bqkv"],
            pp["wo"], pp["bo"], pp["ln1_g"], pp["ln1_b"],
            pp["wi"], pp["bi"], pp["wo2"], pp["bo2"], pp["ln2_g"], pp["ln2_b"],
            pp["pooler_w"], pp["pooler_b"],
            pp["cls_w"], pp["cls_b"])

    out_pad = pl.pallas_call(
        partial(_bert_fused_kernel, batch=B, seq=S),
        out_shape=jax.ShapeDtypeStruct((B * S, LANE), jnp.float32),
        grid=(1,),
        in_specs=[pl.BlockSpec(a.shape, _zeros_map(a.ndim)) for a in args],
        out_specs=pl.BlockSpec((B * S, LANE), lambda i: (0, 0)),
        scratch_shapes=[pltpu.VMEM((B * S, HIDDEN), jnp.float32)],
        compiler_params=pltpu.CompilerParams(
            dimension_semantics=("arbitrary",)),
    )(*args)

    # keep only the [CLS] row per sequence and the real label columns
    logits = out_pad.reshape(B, S, LANE)[:, 0, :NUM_LABELS]              # [B, num_labels]
    return logits


# --------------------------------- main -------------------------------------

if __name__ == "__main__":
    key = jax.random.PRNGKey(0)
    pkey, ikey, mkey, tkey = jax.random.split(key, 4)

    params = init_params(pkey)
    packed = pack_params(params)

    B, S = 2, 8
    input_ids = jax.random.randint(ikey, (B, S), 0, VOCAB, dtype=jnp.int32)
    attention_mask = jnp.ones((B, S), jnp.int32)
    token_type_ids = jnp.zeros((B, S), jnp.int32)

    logits = bert_classifier_forward(packed, input_ids, attention_mask, token_type_ids)
    logits = jax.block_until_ready(logits)

    assert logits.shape == (B, NUM_LABELS)
    assert logits.dtype == jnp.float32
    print("KERNEL_OK")
</pallas_src>

<mosaic_0001>
module attributes {stable_mosaic.version = 11 : i64} {
  func.func @_bert_fused_kernel(%arg0: i32, %arg1: memref<16x32xf32, #tpu.memory_space<vmem>>, %arg2: memref<2x1x8xf32, #tpu.memory_space<vmem>>, %arg3: memref<1x32xf32, #tpu.memory_space<vmem>>, %arg4: memref<1x32xf32, #tpu.memory_space<vmem>>, %arg5: memref<2x32x96xbf16, #tpu.memory_space<vmem>>, %arg6: memref<2x1x96xf32, #tpu.memory_space<vmem>>, %arg7: memref<2x32x32xbf16, #tpu.memory_space<vmem>>, %arg8: memref<2x1x32xf32, #tpu.memory_space<vmem>>, %arg9: memref<2x1x32xf32, #tpu.memory_space<vmem>>, %arg10: memref<2x1x32xf32, #tpu.memory_space<vmem>>, %arg11: memref<2x32x64xbf16, #tpu.memory_space<vmem>>, %arg12: memref<2x1x64xf32, #tpu.memory_space<vmem>>, %arg13: memref<2x64x32xbf16, #tpu.memory_space<vmem>>, %arg14: memref<2x1x32xf32, #tpu.memory_space<vmem>>, %arg15: memref<2x1x32xf32, #tpu.memory_space<vmem>>, %arg16: memref<2x1x32xf32, #tpu.memory_space<vmem>>, %arg17: memref<32x32xbf16, #tpu.memory_space<vmem>>, %arg18: memref<1x32xf32, #tpu.memory_space<vmem>>, %arg19: memref<32x128xbf16, #tpu.memory_space<vmem>>, %arg20: memref<1x128xf32, #tpu.memory_space<vmem>>, %arg21: memref<16x128xf32, #tpu.memory_space<vmem>>, %arg22: memref<16x32xf32, #tpu.memory_space<vmem>>) attributes {dimension_semantics = [#tpu.dimension_semantics<arbitrary>], iteration_bounds = array<i64: 1>, scalar_prefetch = 0 : i64, scratch_operands = 1 : i64, tpu.core_type = #tpu.core_type<tc>, window_params = [{pipeline_mode = #tpu.pipeline_mode<synchronous>, transform_indices = @transform_0, window_bounds = array<i64: 16, 32>}, {pipeline_mode = #tpu.pipeline_mode<synchronous>, transform_indices = @transform_1, window_bounds = array<i64: 2, 1, 8>}, {pipeline_mode = #tpu.pipeline_mode<synchronous>, transform_indices = @transform_2, window_bounds = array<i64: 1, 32>}, {pipeline_mode = #tpu.pipeline_mode<synchronous>, transform_indices = @transform_3, window_bounds = array<i64: 1, 32>}, {pipeline_mode = #tpu.pipeline_mode<synchronous>, transform_indices = @transform_4, window_bounds = array<i64: 2, 32, 96>}, {pipeline_mode = #tpu.pipeline_mode<synchronous>, transform_indices = @transform_5, window_bounds = array<i64: 2, 1, 96>}, {pipeline_mode = #tpu.pipeline_mode<synchronous>, transform_indices = @transform_6, window_bounds = array<i64: 2, 32, 32>}, {pipeline_mode = #tpu.pipeline_mode<synchronous>, transform_indices = @transform_7, window_bounds = array<i64: 2, 1, 32>}, {pipeline_mode = #tpu.pipeline_mode<synchronous>, transform_indices = @transform_8, window_bounds = array<i64: 2, 1, 32>}, {pipeline_mode = #tpu.pipeline_mode<synchronous>, transform_indices = @transform_9, window_bounds = array<i64: 2, 1, 32>}, {pipeline_mode = #tpu.pipeline_mode<synchronous>, transform_indices = @transform_10, window_bounds = array<i64: 2, 32, 64>}, {pipeline_mode = #tpu.pipeline_mode<synchronous>, transform_indices = @transform_11, window_bounds = array<i64: 2, 1, 64>}, {pipeline_mode = #tpu.pipeline_mode<synchronous>, transform_indices = @transform_12, window_bounds = array<i64: 2, 64, 32>}, {pipeline_mode = #tpu.pipeline_mode<synchronous>, transform_indices = @transform_13, window_bounds = array<i64: 2, 1, 32>}, {pipeline_mode = #tpu.pipeline_mode<synchronous>, transform_indices = @transform_14, window_bounds = array<i64: 2, 1, 32>}, {pipeline_mode = #tpu.pipeline_mode<synchronous>, transform_indices = @transform_15, window_bounds = array<i64: 2, 1, 32>}, {pipeline_mode = #tpu.pipeline_mode<synchronous>, transform_indices = @transform_16, window_bounds = array<i64: 32, 32>}, {pipeline_mode = #tpu.pipeline_mode<synchronous>, transform_indices = @transform_17, window_bounds = array<i64: 1, 32>}, {pipeline_mode = #tpu.pipeline_mode<synchronous>, transform_indices = @transform_18, window_bounds = array<i64: 32, 128>}, {pipeline_mode = #tpu.pipeline_mode<synchronous>, transform_indices = @transform_19, window_bounds = array<i64: 1, 128>}, {pipeline_mode = #tpu.pipeline_mode<synchronous>, transform_indices = @transform_20, window_bounds = array<i64: 16, 128>}]} {
    %c0 = arith.constant 0 : index
    %c0_0 = arith.constant 0 : index
    %0 = vector.load %arg1[%c0, %c0_0] : memref<16x32xf32, #tpu.memory_space<vmem>>, vector<16x32xf32>
    %c0_1 = arith.constant 0 : index
    %c0_2 = arith.constant 0 : index
    %1 = vector.load %arg3[%c0_1, %c0_2] : memref<1x32xf32, #tpu.memory_space<vmem>>, vector<1x32xf32>
    %c0_3 = arith.constant 0 : index
    %c0_4 = arith.constant 0 : index
    %2 = vector.load %arg4[%c0_3, %c0_4] : memref<1x32xf32, #tpu.memory_space<vmem>>, vector<1x32xf32>
    %cst = arith.constant dense<0.000000e+00> : vector<16xf32>
    %3 = vector.multi_reduction <add>, %0, %cst [1] : vector<16x32xf32> to vector<16xf32>
    %4 = vector.shape_cast %3 : vector<16xf32> to vector<16x1xf32>
    %cst_5 = arith.constant 3.200000e+01 : f32
    %5 = vector.broadcast %cst_5 : f32 to vector<16x1xf32>
    %6 = arith.divf %4, %5 : vector<16x1xf32>
    %7 = vector.broadcast %6 : vector<16x1xf32> to vector<16x32xf32>
    %8 = arith.subf %0, %7 : vector<16x32xf32>
    %9 = arith.mulf %8, %8 : vector<16x32xf32>
    %cst_6 = arith.constant dense<0.000000e+00> : vector<16xf32>
    %10 = vector.multi_reduction <add>, %9, %cst_6 [1] : vector<16x32xf32> to vector<16xf32>
    %11 = vector.shape_cast %10 : vector<16xf32> to vector<16x1xf32>
    %cst_7 = arith.constant 3.200000e+01 : f32
    %12 = vector.broadcast %cst_7 : f32 to vector<16x1xf32>
    %13 = arith.divf %11, %12 : vector<16x1xf32>
    %cst_8 = arith.constant 9.99999996E-13 : f32
    %14 = vector.broadcast %cst_8 : f32 to vector<16x1xf32>
    %15 = arith.addf %13, %14 : vector<16x1xf32>
    %16 = math.rsqrt %15 : vector<16x1xf32>
    %17 = vector.broadcast %16 : vector<16x1xf32> to vector<16x32xf32>
    %18 = arith.mulf %8, %17 : vector<16x32xf32>
    %19 = vector.broadcast %1 : vector<1x32xf32> to vector<16x32xf32>
    %20 = arith.mulf %18, %19 : vector<16x32xf32>
    %21 = vector.broadcast %2 : vector<1x32xf32> to vector<16x32xf32>
    %22 = arith.addf %20, %21 : vector<16x32xf32>
    %c0_9 = arith.constant 0 : index
    %c0_10 = arith.constant 0 : index
    %c0_11 = arith.constant 0 : index
    %23 = vector.load %arg5[%c0_9, %c0_10, %c0_11] : memref<2x32x96xbf16, #tpu.memory_space<vmem>>, vector<1x32x96xbf16>
    %24 = vector.shape_cast %23 : vector<1x32x96xbf16> to vector<32x96xbf16>
    %25 = arith.truncf %22 : vector<16x32xf32> to vector<16x32xbf16>
    %cst_12 = arith.constant dense<0.000000e+00> : vector<16x96xf32>
    %26 = tpu.matmul %25, %24, %cst_12 {dimension_numbers = #tpu.dot_dimension_numbers<[1], [0], [0], [1], [0, 0, 1, 1], [], []>} : vector<16x32xbf16>, vector<32x96xbf16>, vector<16x96xf32> -> vector<16x96xf32>
    %c0_13 = arith.constant 0 : index
    %c0_14 = arith.constant 0 : index
    %c0_15 = arith.constant 0 : index
    %27 = vector.load %arg6[%c0_13, %c0_14, %c0_15] : memref<2x1x96xf32, #tpu.memory_space<vmem>>, vector<1x1x96xf32>
    %28 = vector.shape_cast %27 : vector<1x1x96xf32> to vector<1x96xf32>
    %29 = vector.broadcast %28 : vector<1x96xf32> to vector<16x96xf32>
    %30 = arith.addf %26, %29 : vector<16x96xf32>
    %c0_16 = arith.constant 0 : index
    %c0_17 = arith.constant 0 : index
    %c0_18 = arith.constant 0 : index
    %31 = vector.load %arg2[%c0_16, %c0_17, %c0_18] : memref<2x1x8xf32, #tpu.memory_space<vmem>>, vector<1x1x8xf32>
    %32 = vector.shape_cast %31 : vector<1x1x8xf32> to vector<1x8xf32>
    %33 = vector.extract_strided_slice %30 {offsets = [0, 0], sizes = [8, 8], strides = [1, 1]} : vector<16x96xf32> to vector<8x8xf32>
    %34 = vector.extract_strided_slice %30 {offsets = [0, 32], sizes = [8, 8], strides = [1, 1]} : vector<16x96xf32> to vector<8x8xf32>
    %35 = vector.extract_strided_slice %30 {offsets = [0, 64], sizes = [8, 8], strides = [1, 1]} : vector<16x96xf32> to vector<8x8xf32>
    %36 = arith.truncf %33 : vector<8x8xf32> to vector<8x8xbf16>
    %37 = arith.truncf %34 : vector<8x8xf32> to vector<8x8xbf16>
    %cst_19 = arith.constant dense<0.000000e+00> : vector<8x8xf32>
    %38 = tpu.matmul %36, %37, %cst_19 {dimension_numbers = #tpu.dot_dimension_numbers<[1], [1], [0], [0], [0, 0, 1, 0], [], []>} : vector<8x8xbf16>, vector<8x8xbf16>, vector<8x8xf32> -> vector<8x8xf32>
    %cst_20 = arith.constant 0.353553385 : f32
    %39 = vector.broadcast %cst_20 : f32 to vector<8x8xf32>
    %40 = arith.mulf %38, %39 : vector<8x8xf32>
    %41 = vector.broadcast %32 : vector<1x8xf32> to vector<8x8xf32>
    %42 = arith.addf %40, %41 : vector<8x8xf32>
    %cst_21 = arith.constant dense<0xFF800000> : vector<8xf32>
    %43 = vector.multi_reduction <maximumf>, %42, %cst_21 [1] : vector<8x8xf32> to vector<8xf32>
    %44 = vector.shape_cast %43 : vector<8xf32> to vector<8x1xf32>
    %45 = vector.broadcast %44 : vector<8x1xf32> to vector<8x8xf32>
    %46 = arith.subf %42, %45 : vector<8x8xf32>
    %47 = math.exp %46 : vector<8x8xf32>
    %cst_22 = arith.constant dense<0.000000e+00> : vector<8xf32>
    %48 = vector.multi_reduction <add>, %47, %cst_22 [1] : vector<8x8xf32> to vector<8xf32>
    %49 = vector.shape_cast %48 : vector<8xf32> to vector<8x1xf32>
    %50 = tpu.reciprocal %49 {approx = true} : vector<8x1xf32> -> vector<8x1xf32>
    %51 = vector.broadcast %50 : vector<8x1xf32> to vector<8x8xf32>
    %52 = arith.mulf %47, %51 : vector<8x8xf32>
    %53 = arith.truncf %52 : vector<8x8xf32> to vector<8x8xbf16>
    %54 = arith.truncf %35 : vector<8x8xf32> to vector<8x8xbf16>
    %cst_23 = arith.constant dense<0.000000e+00> : vector<8x8xf32>
    %55 = tpu.matmul %53, %54, %cst_23 {dimension_numbers = #tpu.dot_dimension_numbers<[1], [0], [0], [1], [0, 0, 1, 1], [], []>} : vector<8x8xbf16>, vector<8x8xbf16>, vector<8x8xf32> -> vector<8x8xf32>
    %c0_24 = arith.constant 0 : index
    %c0_25 = arith.constant 0 : index
    %56 = vector.load %arg22[%c0_24, %c0_25] : memref<16x32xf32, #tpu.memory_space<vmem>>, vector<8x8xf32>
    tpu.vector_store %arg22[%c0_24, %c0_25], %55 {strides = array<i32>} : memref<16x32xf32, #tpu.memory_space<vmem>>, vector<8x8xf32>,
    %57 = vector.extract_strided_slice %30 {offsets = [0, 8], sizes = [8, 8], strides = [1, 1]} : vector<16x96xf32> to vector<8x8xf32>
    %58 = vector.extract_strided_slice %30 {offsets = [0, 40], sizes = [8, 8], strides = [1, 1]} : vector<16x96xf32> to vector<8x8xf32>
    %59 = vector.extract_strided_slice %30 {offsets = [0, 72], sizes = [8, 8], strides = [1, 1]} : vector<16x96xf32> to vector<8x8xf32>
    %60 = arith.truncf %57 : vector<8x8xf32> to vector<8x8xbf16>
    %61 = arith.truncf %58 : vector<8x8xf32> to vector<8x8xbf16>
    %cst_26 = arith.constant dense<0.000000e+00> : vector<8x8xf32>
    %62 = tpu.matmul %60, %61, %cst_26 {dimension_numbers = #tpu.dot_dimension_numbers<[1], [1], [0], [0], [0, 0, 1, 0], [], []>} : vector<8x8xbf16>, vector<8x8xbf16>, vector<8x8xf32> -> vector<8x8xf32>
    %cst_27 = arith.constant 0.353553385 : f32
    %63 = vector.broadcast %cst_27 : f32 to vector<8x8xf32>
    %64 = arith.mulf %62, %63 : vector<8x8xf32>
    %65 = vector.broadcast %32 : vector<1x8xf32> to vector<8x8xf32>
    %66 = arith.addf %64, %65 : vector<8x8xf32>
    %cst_28 = arith.constant dense<0xFF800000> : vector<8xf32>
    %67 = vector.multi_reduction <maximumf>, %66, %cst_28 [1] : vector<8x8xf32> to vector<8xf32>
    %68 = vector.shape_cast %67 : vector<8xf32> to vector<8x1xf32>
    %69 = vector.broadcast %68 : vector<8x1xf32> to vector<8x8xf32>
    %70 = arith.subf %66, %69 : vector<8x8xf32>
    %71 = math.exp %70 : vector<8x8xf32>
    %cst_29 = arith.constant dense<0.000000e+00> : vector<8xf32>
    %72 = vector.multi_reduction <add>, %71, %cst_29 [1] : vector<8x8xf32> to vector<8xf32>
    %73 = vector.shape_cast %72 : vector<8xf32> to vector<8x1xf32>
    %74 = tpu.reciprocal %73 {approx = true} : vector<8x1xf32> -> vector<8x1xf32>
    %75 = vector.broadcast %74 : vector<8x1xf32> to vector<8x8xf32>
    %76 = arith.mulf %71, %75 : vector<8x8xf32>
    %77 = arith.truncf %76 : vector<8x8xf32> to vector<8x8xbf16>
    %78 = arith.truncf %59 : vector<8x8xf32> to vector<8x8xbf16>
    %cst_30 = arith.constant dense<0.000000e+00> : vector<8x8xf32>
    %79 = tpu.matmul %77, %78, %cst_30 {dimension_numbers = #tpu.dot_dimension_numbers<[1], [0], [0], [1], [0, 0, 1, 1], [], []>} : vector<8x8xbf16>, vector<8x8xbf16>, vector<8x8xf32> -> vector<8x8xf32>
    %c0_31 = arith.constant 0 : index
    %c8 = arith.constant 8 : index
    %80 = vector.load %arg22[%c0_31, %c8] : memref<16x32xf32, #tpu.memory_space<vmem>>, vector<8x8xf32>
    tpu.vector_store %arg22[%c0_31, %c8], %79 {strides = array<i32>} : memref<16x32xf32, #tpu.memory_space<vmem>>, vector<8x8xf32>,
    %81 = vector.extract_strided_slice %30 {offsets = [0, 16], sizes = [8, 8], strides = [1, 1]} : vector<16x96xf32> to vector<8x8xf32>
    %82 = vector.extract_strided_slice %30 {offsets = [0, 48], sizes = [8, 8], strides = [1, 1]} : vector<16x96xf32> to vector<8x8xf32>
    %83 = vector.extract_strided_slice %30 {offsets = [0, 80], sizes = [8, 8], strides = [1, 1]} : vector<16x96xf32> to vector<8x8xf32>
    %84 = arith.truncf %81 : vector<8x8xf32> to vector<8x8xbf16>
    %85 = arith.truncf %82 : vector<8x8xf32> to vector<8x8xbf16>
    %cst_32 = arith.constant dense<0.000000e+00> : vector<8x8xf32>
    %86 = tpu.matmul %84, %85, %cst_32 {dimension_numbers = #tpu.dot_dimension_numbers<[1], [1], [0], [0], [0, 0, 1, 0], [], []>} : vector<8x8xbf16>, vector<8x8xbf16>, vector<8x8xf32> -> vector<8x8xf32>
    %cst_33 = arith.constant 0.353553385 : f32
    %87 = vector.broadcast %cst_33 : f32 to vector<8x8xf32>
    %88 = arith.mulf %86, %87 : vector<8x8xf32>
    %89 = vector.broadcast %32 : vector<1x8xf32> to vector<8x8xf32>
    %90 = arith.addf %88, %89 : vector<8x8xf32>
    %cst_34 = arith.constant dense<0xFF800000> : vector<8xf32>
    %91 = vector.multi_reduction <maximumf>, %90, %cst_34 [1] : vector<8x8xf32> to vector<8xf32>
    %92 = vector.shape_cast %91 : vector<8xf32> to vector<8x1xf32>
    %93 = vector.broadcast %92 : vector<8x1xf32> to vector<8x8xf32>
    %94 = arith.subf %90, %93 : vector<8x8xf32>
    %95 = math.exp %94 : vector<8x8xf32>
    %cst_35 = arith.constant dense<0.000000e+00> : vector<8xf32>
    %96 = vector.multi_reduction <add>, %95, %cst_35 [1] : vector<8x8xf32> to vector<8xf32>
    %97 = vector.shape_cast %96 : vector<8xf32> to vector<8x1xf32>
    %98 = tpu.reciprocal %97 {approx = true} : vector<8x1xf32> -> vector<8x1xf32>
    %99 = vector.broadcast %98 : vector<8x1xf32> to vector<8x8xf32>
    %100 = arith.mulf %95, %99 : vector<8x8xf32>
    %101 = arith.truncf %100 : vector<8x8xf32> to vector<8x8xbf16>
    %102 = arith.truncf %83 : vector<8x8xf32> to vector<8x8xbf16>
    %cst_36 = arith.constant dense<0.000000e+00> : vector<8x8xf32>
    %103 = tpu.matmul %101, %102, %cst_36 {dimension_numbers = #tpu.dot_dimension_numbers<[1], [0], [0], [1], [0, 0, 1, 1], [], []>} : vector<8x8xbf16>, vector<8x8xbf16>, vector<8x8xf32> -> vector<8x8xf32>
    %c0_37 = arith.constant 0 : index
    %c16 = arith.constant 16 : index
    %104 = vector.load %arg22[%c0_37, %c16] : memref<16x32xf32, #tpu.memory_space<vmem>>, vector<8x8xf32>
    tpu.vector_store %arg22[%c0_37, %c16], %103 {strides = array<i32>} : memref<16x32xf32, #tpu.memory_space<vmem>>, vector<8x8xf32>,
    %105 = vector.extract_strided_slice %30 {offsets = [0, 24], sizes = [8, 8], strides = [1, 1]} : vector<16x96xf32> to vector<8x8xf32>
    %106 = vector.extract_strided_slice %30 {offsets = [0, 56], sizes = [8, 8], strides = [1, 1]} : vector<16x96xf32> to vector<8x8xf32>
    %107 = vector.extract_strided_slice %30 {offsets = [0, 88], sizes = [8, 8], strides = [1, 1]} : vector<16x96xf32> to vector<8x8xf32>
    %108 = arith.truncf %105 : vector<8x8xf32> to vector<8x8xbf16>
    %109 = arith.truncf %106 : vector<8x8xf32> to vector<8x8xbf16>
    %cst_38 = arith.constant dense<0.000000e+00> : vector<8x8xf32>
    %110 = tpu.matmul %108, %109, %cst_38 {dimension_numbers = #tpu.dot_dimension_numbers<[1], [1], [0], [0], [0, 0, 1, 0], [], []>} : vector<8x8xbf16>, vector<8x8xbf16>, vector<8x8xf32> -> vector<8x8xf32>
    %cst_39 = arith.constant 0.353553385 : f32
    %111 = vector.broadcast %cst_39 : f32 to vector<8x8xf32>
    %112 = arith.mulf %110, %111 : vector<8x8xf32>
    %113 = vector.broadcast %32 : vector<1x8xf32> to vector<8x8xf32>
    %114 = arith.addf %112, %113 : vector<8x8xf32>
    %cst_40 = arith.constant dense<0xFF800000> : vector<8xf32>
    %115 = vector.multi_reduction <maximumf>, %114, %cst_40 [1] : vector<8x8xf32> to vector<8xf32>
    %116 = vector.shape_cast %115 : vector<8xf32> to vector<8x1xf32>
    %117 = vector.broadcast %116 : vector<8x1xf32> to vector<8x8xf32>
    %118 = arith.subf %114, %117 : vector<8x8xf32>
    %119 = math.exp %118 : vector<8x8xf32>
    %cst_41 = arith.constant dense<0.000000e+00> : vector<8xf32>
    %120 = vector.multi_reduction <add>, %119, %cst_41 [1] : vector<8x8xf32> to vector<8xf32>
    %121 = vector.shape_cast %120 : vector<8xf32> to vector<8x1xf32>
    %122 = tpu.reciprocal %121 {approx = true} : vector<8x1xf32> -> vector<8x1xf32>
    %123 = vector.broadcast %122 : vector<8x1xf32> to vector<8x8xf32>
    %124 = arith.mulf %119, %123 : vector<8x8xf32>
    %125 = arith.truncf %124 : vector<8x8xf32> to vector<8x8xbf16>
    %126 = arith.truncf %107 : vector<8x8xf32> to vector<8x8xbf16>
    %cst_42 = arith.constant dense<0.000000e+00> : vector<8x8xf32>
    %127 = tpu.matmul %125, %126, %cst_42 {dimension_numbers = #tpu.dot_dimension_numbers<[1], [0], [0], [1], [0, 0, 1, 1], [], []>} : vector<8x8xbf16>, vector<8x8xbf16>, vector<8x8xf32> -> vector<8x8xf32>
    %c0_43 = arith.constant 0 : index
    %c24 = arith.constant 24 : index
    %128 = vector.load %arg22[%c0_43, %c24] : memref<16x32xf32, #tpu.memory_space<vmem>>, vector<8x8xf32>
    tpu.vector_store %arg22[%c0_43, %c24], %127 {strides = array<i32>} : memref<16x32xf32, #tpu.memory_space<vmem>>, vector<8x8xf32>,
    %c1 = arith.constant 1 : index
    %c0_44 = arith.constant 0 : index
    %c0_45 = arith.constant 0 : index
    %129 = vector.load %arg2[%c1, %c0_44, %c0_45] : memref<2x1x8xf32, #tpu.memory_space<vmem>>, vector<1x1x8xf32>
    %130 = vector.shape_cast %129 : vector<1x1x8xf32> to vector<1x8xf32>
    %131 = vector.extract_strided_slice %30 {offsets = [8, 0], sizes = [8, 8], strides = [1, 1]} : vector<16x96xf32> to vector<8x8xf32>
    %132 = vector.extract_strided_slice %30 {offsets = [8, 32], sizes = [8, 8], strides = [1, 1]} : vector<16x96xf32> to vector<8x8xf32>
    %133 = vector.extract_strided_slice %30 {offsets = [8, 64], sizes = [8, 8], strides = [1, 1]} : vector<16x96xf32> to vector<8x8xf32>
    %134 = arith.truncf %131 : vector<8x8xf32> to vector<8x8xbf16>
    %135 = arith.truncf %132 : vector<8x8xf32> to vector<8x8xbf16>
    %cst_46 = arith.constant dense<0.000000e+00> : vector<8x8xf32>
    %136 = tpu.matmul %134, %135, %cst_46 {dimension_numbers = #tpu.dot_dimension_numbers<[1], [1], [0], [0], [0, 0, 1, 0], [], []>} : vector<8x8xbf16>, vector<8x8xbf16>, vector<8x8xf32> -> vector<8x8xf32>
    %cst_47 = arith.constant 0.353553385 : f32
    %137 = vector.broadcast %cst_47 : f32 to vector<8x8xf32>
    %138 = arith.mulf %136, %137 : vector<8x8xf32>
    %139 = vector.broadcast %130 : vector<1x8xf32> to vector<8x8xf32>
    %140 = arith.addf %138, %139 : vector<8x8xf32>
    %cst_48 = arith.constant dense<0xFF800000> : vector<8xf32>
    %141 = vector.multi_reduction <maximumf>, %140, %cst_48 [1] : vector<8x8xf32> to vector<8xf32>
    %142 = vector.shape_cast %141 : vector<8xf32> to vector<8x1xf32>
    %143 = vector.broadcast %142 : vector<8x1xf32> to vector<8x8xf32>
    %144 = arith.subf %140, %143 : vector<8x8xf32>
    %145 = math.exp %144 : vector<8x8xf32>
    %cst_49 = arith.constant dense<0.000000e+00> : vector<8xf32>
    %146 = vector.multi_reduction <add>, %145, %cst_49 [1] : vector<8x8xf32> to vector<8xf32>
    %147 = vector.shape_cast %146 : vector<8xf32> to vector<8x1xf32>
    %148 = tpu.reciprocal %147 {approx = true} : vector<8x1xf32> -> vector<8x1xf32>
    %149 = vector.broadcast %148 : vector<8x1xf32> to vector<8x8xf32>
    %150 = arith.mulf %145, %149 : vector<8x8xf32>
    %151 = arith.truncf %150 : vector<8x8xf32> to vector<8x8xbf16>
    %152 = arith.truncf %133 : vector<8x8xf32> to vector<8x8xbf16>
    %cst_50 = arith.constant dense<0.000000e+00> : vector<8x8xf32>
    %153 = tpu.matmul %151, %152, %cst_50 {dimension_numbers = #tpu.dot_dimension_numbers<[1], [0], [0], [1], [0, 0, 1, 1], [], []>} : vector<8x8xbf16>, vector<8x8xbf16>, vector<8x8xf32> -> vector<8x8xf32>
    %c8_51 = arith.constant 8 : index
    %c0_52 = arith.constant 0 : index
    %154 = vector.load %arg22[%c8_51, %c0_52] : memref<16x32xf32, #tpu.memory_space<vmem>>, vector<8x8xf32>
    tpu.vector_store %arg22[%c8_51, %c0_52], %153 {strides = array<i32>} : memref<16x32xf32, #tpu.memory_space<vmem>>, vector<8x8xf32>,
    %155 = vector.extract_strided_slice %30 {offsets = [8, 8], sizes = [8, 8], strides = [1, 1]} : vector<16x96xf32> to vector<8x8xf32>
    %156 = vector.extract_strided_slice %30 {offsets = [8, 40], sizes = [8, 8], strides = [1, 1]} : vector<16x96xf32> to vector<8x8xf32>
    %157 = vector.extract_strided_slice %30 {offsets = [8, 72], sizes = [8, 8], strides = [1, 1]} : vector<16x96xf32> to vector<8x8xf32>
    %158 = arith.truncf %155 : vector<8x8xf32> to vector<8x8xbf16>
    %159 = arith.truncf %156 : vector<8x8xf32> to vector<8x8xbf16>
    %cst_53 = arith.constant dense<0.000000e+00> : vector<8x8xf32>
    %160 = tpu.matmul %158, %159, %cst_53 {dimension_numbers = #tpu.dot_dimension_numbers<[1], [1], [0], [0], [0, 0, 1, 0], [], []>} : vector<8x8xbf16>, vector<8x8xbf16>, vector<8x8xf32> -> vector<8x8xf32>
    %cst_54 = arith.constant 0.353553385 : f32
    %161 = vector.broadcast %cst_54 : f32 to vector<8x8xf32>
    %162 = arith.mulf %160, %161 : vector<8x8xf32>
    %163 = vector.broadcast %130 : vector<1x8xf32> to vector<8x8xf32>
    %164 = arith.addf %162, %163 : vector<8x8xf32>
    %cst_55 = arith.constant dense<0xFF800000> : vector<8xf32>
    %165 = vector.multi_reduction <maximumf>, %164, %cst_55 [1] : vector<8x8xf32> to vector<8xf32>
    %166 = vector.shape_cast %165 : vector<8xf32> to vector<8x1xf32>
    %167 = vector.broadcast %166 : vector<8x1xf32> to vector<8x8xf32>
    %168 = arith.subf %164, %167 : vector<8x8xf32>
    %169 = math.exp %168 : vector<8x8xf32>
    %cst_56 = arith.constant dense<0.000000e+00> : vector<8xf32>
    %170 = vector.multi_reduction <add>, %169, %cst_56 [1] : vector<8x8xf32> to vector<8xf32>
    %171 = vector.shape_cast %170 : vector<8xf32> to vector<8x1xf32>
    %172 = tpu.reciprocal %171 {approx = true} : vector<8x1xf32> -> vector<8x1xf32>
    %173 = vector.broadcast %172 : vector<8x1xf32> to vector<8x8xf32>
    %174 = arith.mulf %169, %173 : vector<8x8xf32>
    %175 = arith.truncf %174 : vector<8x8xf32> to vector<8x8xbf16>
    %176 = arith.truncf %157 : vector<8x8xf32> to vector<8x8xbf16>
    %cst_57 = arith.constant dense<0.000000e+00> : vector<8x8xf32>
    %177 = tpu.matmul %175, %176, %cst_57 {dimension_numbers = #tpu.dot_dimension_numbers<[1], [0], [0], [1], [0, 0, 1, 1], [], []>} : vector<8x8xbf16>, vector<8x8xbf16>, vector<8x8xf32> -> vector<8x8xf32>
    %c8_58 = arith.constant 8 : index
    %c8_59 = arith.constant 8 : index
    %178 = vector.load %arg22[%c8_58, %c8_59] : memref<16x32xf32, #tpu.memory_space<vmem>>, vector<8x8xf32>
    tpu.vector_store %arg22[%c8_58, %c8_59], %177 {strides = array<i32>} : memref<16x32xf32, #tpu.memory_space<vmem>>, vector<8x8xf32>,
    %179 = vector.extract_strided_slice %30 {offsets = [8, 16], sizes = [8, 8], strides = [1, 1]} : vector<16x96xf32> to vector<8x8xf32>
    %180 = vector.extract_strided_slice %30 {offsets = [8, 48], sizes = [8, 8], strides = [1, 1]} : vector<16x96xf32> to vector<8x8xf32>
    %181 = vector.extract_strided_slice %30 {offsets = [8, 80], sizes = [8, 8], strides = [1, 1]} : vector<16x96xf32> to vector<8x8xf32>
    %182 = arith.truncf %179 : vector<8x8xf32> to vector<8x8xbf16>
    %183 = arith.truncf %180 : vector<8x8xf32> to vector<8x8xbf16>
    %cst_60 = arith.constant dense<0.000000e+00> : vector<8x8xf32>
    %184 = tpu.matmul %182, %183, %cst_60 {dimension_numbers = #tpu.dot_dimension_numbers<[1], [1], [0], [0], [0, 0, 1, 0], [], []>} : vector<8x8xbf16>, vector<8x8xbf16>, vector<8x8xf32> -> vector<8x8xf32>
    %cst_61 = arith.constant 0.353553385 : f32
    %185 = vector.broadcast %cst_61 : f32 to vector<8x8xf32>
    %186 = arith.mulf %184, %185 : vector<8x8xf32>
    %187 = vector.broadcast %130 : vector<1x8xf32> to vector<8x8xf32>
    %188 = arith.addf %186, %187 : vector<8x8xf32>
    %cst_62 = arith.constant dense<0xFF800000> : vector<8xf32>
    %189 = vector.multi_reduction <maximumf>, %188, %cst_62 [1] : vector<8x8xf32> to vector<8xf32>
    %190 = vector.shape_cast %189 : vector<8xf32> to vector<8x1xf32>
    %191 = vector.broadcast %190 : vector<8x1xf32> to vector<8x8xf32>
    %192 = arith.subf %188, %191 : vector<8x8xf32>
    %193 = math.exp %192 : vector<8x8xf32>
    %cst_63 = arith.constant dense<0.000000e+00> : vector<8xf32>
    %194 = vector.multi_reduction <add>, %193, %cst_63 [1] : vector<8x8xf32> to vector<8xf32>
    %195 = vector.shape_cast %194 : vector<8xf32> to vector<8x1xf32>
    %196 = tpu.reciprocal %195 {approx = true} : vector<8x1xf32> -> vector<8x1xf32>
    %197 = vector.broadcast %196 : vector<8x1xf32> to vector<8x8xf32>
    %198 = arith.mulf %193, %197 : vector<8x8xf32>
    %199 = arith.truncf %198 : vector<8x8xf32> to vector<8x8xbf16>
    %200 = arith.truncf %181 : vector<8x8xf32> to vector<8x8xbf16>
    %cst_64 = arith.constant dense<0.000000e+00> : vector<8x8xf32>
    %201 = tpu.matmul %199, %200, %cst_64 {dimension_numbers = #tpu.dot_dimension_numbers<[1], [0], [0], [1], [0, 0, 1, 1], [], []>} : vector<8x8xbf16>, vector<8x8xbf16>, vector<8x8xf32> -> vector<8x8xf32>
    %c8_65 = arith.constant 8 : index
    %c16_66 = arith.constant 16 : index
    %202 = vector.load %arg22[%c8_65, %c16_66] : memref<16x32xf32, #tpu.memory_space<vmem>>, vector<8x8xf32>
    tpu.vector_store %arg22[%c8_65, %c16_66], %201 {strides = array<i32>} : memref<16x32xf32, #tpu.memory_space<vmem>>, vector<8x8xf32>,
    %203 = vector.extract_strided_slice %30 {offsets = [8, 24], sizes = [8, 8], strides = [1, 1]} : vector<16x96xf32> to vector<8x8xf32>
    %204 = vector.extract_strided_slice %30 {offsets = [8, 56], sizes = [8, 8], strides = [1, 1]} : vector<16x96xf32> to vector<8x8xf32>
    %205 = vector.extract_strided_slice %30 {offsets = [8, 88], sizes = [8, 8], strides = [1, 1]} : vector<16x96xf32> to vector<8x8xf32>
    %206 = arith.truncf %203 : vector<8x8xf32> to vector<8x8xbf16>
    %207 = arith.truncf %204 : vector<8x8xf32> to vector<8x8xbf16>
    %cst_67 = arith.constant dense<0.000000e+00> : vector<8x8xf32>
    %208 = tpu.matmul %206, %207, %cst_67 {dimension_numbers = #tpu.dot_dimension_numbers<[1], [1], [0], [0], [0, 0, 1, 0], [], []>} : vector<8x8xbf16>, vector<8x8xbf16>, vector<8x8xf32> -> vector<8x8xf32>
    %cst_68 = arith.constant 0.353553385 : f32
    %209 = vector.broadcast %cst_68 : f32 to vector<8x8xf32>
    %210 = arith.mulf %208, %209 : vector<8x8xf32>
    %211 = vector.broadcast %130 : vector<1x8xf32> to vector<8x8xf32>
    %212 = arith.addf %210, %211 : vector<8x8xf32>
    %cst_69 = arith.constant dense<0xFF800000> : vector<8xf32>
    %213 = vector.multi_reduction <maximumf>, %212, %cst_69 [1] : vector<8x8xf32> to vector<8xf32>
    %214 = vector.shape_cast %213 : vector<8xf32> to vector<8x1xf32>
    %215 = vector.broadcast %214 : vector<8x1xf32> to vector<8x8xf32>
    %216 = arith.subf %212, %215 : vector<8x8xf32>
    %217 = math.exp %216 : vector<8x8xf32>
    %cst_70 = arith.constant dense<0.000000e+00> : vector<8xf32>
    %218 = vector.multi_reduction <add>, %217, %cst_70 [1] : vector<8x8xf32> to vector<8xf32>
    %219 = vector.shape_cast %218 : vector<8xf32> to vector<8x1xf32>
    %220 = tpu.reciprocal %219 {approx = true} : vector<8x1xf32> -> vector<8x1xf32>
    %221 = vector.broadcast %220 : vector<8x1xf32> to vector<8x8xf32>
    %222 = arith.mulf %217, %221 : vector<8x8xf32>
    %223 = arith.truncf %222 : vector<8x8xf32> to vector<8x8xbf16>
    %224 = arith.truncf %205 : vector<8x8xf32> to vector<8x8xbf16>
    %cst_71 = arith.constant dense<0.000000e+00> : vector<8x8xf32>
    %225 = tpu.matmul %223, %224, %cst_71 {dimension_numbers = #tpu.dot_dimension_numbers<[1], [0], [0], [1], [0, 0, 1, 1], [], []>} : vector<8x8xbf16>, vector<8x8xbf16>, vector<8x8xf32> -> vector<8x8xf32>
    %c8_72 = arith.constant 8 : index
    %c24_73 = arith.constant 24 : index
    %226 = vector.load %arg22[%c8_72, %c24_73] : memref<16x32xf32, #tpu.memory_space<vmem>>, vector<8x8xf32>
    tpu.vector_store %arg22[%c8_72, %c24_73], %225 {strides = array<i32>} : memref<16x32xf32, #tpu.memory_space<vmem>>, vector<8x8xf32>,
    %c0_74 = arith.constant 0 : index
    %c0_75 = arith.constant 0 : index
    %227 = vector.load %arg22[%c0_74, %c0_75] : memref<16x32xf32, #tpu.memory_space<vmem>>, vector<16x32xf32>
    %c0_76 = arith.constant 0 : index
    %c0_77 = arith.constant 0 : index
    %c0_78 = arith.constant 0 : index
    %228 = vector.load %arg7[%c0_76, %c0_77, %c0_78] : memref<2x32x32xbf16, #tpu.memory_space<vmem>>, vector<1x32x32xbf16>
    %229 = vector.shape_cast %228 : vector<1x32x32xbf16> to vector<32x32xbf16>
    %230 = arith.truncf %227 : vector<16x32xf32> to vector<16x32xbf16>
    %cst_79 = arith.constant dense<0.000000e+00> : vector<16x32xf32>
    %231 = tpu.matmul %230, %229, %cst_79 {dimension_numbers = #tpu.dot_dimension_numbers<[1], [0], [0], [1], [0, 0, 1, 1], [], []>} : vector<16x32xbf16>, vector<32x32xbf16>, vector<16x32xf32> -> vector<16x32xf32>
    %c0_80 = arith.constant 0 : index
    %c0_81 = arith.constant 0 : index
    %c0_82 = arith.constant 0 : index
    %232 = vector.load %arg8[%c0_80, %c0_81, %c0_82] : memref<2x1x32xf32, #tpu.memory_space<vmem>>, vector<1x1x32xf32>
    %233 = vector.shape_cast %232 : vector<1x1x32xf32> to vector<1x32xf32>
    %234 = vector.broadcast %233 : vector<1x32xf32> to vector<16x32xf32>
    %235 = arith.addf %231, %234 : vector<16x32xf32>
    %236 = arith.addf %235, %22 : vector<16x32xf32>
    %c0_83 = arith.constant 0 : index
    %c0_84 = arith.constant 0 : index
    %c0_85 = arith.constant 0 : index
    %237 = vector.load %arg9[%c0_83, %c0_84, %c0_85] : memref<2x1x32xf32, #tpu.memory_space<vmem>>, vector<1x1x32xf32>
    %238 = vector.shape_cast %237 : vector<1x1x32xf32> to vector<1x32xf32>
    %c0_86 = arith.constant 0 : index
    %c0_87 = arith.constant 0 : index
    %c0_88 = arith.constant 0 : index
    %239 = vector.load %arg10[%c0_86, %c0_87, %c0_88] : memref<2x1x32xf32, #tpu.memory_space<vmem>>, vector<1x1x32xf32>
    %240 = vector.shape_cast %239 : vector<1x1x32xf32> to vector<1x32xf32>
    %cst_89 = arith.constant dense<0.000000e+00> : vector<16xf32>
    %241 = vector.multi_reduction <add>, %236, %cst_89 [1] : vector<16x32xf32> to vector<16xf32>
    %242 = vector.shape_cast %241 : vector<16xf32> to vector<16x1xf32>
    %cst_90 = arith.constant 3.200000e+01 : f32
    %243 = vector.broadcast %cst_90 : f32 to vector<16x1xf32>
    %244 = arith.divf %242, %243 : vector<16x1xf32>
    %245 = vector.broadcast %244 : vector<16x1xf32> to vector<16x32xf32>
    %246 = arith.subf %236, %245 : vector<16x32xf32>
    %247 = arith.mulf %246, %246 : vector<16x32xf32>
    %cst_91 = arith.constant dense<0.000000e+00> : vector<16xf32>
    %248 = vector.multi_reduction <add>, %247, %cst_91 [1] : vector<16x32xf32> to vector<16xf32>
    %249 = vector.shape_cast %248 : vector<16xf32> to vector<16x1xf32>
    %cst_92 = arith.constant 3.200000e+01 : f32
    %250 = vector.broadcast %cst_92 : f32 to vector<16x1xf32>
    %251 = arith.divf %249, %250 : vector<16x1xf32>
    %cst_93 = arith.constant 9.99999996E-13 : f32
    %252 = vector.broadcast %cst_93 : f32 to vector<16x1xf32>
    %253 = arith.addf %251, %252 : vector<16x1xf32>
    %254 = math.rsqrt %253 : vector<16x1xf32>
    %255 = vector.broadcast %254 : vector<16x1xf32> to vector<16x32xf32>
    %256 = arith.mulf %246, %255 : vector<16x32xf32>
    %257 = vector.broadcast %238 : vector<1x32xf32> to vector<16x32xf32>
    %258 = arith.mulf %256, %257 : vector<16x32xf32>
    %259 = vector.broadcast %240 : vector<1x32xf32> to vector<16x32xf32>
    %260 = arith.addf %258, %259 : vector<16x32xf32>
    %c0_94 = arith.constant 0 : index
    %c0_95 = arith.constant 0 : index
    %c0_96 = arith.constant 0 : index
    %261 = vector.load %arg11[%c0_94, %c0_95, %c0_96] : memref<2x32x64xbf16, #tpu.memory_space<vmem>>, vector<1x32x64xbf16>
    %262 = vector.shape_cast %261 : vector<1x32x64xbf16> to vector<32x64xbf16>
    %263 = arith.truncf %260 : vector<16x32xf32> to vector<16x32xbf16>
    %cst_97 = arith.constant dense<0.000000e+00> : vector<16x64xf32>
    %264 = tpu.matmul %263, %262, %cst_97 {dimension_numbers = #tpu.dot_dimension_numbers<[1], [0], [0], [1], [0, 0, 1, 1], [], []>} : vector<16x32xbf16>, vector<32x64xbf16>, vector<16x64xf32> -> vector<16x64xf32>
    %c0_98 = arith.constant 0 : index
    %c0_99 = arith.constant 0 : index
    %c0_100 = arith.constant 0 : index
    %265 = vector.load %arg12[%c0_98, %c0_99, %c0_100] : memref<2x1x64xf32, #tpu.memory_space<vmem>>, vector<1x1x64xf32>
    %266 = vector.shape_cast %265 : vector<1x1x64xf32> to vector<1x64xf32>
    %267 = vector.broadcast %266 : vector<1x64xf32> to vector<16x64xf32>
    %268 = arith.addf %264, %267 : vector<16x64xf32>
    %cst_101 = arith.constant 5.000000e-01 : f32
    %269 = vector.broadcast %cst_101 : f32 to vector<16x64xf32>
    %270 = arith.mulf %269, %268 : vector<16x64xf32>
    %cst_102 = arith.constant 4.471500e-02 : f32
    %271 = vector.broadcast %cst_102 : f32 to vector<16x64xf32>
    %272 = arith.mulf %271, %268 : vector<16x64xf32>
    %273 = arith.mulf %272, %268 : vector<16x64xf32>
    %274 = arith.mulf %273, %268 : vector<16x64xf32>
    %275 = arith.addf %268, %274 : vector<16x64xf32>
    %cst_103 = arith.constant 0.797884583 : f32
    %276 = vector.broadcast %cst_103 : f32 to vector<16x64xf32>
    %277 = arith.mulf %276, %275 : vector<16x64xf32>
    %278 = math.tanh %277 : vector<16x64xf32>
    %cst_104 = arith.constant 1.000000e+00 : f32
    %279 = vector.broadcast %cst_104 : f32 to vector<16x64xf32>
    %280 = arith.addf %279, %278 : vector<16x64xf32>
    %281 = arith.mulf %270, %280 : vector<16x64xf32>
    %c0_105 = arith.constant 0 : index
    %c0_106 = arith.constant 0 : index
    %c0_107 = arith.constant 0 : index
    %282 = vector.load %arg13[%c0_105, %c0_106, %c0_107] : memref<2x64x32xbf16, #tpu.memory_space<vmem>>, vector<1x64x32xbf16>
    %283 = vector.shape_cast %282 : vector<1x64x32xbf16> to vector<64x32xbf16>
    %284 = arith.truncf %281 : vector<16x64xf32> to vector<16x64xbf16>
    %cst_108 = arith.constant dense<0.000000e+00> : vector<16x32xf32>
    %285 = tpu.matmul %284, %283, %cst_108 {dimension_numbers = #tpu.dot_dimension_numbers<[1], [0], [0], [1], [0, 0, 1, 1], [], []>} : vector<16x64xbf16>, vector<64x32xbf16>, vector<16x32xf32> -> vector<16x32xf32>
    %c0_109 = arith.constant 0 : index
    %c0_110 = arith.constant 0 : index
    %c0_111 = arith.constant 0 : index
    %286 = vector.load %arg14[%c0_109, %c0_110, %c0_111] : memref<2x1x32xf32, #tpu.memory_space<vmem>>, vector<1x1x32xf32>
    %287 = vector.shape_cast %286 : vector<1x1x32xf32> to vector<1x32xf32>
    %288 = vector.broadcast %287 : vector<1x32xf32> to vector<16x32xf32>
    %289 = arith.addf %285, %288 : vector<16x32xf32>
    %290 = arith.addf %289, %260 : vector<16x32xf32>
    %c0_112 = arith.constant 0 : index
    %c0_113 = arith.constant 0 : index
    %c0_114 = arith.constant 0 : index
    %291 = vector.load %arg15[%c0_112, %c0_113, %c0_114] : memref<2x1x32xf32, #tpu.memory_space<vmem>>, vector<1x1x32xf32>
    %292 = vector.shape_cast %291 : vector<1x1x32xf32> to vector<1x32xf32>
    %c0_115 = arith.constant 0 : index
    %c0_116 = arith.constant 0 : index
    %c0_117 = arith.constant 0 : index
    %293 = vector.load %arg16[%c0_115, %c0_116, %c0_117] : memref<2x1x32xf32, #tpu.memory_space<vmem>>, vector<1x1x32xf32>
    %294 = vector.shape_cast %293 : vector<1x1x32xf32> to vector<1x32xf32>
    %cst_118 = arith.constant dense<0.000000e+00> : vector<16xf32>
    %295 = vector.multi_reduction <add>, %290, %cst_118 [1] : vector<16x32xf32> to vector<16xf32>
    %296 = vector.shape_cast %295 : vector<16xf32> to vector<16x1xf32>
    %cst_119 = arith.constant 3.200000e+01 : f32
    %297 = vector.broadcast %cst_119 : f32 to vector<16x1xf32>
    %298 = arith.divf %296, %297 : vector<16x1xf32>
    %299 = vector.broadcast %298 : vector<16x1xf32> to vector<16x32xf32>
    %300 = arith.subf %290, %299 : vector<16x32xf32>
    %301 = arith.mulf %300, %300 : vector<16x32xf32>
    %cst_120 = arith.constant dense<0.000000e+00> : vector<16xf32>
    %302 = vector.multi_reduction <add>, %301, %cst_120 [1] : vector<16x32xf32> to vector<16xf32>
    %303 = vector.shape_cast %302 : vector<16xf32> to vector<16x1xf32>
    %cst_121 = arith.constant 3.200000e+01 : f32
    %304 = vector.broadcast %cst_121 : f32 to vector<16x1xf32>
    %305 = arith.divf %303, %304 : vector<16x1xf32>
    %cst_122 = arith.constant 9.99999996E-13 : f32
    %306 = vector.broadcast %cst_122 : f32 to vector<16x1xf32>
    %307 = arith.addf %305, %306 : vector<16x1xf32>
    %308 = math.rsqrt %307 : vector<16x1xf32>
    %309 = vector.broadcast %308 : vector<16x1xf32> to vector<16x32xf32>
    %310 = arith.mulf %300, %309 : vector<16x32xf32>
    %311 = vector.broadcast %292 : vector<1x32xf32> to vector<16x32xf32>
    %312 = arith.mulf %310, %311 : vector<16x32xf32>
    %313 = vector.broadcast %294 : vector<1x32xf32> to vector<16x32xf32>
    %314 = arith.addf %312, %313 : vector<16x32xf32>
    %c1_123 = arith.constant 1 : index
    %c0_124 = arith.constant 0 : index
    %c0_125 = arith.constant 0 : index
    %315 = vector.load %arg5[%c1_123, %c0_124, %c0_125] : memref<2x32x96xbf16, #tpu.memory_space<vmem>>, vector<1x32x96xbf16>
    %316 = vector.shape_cast %315 : vector<1x32x96xbf16> to vector<32x96xbf16>
    %317 = arith.truncf %314 : vector<16x32xf32> to vector<16x32xbf16>
    %cst_126 = arith.constant dense<0.000000e+00> : vector<16x96xf32>
    %318 = tpu.matmul %317, %316, %cst_126 {dimension_numbers = #tpu.dot_dimension_numbers<[1], [0], [0], [1], [0, 0, 1, 1], [], []>} : vector<16x32xbf16>, vector<32x96xbf16>, vector<16x96xf32> -> vector<16x96xf32>
    %c1_127 = arith.constant 1 : index
    %c0_128 = arith.constant 0 : index
    %c0_129 = arith.constant 0 : index
    %319 = vector.load %arg6[%c1_127, %c0_128, %c0_129] : memref<2x1x96xf32, #tpu.memory_space<vmem>>, vector<1x1x96xf32>
    %320 = vector.shape_cast %319 : vector<1x1x96xf32> to vector<1x96xf32>
    %321 = vector.broadcast %320 : vector<1x96xf32> to vector<16x96xf32>
    %322 = arith.addf %318, %321 : vector<16x96xf32>
    %c0_130 = arith.constant 0 : index
    %c0_131 = arith.constant 0 : index
    %c0_132 = arith.constant 0 : index
    %323 = vector.load %arg2[%c0_130, %c0_131, %c0_132] : memref<2x1x8xf32, #tpu.memory_space<vmem>>, vector<1x1x8xf32>
    %324 = vector.shape_cast %323 : vector<1x1x8xf32> to vector<1x8xf32>
    %325 = vector.extract_strided_slice %322 {offsets = [0, 0], sizes = [8, 8], strides = [1, 1]} : vector<16x96xf32> to vector<8x8xf32>
    %326 = vector.extract_strided_slice %322 {offsets = [0, 32], sizes = [8, 8], strides = [1, 1]} : vector<16x96xf32> to vector<8x8xf32>
    %327 = vector.extract_strided_slice %322 {offsets = [0, 64], sizes = [8, 8], strides = [1, 1]} : vector<16x96xf32> to vector<8x8xf32>
    %328 = arith.truncf %325 : vector<8x8xf32> to vector<8x8xbf16>
    %329 = arith.truncf %326 : vector<8x8xf32> to vector<8x8xbf16>
    %cst_133 = arith.constant dense<0.000000e+00> : vector<8x8xf32>
    %330 = tpu.matmul %328, %329, %cst_133 {dimension_numbers = #tpu.dot_dimension_numbers<[1], [1], [0], [0], [0, 0, 1, 0], [], []>} : vector<8x8xbf16>, vector<8x8xbf16>, vector<8x8xf32> -> vector<8x8xf32>
    %cst_134 = arith.constant 0.353553385 : f32
    %331 = vector.broadcast %cst_134 : f32 to vector<8x8xf32>
    %332 = arith.mulf %330, %331 : vector<8x8xf32>
    %333 = vector.broadcast %324 : vector<1x8xf32> to vector<8x8xf32>
    %334 = arith.addf %332, %333 : vector<8x8xf32>
    %cst_135 = arith.constant dense<0xFF800000> : vector<8xf32>
    %335 = vector.multi_reduction <maximumf>, %334, %cst_135 [1] : vector<8x8xf32> to vector<8xf32>
    %336 = vector.shape_cast %335 : vector<8xf32> to vector<8x1xf32>
    %337 = vector.broadcast %336 : vector<8x1xf32> to vector<8x8xf32>
    %338 = arith.subf %334, %337 : vector<8x8xf32>
    %339 = math.exp %338 : vector<8x8xf32>
    %cst_136 = arith.constant dense<0.000000e+00> : vector<8xf32>
    %340 = vector.multi_reduction <add>, %339, %cst_136 [1] : vector<8x8xf32> to vector<8xf32>
    %341 = vector.shape_cast %340 : vector<8xf32> to vector<8x1xf32>
    %342 = tpu.reciprocal %341 {approx = true} : vector<8x1xf32> -> vector<8x1xf32>
    %343 = vector.broadcast %342 : vector<8x1xf32> to vector<8x8xf32>
    %344 = arith.mulf %339, %343 : vector<8x8xf32>
    %345 = arith.truncf %344 : vector<8x8xf32> to vector<8x8xbf16>
    %346 = arith.truncf %327 : vector<8x8xf32> to vector<8x8xbf16>
    %cst_137 = arith.constant dense<0.000000e+00> : vector<8x8xf32>
    %347 = tpu.matmul %345, %346, %cst_137 {dimension_numbers = #tpu.dot_dimension_numbers<[1], [0], [0], [1], [0, 0, 1, 1], [], []>} : vector<8x8xbf16>, vector<8x8xbf16>, vector<8x8xf32> -> vector<8x8xf32>
    %c0_138 = arith.constant 0 : index
    %c0_139 = arith.constant 0 : index
    %348 = vector.load %arg22[%c0_138, %c0_139] : memref<16x32xf32, #tpu.memory_space<vmem>>, vector<8x8xf32>
    tpu.vector_store %arg22[%c0_138, %c0_139], %347 {strides = array<i32>} : memref<16x32xf32, #tpu.memory_space<vmem>>, vector<8x8xf32>,
    %349 = vector.extract_strided_slice %322 {offsets = [0, 8], sizes = [8, 8], strides = [1, 1]} : vector<16x96xf32> to vector<8x8xf32>
    %350 = vector.extract_strided_slice %322 {offsets = [0, 40], sizes = [8, 8], strides = [1, 1]} : vector<16x96xf32> to vector<8x8xf32>
    %351 = vector.extract_strided_slice %322 {offsets = [0, 72], sizes = [8, 8], strides = [1, 1]} : vector<16x96xf32> to vector<8x8xf32>
    %352 = arith.truncf %349 : vector<8x8xf32> to vector<8x8xbf16>
    %353 = arith.truncf %350 : vector<8x8xf32> to vector<8x8xbf16>
    %cst_140 = arith.constant dense<0.000000e+00> : vector<8x8xf32>
    %354 = tpu.matmul %352, %353, %cst_140 {dimension_numbers = #tpu.dot_dimension_numbers<[1], [1], [0], [0], [0, 0, 1, 0], [], []>} : vector<8x8xbf16>, vector<8x8xbf16>, vector<8x8xf32> -> vector<8x8xf32>
    %cst_141 = arith.constant 0.353553385 : f32
    %355 = vector.broadcast %cst_141 : f32 to vector<8x8xf32>
    %356 = arith.mulf %354, %355 : vector<8x8xf32>
    %357 = vector.broadcast %324 : vector<1x8xf32> to vector<8x8xf32>
    %358 = arith.addf %356, %357 : vector<8x8xf32>
    %cst_142 = arith.constant dense<0xFF800000> : vector<8xf32>
    %359 = vector.multi_reduction <maximumf>, %358, %cst_142 [1] : vector<8x8xf32> to vector<8xf32>
    %360 = vector.shape_cast %359 : vector<8xf32> to vector<8x1xf32>
    %361 = vector.broadcast %360 : vector<8x1xf32> to vector<8x8xf32>
    %362 = arith.subf %358, %361 : vector<8x8xf32>
    %363 = math.exp %362 : vector<8x8xf32>
    %cst_143 = arith.constant dense<0.000000e+00> : vector<8xf32>
    %364 = vector.multi_reduction <add>, %363, %cst_143 [1] : vector<8x8xf32> to vector<8xf32>
    %365 = vector.shape_cast %364 : vector<8xf32> to vector<8x1xf32>
    %366 = tpu.reciprocal %365 {approx = true} : vector<8x1xf32> -> vector<8x1xf32>
    %367 = vector.broadcast %366 : vector<8x1xf32> to vector<8x8xf32>
    %368 = arith.mulf %363, %367 : vector<8x8xf32>
    %369 = arith.truncf %368 : vector<8x8xf32> to vector<8x8xbf16>
    %370 = arith.truncf %351 : vector<8x8xf32> to vector<8x8xbf16>
    %cst_144 = arith.constant dense<0.000000e+00> : vector<8x8xf32>
    %371 = tpu.matmul %369, %370, %cst_144 {dimension_numbers = #tpu.dot_dimension_numbers<[1], [0], [0], [1], [0, 0, 1, 1], [], []>} : vector<8x8xbf16>, vector<8x8xbf16>, vector<8x8xf32> -> vector<8x8xf32>
    %c0_145 = arith.constant 0 : index
    %c8_146 = arith.constant 8 : index
    %372 = vector.load %arg22[%c0_145, %c8_146] : memref<16x32xf32, #tpu.memory_space<vmem>>, vector<8x8xf32>
    tpu.vector_store %arg22[%c0_145, %c8_146], %371 {strides = array<i32>} : memref<16x32xf32, #tpu.memory_space<vmem>>, vector<8x8xf32>,
    %373 = vector.extract_strided_slice %322 {offsets = [0, 16], sizes = [8, 8], strides = [1, 1]} : vector<16x96xf32> to vector<8x8xf32>
    %374 = vector.extract_strided_slice %322 {offsets = [0, 48], sizes = [8, 8], strides = [1, 1]} : vector<16x96xf32> to vector<8x8xf32>
    %375 = vector.extract_strided_slice %322 {offsets = [0, 80], sizes = [8, 8], strides = [1, 1]} : vector<16x96xf32> to vector<8x8xf32>
    %376 = arith.truncf %373 : vector<8x8xf32> to vector<8x8xbf16>
    %377 = arith.truncf %374 : vector<8x8xf32> to vector<8x8xbf16>
    %cst_147 = arith.constant dense<0.000000e+00> : vector<8x8xf32>
    %378 = tpu.matmul %376, %377, %cst_147 {dimension_numbers = #tpu.dot_dimension_numbers<[1], [1], [0], [0], [0, 0, 1, 0], [], []>} : vector<8x8xbf16>, vector<8x8xbf16>, vector<8x8xf32> -> vector<8x8xf32>
    %cst_148 = arith.constant 0.353553385 : f32
    %379 = vector.broadcast %cst_148 : f32 to vector<8x8xf32>
    %380 = arith.mulf %378, %379 : vector<8x8xf32>
    %381 = vector.broadcast %324 : vector<1x8xf32> to vector<8x8xf32>
    %382 = arith.addf %380, %381 : vector<8x8xf32>
    %cst_149 = arith.constant dense<0xFF800000> : vector<8xf32>
    %383 = vector.multi_reduction <maximumf>, %382, %cst_149 [1] : vector<8x8xf32> to vector<8xf32>
    %384 = vector.shape_cast %383 : vector<8xf32> to vector<8x1xf32>
    %385 = vector.broadcast %384 : vector<8x1xf32> to vector<8x8xf32>
    %386 = arith.subf %382, %385 : vector<8x8xf32>
    %387 = math.exp %386 : vector<8x8xf32>
    %cst_150 = arith.constant dense<0.000000e+00> : vector<8xf32>
    %388 = vector.multi_reduction <add>, %387, %cst_150 [1] : vector<8x8xf32> to vector<8xf32>
    %389 = vector.shape_cast %388 : vector<8xf32> to vector<8x1xf32>
    %390 = tpu.reciprocal %389 {approx = true} : vector<8x1xf32> -> vector<8x1xf32>
    %391 = vector.broadcast %390 : vector<8x1xf32> to vector<8x8xf32>
    %392 = arith.mulf %387, %391 : vector<8x8xf32>
    %393 = arith.truncf %392 : vector<8x8xf32> to vector<8x8xbf16>
    %394 = arith.truncf %375 : vector<8x8xf32> to vector<8x8xbf16>
    %cst_151 = arith.constant dense<0.000000e+00> : vector<8x8xf32>
    %395 = tpu.matmul %393, %394, %cst_151 {dimension_numbers = #tpu.dot_dimension_numbers<[1], [0], [0], [1], [0, 0, 1, 1], [], []>} : vector<8x8xbf16>, vector<8x8xbf16>, vector<8x8xf32> -> vector<8x8xf32>
    %c0_152 = arith.constant 0 : index
    %c16_153 = arith.constant 16 : index
    %396 = vector.load %arg22[%c0_152, %c16_153] : memref<16x32xf32, #tpu.memory_space<vmem>>, vector<8x8xf32>
    tpu.vector_store %arg22[%c0_152, %c16_153], %395 {strides = array<i32>} : memref<16x32xf32, #tpu.memory_space<vmem>>, vector<8x8xf32>,
    %397 = vector.extract_strided_slice %322 {offsets = [0, 24], sizes = [8, 8], strides = [1, 1]} : vector<16x96xf32> to vector<8x8xf32>
    %398 = vector.extract_strided_slice %322 {offsets = [0, 56], sizes = [8, 8], strides = [1, 1]} : vector<16x96xf32> to vector<8x8xf32>
    %399 = vector.extract_strided_slice %322 {offsets = [0, 88], sizes = [8, 8], strides = [1, 1]} : vector<16x96xf32> to vector<8x8xf32>
    %400 = arith.truncf %397 : vector<8x8xf32> to vector<8x8xbf16>
    %401 = arith.truncf %398 : vector<8x8xf32> to vector<8x8xbf16>
    %cst_154 = arith.constant dense<0.000000e+00> : vector<8x8xf32>
    %402 = tpu.matmul %400, %401, %cst_154 {dimension_numbers = #tpu.dot_dimension_numbers<[1], [1], [0], [0], [0, 0, 1, 0], [], []>} : vector<8x8xbf16>, vector<8x8xbf16>, vector<8x8xf32> -> vector<8x8xf32>
    %cst_155 = arith.constant 0.353553385 : f32
    %403 = vector.broadcast %cst_155 : f32 to vector<8x8xf32>
    %404 = arith.mulf %402, %403 : vector<8x8xf32>
    %405 = vector.broadcast %324 : vector<1x8xf32> to vector<8x8xf32>
    %406 = arith.addf %404, %405 : vector<8x8xf32>
    %cst_156 = arith.constant dense<0xFF800000> : vector<8xf32>
    %407 = vector.multi_reduction <maximumf>, %406, %cst_156 [1] : vector<8x8xf32> to vector<8xf32>
    %408 = vector.shape_cast %407 : vector<8xf32> to vector<8x1xf32>
    %409 = vector.broadcast %408 : vector<8x1xf32> to vector<8x8xf32>
    %410 = arith.subf %406, %409 : vector<8x8xf32>
    %411 = math.exp %410 : vector<8x8xf32>
    %cst_157 = arith.constant dense<0.000000e+00> : vector<8xf32>
    %412 = vector.multi_reduction <add>, %411, %cst_157 [1] : vector<8x8xf32> to vector<8xf32>
    %413 = vector.shape_cast %412 : vector<8xf32> to vector<8x1xf32>
    %414 = tpu.reciprocal %413 {approx = true} : vector<8x1xf32> -> vector<8x1xf32>
    %415 = vector.broadcast %414 : vector<8x1xf32> to vector<8x8xf32>
    %416 = arith.mulf %411, %415 : vector<8x8xf32>
    %417 = arith.truncf %416 : vector<8x8xf32> to vector<8x8xbf16>
    %418 = arith.truncf %399 : vector<8x8xf32> to vector<8x8xbf16>
    %cst_158 = arith.constant dense<0.000000e+00> : vector<8x8xf32>
    %419 = tpu.matmul %417, %418, %cst_158 {dimension_numbers = #tpu.dot_dimension_numbers<[1], [0], [0], [1], [0, 0, 1, 1], [], []>} : vector<8x8xbf16>, vector<8x8xbf16>, vector<8x8xf32> -> vector<8x8xf32>
    %c0_159 = arith.constant 0 : index
    %c24_160 = arith.constant 24 : index
    %420 = vector.load %arg22[%c0_159, %c24_160] : memref<16x32xf32, #tpu.memory_space<vmem>>, vector<8x8xf32>
    tpu.vector_store %arg22[%c0_159, %c24_160], %419 {strides = array<i32>} : memref<16x32xf32, #tpu.memory_space<vmem>>, vector<8x8xf32>,
    %c1_161 = arith.constant 1 : index
    %c0_162 = arith.constant 0 : index
    %c0_163 = arith.constant 0 : index
    %421 = vector.load %arg2[%c1_161, %c0_162, %c0_163] : memref<2x1x8xf32, #tpu.memory_space<vmem>>, vector<1x1x8xf32>
    %422 = vector.shape_cast %421 : vector<1x1x8xf32> to vector<1x8xf32>
    %423 = vector.extract_strided_slice %322 {offsets = [8, 0], sizes = [8, 8], strides = [1, 1]} : vector<16x96xf32> to vector<8x8xf32>
    %424 = vector.extract_strided_slice %322 {offsets = [8, 32], sizes = [8, 8], strides = [1, 1]} : vector<16x96xf32> to vector<8x8xf32>
    %425 = vector.extract_strided_slice %322 {offsets = [8, 64], sizes = [8, 8], strides = [1, 1]} : vector<16x96xf32> to vector<8x8xf32>
    %426 = arith.truncf %423 : vector<8x8xf32> to vector<8x8xbf16>
    %427 = arith.truncf %424 : vector<8x8xf32> to vector<8x8xbf16>
    %cst_164 = arith.constant dense<0.000000e+00> : vector<8x8xf32>
    %428 = tpu.matmul %426, %427, %cst_164 {dimension_numbers = #tpu.dot_dimension_numbers<[1], [1], [0], [0], [0, 0, 1, 0], [], []>} : vector<8x8xbf16>, vector<8x8xbf16>, vector<8x8xf32> -> vector<8x8xf32>
    %cst_165 = arith.constant 0.353553385 : f32
    %429 = vector.broadcast %cst_165 : f32 to vector<8x8xf32>
    %430 = arith.mulf %428, %429 : vector<8x8xf32>
    %431 = vector.broadcast %422 : vector<1x8xf32> to vector<8x8xf32>
    %432 = arith.addf %430, %431 : vector<8x8xf32>
    %cst_166 = arith.constant dense<0xFF800000> : vector<8xf32>
    %433 = vector.multi_reduction <maximumf>, %432, %cst_166 [1] : vector<8x8xf32> to vector<8xf32>
    %434 = vector.shape_cast %433 : vector<8xf32> to vector<8x1xf32>
    %435 = vector.broadcast %434 : vector<8x1xf32> to vector<8x8xf32>
    %436 = arith.subf %432, %435 : vector<8x8xf32>
    %437 = math.exp %436 : vector<8x8xf32>
    %cst_167 = arith.constant dense<0.000000e+00> : vector<8xf32>
    %438 = vector.multi_reduction <add>, %437, %cst_167 [1] : vector<8x8xf32> to vector<8xf32>
    %439 = vector.shape_cast %438 : vector<8xf32> to vector<8x1xf32>
    %440 = tpu.reciprocal %439 {approx = true} : vector<8x1xf32> -> vector<8x1xf32>
    %441 = vector.broadcast %440 : vector<8x1xf32> to vector<8x8xf32>
    %442 = arith.mulf %437, %441 : vector<8x8xf32>
    %443 = arith.truncf %442 : vector<8x8xf32> to vector<8x8xbf16>
    %444 = arith.truncf %425 : vector<8x8xf32> to vector<8x8xbf16>
    %cst_168 = arith.constant dense<0.000000e+00> : vector<8x8xf32>
    %445 = tpu.matmul %443, %444, %cst_168 {dimension_numbers = #tpu.dot_dimension_numbers<[1], [0], [0], [1], [0, 0, 1, 1], [], []>} : vector<8x8xbf16>, vector<8x8xbf16>, vector<8x8xf32> -> vector<8x8xf32>
    %c8_169 = arith.constant 8 : index
    %c0_170 = arith.constant 0 : index
    %446 = vector.load %arg22[%c8_169, %c0_170] : memref<16x32xf32, #tpu.memory_space<vmem>>, vector<8x8xf32>
    tpu.vector_store %arg22[%c8_169, %c0_170], %445 {strides = array<i32>} : memref<16x32xf32, #tpu.memory_space<vmem>>, vector<8x8xf32>,
    %447 = vector.extract_strided_slice %322 {offsets = [8, 8], sizes = [8, 8], strides = [1, 1]} : vector<16x96xf32> to vector<8x8xf32>
    %448 = vector.extract_strided_slice %322 {offsets = [8, 40], sizes = [8, 8], strides = [1, 1]} : vector<16x96xf32> to vector<8x8xf32>
    %449 = vector.extract_strided_slice %322 {offsets = [8, 72], sizes = [8, 8], strides = [1, 1]} : vector<16x96xf32> to vector<8x8xf32>
    %450 = arith.truncf %447 : vector<8x8xf32> to vector<8x8xbf16>
    %451 = arith.truncf %448 : vector<8x8xf32> to vector<8x8xbf16>
    %cst_171 = arith.constant dense<0.000000e+00> : vector<8x8xf32>
    %452 = tpu.matmul %450, %451, %cst_171 {dimension_numbers = #tpu.dot_dimension_numbers<[1], [1], [0], [0], [0, 0, 1, 0], [], []>} : vector<8x8xbf16>, vector<8x8xbf16>, vector<8x8xf32> -> vector<8x8xf32>
    %cst_172 = arith.constant 0.353553385 : f32
    %453 = vector.broadcast %cst_172 : f32 to vector<8x8xf32>
    %454 = arith.mulf %452, %453 : vector<8x8xf32>
    %455 = vector.broadcast %422 : vector<1x8xf32> to vector<8x8xf32>
    %456 = arith.addf %454, %455 : vector<8x8xf32>
    %cst_173 = arith.constant dense<0xFF800000> : vector<8xf32>
    %457 = vector.multi_reduction <maximumf>, %456, %cst_173 [1] : vector<8x8xf32> to vector<8xf32>
    %458 = vector.shape_cast %457 : vector<8xf32> to vector<8x1xf32>
    %459 = vector.broadcast %458 : vector<8x1xf32> to vector<8x8xf32>
    %460 = arith.subf %456, %459 : vector<8x8xf32>
    %461 = math.exp %460 : vector<8x8xf32>
    %cst_174 = arith.constant dense<0.000000e+00> : vector<8xf32>
    %462 = vector.multi_reduction <add>, %461, %cst_174 [1] : vector<8x8xf32> to vector<8xf32>
    %463 = vector.shape_cast %462 : vector<8xf32> to vector<8x1xf32>
    %464 = tpu.reciprocal %463 {approx = true} : vector<8x1xf32> -> vector<8x1xf32>
    %465 = vector.broadcast %464 : vector<8x1xf32> to vector<8x8xf32>
    %466 = arith.mulf %461, %465 : vector<8x8xf32>
    %467 = arith.truncf %466 : vector<8x8xf32> to vector<8x8xbf16>
    %468 = arith.truncf %449 : vector<8x8xf32> to vector<8x8xbf16>
    %cst_175 = arith.constant dense<0.000000e+00> : vector<8x8xf32>
    %469 = tpu.matmul %467, %468, %cst_175 {dimension_numbers = #tpu.dot_dimension_numbers<[1], [0], [0], [1], [0, 0, 1, 1], [], []>} : vector<8x8xbf16>, vector<8x8xbf16>, vector<8x8xf32> -> vector<8x8xf32>
    %c8_176 = arith.constant 8 : index
    %c8_177 = arith.constant 8 : index
    %470 = vector.load %arg22[%c8_176, %c8_177] : memref<16x32xf32, #tpu.memory_space<vmem>>, vector<8x8xf32>
    tpu.vector_store %arg22[%c8_176, %c8_177], %469 {strides = array<i32>} : memref<16x32xf32, #tpu.memory_space<vmem>>, vector<8x8xf32>,
    %471 = vector.extract_strided_slice %322 {offsets = [8, 16], sizes = [8, 8], strides = [1, 1]} : vector<16x96xf32> to vector<8x8xf32>
    %472 = vector.extract_strided_slice %322 {offsets = [8, 48], sizes = [8, 8], strides = [1, 1]} : vector<16x96xf32> to vector<8x8xf32>
    %473 = vector.extract_strided_slice %322 {offsets = [8, 80], sizes = [8, 8], strides = [1, 1]} : vector<16x96xf32> to vector<8x8xf32>
    %474 = arith.truncf %471 : vector<8x8xf32> to vector<8x8xbf16>
    %475 = arith.truncf %472 : vector<8x8xf32> to vector<8x8xbf16>
    %cst_178 = arith.constant dense<0.000000e+00> : vector<8x8xf32>
    %476 = tpu.matmul %474, %475, %cst_178 {dimension_numbers = #tpu.dot_dimension_numbers<[1], [1], [0], [0], [0, 0, 1, 0], [], []>} : vector<8x8xbf16>, vector<8x8xbf16>, vector<8x8xf32> -> vector<8x8xf32>
    %cst_179 = arith.constant 0.353553385 : f32
    %477 = vector.broadcast %cst_179 : f32 to vector<8x8xf32>
    %478 = arith.mulf %476, %477 : vector<8x8xf32>
    %479 = vector.broadcast %422 : vector<1x8xf32> to vector<8x8xf32>
    %480 = arith.addf %478, %479 : vector<8x8xf32>
    %cst_180 = arith.constant dense<0xFF800000> : vector<8xf32>
    %481 = vector.multi_reduction <maximumf>, %480, %cst_180 [1] : vector<8x8xf32> to vector<8xf32>
    %482 = vector.shape_cast %481 : vector<8xf32> to vector<8x1xf32>
    %483 = vector.broadcast %482 : vector<8x1xf32> to vector<8x8xf32>
    %484 = arith.subf %480, %483 : vector<8x8xf32>
    %485 = math.exp %484 : vector<8x8xf32>
    %cst_181 = arith.constant dense<0.000000e+00> : vector<8xf32>
    %486 = vector.multi_reduction <add>, %485, %cst_181 [1] : vector<8x8xf32> to vector<8xf32>
    %487 = vector.shape_cast %486 : vector<8xf32> to vector<8x1xf32>
    %488 = tpu.reciprocal %487 {approx = true} : vector<8x1xf32> -> vector<8x1xf32>
    %489 = vector.broadcast %488 : vector<8x1xf32> to vector<8x8xf32>
    %490 = arith.mulf %485, %489 : vector<8x8xf32>
    %491 = arith.truncf %490 : vector<8x8xf32> to vector<8x8xbf16>
    %492 = arith.truncf %473 : vector<8x8xf32> to vector<8x8xbf16>
    %cst_182 = arith.constant dense<0.000000e+00> : vector<8x8xf32>
    %493 = tpu.matmul %491, %492, %cst_182 {dimension_numbers = #tpu.dot_dimension_numbers<[1], [0], [0], [1], [0, 0, 1, 1], [], []>} : vector<8x8xbf16>, vector<8x8xbf16>, vector<8x8xf32> -> vector<8x8xf32>
    %c8_183 = arith.constant 8 : index
    %c16_184 = arith.constant 16 : index
    %494 = vector.load %arg22[%c8_183, %c16_184] : memref<16x32xf32, #tpu.memory_space<vmem>>, vector<8x8xf32>
    tpu.vector_store %arg22[%c8_183, %c16_184], %493 {strides = array<i32>} : memref<16x32xf32, #tpu.memory_space<vmem>>, vector<8x8xf32>,
    %495 = vector.extract_strided_slice %322 {offsets = [8, 24], sizes = [8, 8], strides = [1, 1]} : vector<16x96xf32> to vector<8x8xf32>
    %496 = vector.extract_strided_slice %322 {offsets = [8, 56], sizes = [8, 8], strides = [1, 1]} : vector<16x96xf32> to vector<8x8xf32>
    %497 = vector.extract_strided_slice %322 {offsets = [8, 88], sizes = [8, 8], strides = [1, 1]} : vector<16x96xf32> to vector<8x8xf32>
    %498 = arith.truncf %495 : vector<8x8xf32> to vector<8x8xbf16>
    %499 = arith.truncf %496 : vector<8x8xf32> to vector<8x8xbf16>
    %cst_185 = arith.constant dense<0.000000e+00> : vector<8x8xf32>
    %500 = tpu.matmul %498, %499, %cst_185 {dimension_numbers = #tpu.dot_dimension_numbers<[1], [1], [0], [0], [0, 0, 1, 0], [], []>} : vector<8x8xbf16>, vector<8x8xbf16>, vector<8x8xf32> -> vector<8x8xf32>
    %cst_186 = arith.constant 0.353553385 : f32
    %501 = vector.broadcast %cst_186 : f32 to vector<8x8xf32>
    %502 = arith.mulf %500, %501 : vector<8x8xf32>
    %503 = vector.broadcast %422 : vector<1x8xf32> to vector<8x8xf32>
    %504 = arith.addf %502, %503 : vector<8x8xf32>
    %cst_187 = arith.constant dense<0xFF800000> : vector<8xf32>
    %505 = vector.multi_reduction <maximumf>, %504, %cst_187 [1] : vector<8x8xf32> to vector<8xf32>
    %506 = vector.shape_cast %505 : vector<8xf32> to vector<8x1xf32>
    %507 = vector.broadcast %506 : vector<8x1xf32> to vector<8x8xf32>
    %508 = arith.subf %504, %507 : vector<8x8xf32>
    %509 = math.exp %508 : vector<8x8xf32>
    %cst_188 = arith.constant dense<0.000000e+00> : vector<8xf32>
    %510 = vector.multi_reduction <add>, %509, %cst_188 [1] : vector<8x8xf32> to vector<8xf32>
    %511 = vector.shape_cast %510 : vector<8xf32> to vector<8x1xf32>
    %512 = tpu.reciprocal %511 {approx = true} : vector<8x1xf32> -> vector<8x1xf32>
    %513 = vector.broadcast %512 : vector<8x1xf32> to vector<8x8xf32>
    %514 = arith.mulf %509, %513 : vector<8x8xf32>
    %515 = arith.truncf %514 : vector<8x8xf32> to vector<8x8xbf16>
    %516 = arith.truncf %497 : vector<8x8xf32> to vector<8x8xbf16>
    %cst_189 = arith.constant dense<0.000000e+00> : vector<8x8xf32>
    %517 = tpu.matmul %515, %516, %cst_189 {dimension_numbers = #tpu.dot_dimension_numbers<[1], [0], [0], [1], [0, 0, 1, 1], [], []>} : vector<8x8xbf16>, vector<8x8xbf16>, vector<8x8xf32> -> vector<8x8xf32>
    %c8_190 = arith.constant 8 : index
    %c24_191 = arith.constant 24 : index
    %518 = vector.load %arg22[%c8_190, %c24_191] : memref<16x32xf32, #tpu.memory_space<vmem>>, vector<8x8xf32>
    tpu.vector_store %arg22[%c8_190, %c24_191], %517 {strides = array<i32>} : memref<16x32xf32, #tpu.memory_space<vmem>>, vector<8x8xf32>,
    %c0_192 = arith.constant 0 : index
    %c0_193 = arith.constant 0 : index
    %519 = vector.load %arg22[%c0_192, %c0_193] : memref<16x32xf32, #tpu.memory_space<vmem>>, vector<16x32xf32>
    %c1_194 = arith.constant 1 : index
    %c0_195 = arith.constant 0 : index
    %c0_196 = arith.constant 0 : index
    %520 = vector.load %arg7[%c1_194, %c0_195, %c0_196] : memref<2x32x32xbf16, #tpu.memory_space<vmem>>, vector<1x32x32xbf16>
    %521 = vector.shape_cast %520 : vector<1x32x32xbf16> to vector<32x32xbf16>
    %522 = arith.truncf %519 : vector<16x32xf32> to vector<16x32xbf16>
    %cst_197 = arith.constant dense<0.000000e+00> : vector<16x32xf32>
    %523 = tpu.matmul %522, %521, %cst_197 {dimension_numbers = #tpu.dot_dimension_numbers<[1], [0], [0], [1], [0, 0, 1, 1], [], []>} : vector<16x32xbf16>, vector<32x32xbf16>, vector<16x32xf32> -> vector<16x32xf32>
    %c1_198 = arith.constant 1 : index
    %c0_199 = arith.constant 0 : index
    %c0_200 = arith.constant 0 : index
    %524 = vector.load %arg8[%c1_198, %c0_199, %c0_200] : memref<2x1x32xf32, #tpu.memory_space<vmem>>, vector<1x1x32xf32>
    %525 = vector.shape_cast %524 : vector<1x1x32xf32> to vector<1x32xf32>
    %526 = vector.broadcast %525 : vector<1x32xf32> to vector<16x32xf32>
    %527 = arith.addf %523, %526 : vector<16x32xf32>
    %528 = arith.addf %527, %314 : vector<16x32xf32>
    %c1_201 = arith.constant 1 : index
    %c0_202 = arith.constant 0 : index
    %c0_203 = arith.constant 0 : index
    %529 = vector.load %arg9[%c1_201, %c0_202, %c0_203] : memref<2x1x32xf32, #tpu.memory_space<vmem>>, vector<1x1x32xf32>
    %530 = vector.shape_cast %529 : vector<1x1x32xf32> to vector<1x32xf32>
    %c1_204 = arith.constant 1 : index
    %c0_205 = arith.constant 0 : index
    %c0_206 = arith.constant 0 : index
    %531 = vector.load %arg10[%c1_204, %c0_205, %c0_206] : memref<2x1x32xf32, #tpu.memory_space<vmem>>, vector<1x1x32xf32>
    %532 = vector.shape_cast %531 : vector<1x1x32xf32> to vector<1x32xf32>
    %cst_207 = arith.constant dense<0.000000e+00> : vector<16xf32>
    %533 = vector.multi_reduction <add>, %528, %cst_207 [1] : vector<16x32xf32> to vector<16xf32>
    %534 = vector.shape_cast %533 : vector<16xf32> to vector<16x1xf32>
    %cst_208 = arith.constant 3.200000e+01 : f32
    %535 = vector.broadcast %cst_208 : f32 to vector<16x1xf32>
    %536 = arith.divf %534, %535 : vector<16x1xf32>
    %537 = vector.broadcast %536 : vector<16x1xf32> to vector<16x32xf32>
    %538 = arith.subf %528, %537 : vector<16x32xf32>
    %539 = arith.mulf %538, %538 : vector<16x32xf32>
    %cst_209 = arith.constant dense<0.000000e+00> : vector<16xf32>
    %540 = vector.multi_reduction <add>, %539, %cst_209 [1] : vector<16x32xf32> to vector<16xf32>
    %541 = vector.shape_cast %540 : vector<16xf32> to vector<16x1xf32>
    %cst_210 = arith.constant 3.200000e+01 : f32
    %542 = vector.broadcast %cst_210 : f32 to vector<16x1xf32>
    %543 = arith.divf %541, %542 : vector<16x1xf32>
    %cst_211 = arith.constant 9.99999996E-13 : f32
    %544 = vector.broadcast %cst_211 : f32 to vector<16x1xf32>
    %545 = arith.addf %543, %544 : vector<16x1xf32>
    %546 = math.rsqrt %545 : vector<16x1xf32>
    %547 = vector.broadcast %546 : vector<16x1xf32> to vector<16x32xf32>
    %548 = arith.mulf %538, %547 : vector<16x32xf32>
    %549 = vector.broadcast %530 : vector<1x32xf32> to vector<16x32xf32>
    %550 = arith.mulf %548, %549 : vector<16x32xf32>
    %551 = vector.broadcast %532 : vector<1x32xf32> to vector<16x32xf32>
    %552 = arith.addf %550, %551 : vector<16x32xf32>
    %c1_212 = arith.constant 1 : index
    %c0_213 = arith.constant 0 : index
    %c0_214 = arith.constant 0 : index
    %553 = vector.load %arg11[%c1_212, %c0_213, %c0_214] : memref<2x32x64xbf16, #tpu.memory_space<vmem>>, vector<1x32x64xbf16>
    %554 = vector.shape_cast %553 : vector<1x32x64xbf16> to vector<32x64xbf16>
    %555 = arith.truncf %552 : vector<16x32xf32> to vector<16x32xbf16>
    %cst_215 = arith.constant dense<0.000000e+00> : vector<16x64xf32>
    %556 = tpu.matmul %555, %554, %cst_215 {dimension_numbers = #tpu.dot_dimension_numbers<[1], [0], [0], [1], [0, 0, 1, 1], [], []>} : vector<16x32xbf16>, vector<32x64xbf16>, vector<16x64xf32> -> vector<16x64xf32>
    %c1_216 = arith.constant 1 : index
    %c0_217 = arith.constant 0 : index
    %c0_218 = arith.constant 0 : index
    %557 = vector.load %arg12[%c1_216, %c0_217, %c0_218] : memref<2x1x64xf32, #tpu.memory_space<vmem>>, vector<1x1x64xf32>
    %558 = vector.shape_cast %557 : vector<1x1x64xf32> to vector<1x64xf32>
    %559 = vector.broadcast %558 : vector<1x64xf32> to vector<16x64xf32>
    %560 = arith.addf %556, %559 : vector<16x64xf32>
    %cst_219 = arith.constant 5.000000e-01 : f32
    %561 = vector.broadcast %cst_219 : f32 to vector<16x64xf32>
    %562 = arith.mulf %561, %560 : vector<16x64xf32>
    %cst_220 = arith.constant 4.471500e-02 : f32
    %563 = vector.broadcast %cst_220 : f32 to vector<16x64xf32>
    %564 = arith.mulf %563, %560 : vector<16x64xf32>
    %565 = arith.mulf %564, %560 : vector<16x64xf32>
    %566 = arith.mulf %565, %560 : vector<16x64xf32>
    %567 = arith.addf %560, %566 : vector<16x64xf32>
    %cst_221 = arith.constant 0.797884583 : f32
    %568 = vector.broadcast %cst_221 : f32 to vector<16x64xf32>
    %569 = arith.mulf %568, %567 : vector<16x64xf32>
    %570 = math.tanh %569 : vector<16x64xf32>
    %cst_222 = arith.constant 1.000000e+00 : f32
    %571 = vector.broadcast %cst_222 : f32 to vector<16x64xf32>
    %572 = arith.addf %571, %570 : vector<16x64xf32>
    %573 = arith.mulf %562, %572 : vector<16x64xf32>
    %c1_223 = arith.constant 1 : index
    %c0_224 = arith.constant 0 : index
    %c0_225 = arith.constant 0 : index
    %574 = vector.load %arg13[%c1_223, %c0_224, %c0_225] : memref<2x64x32xbf16, #tpu.memory_space<vmem>>, vector<1x64x32xbf16>
    %575 = vector.shape_cast %574 : vector<1x64x32xbf16> to vector<64x32xbf16>
    %576 = arith.truncf %573 : vector<16x64xf32> to vector<16x64xbf16>
    %cst_226 = arith.constant dense<0.000000e+00> : vector<16x32xf32>
    %577 = tpu.matmul %576, %575, %cst_226 {dimension_numbers = #tpu.dot_dimension_numbers<[1], [0], [0], [1], [0, 0, 1, 1], [], []>} : vector<16x64xbf16>, vector<64x32xbf16>, vector<16x32xf32> -> vector<16x32xf32>
    %c1_227 = arith.constant 1 : index
    %c0_228 = arith.constant 0 : index
    %c0_229 = arith.constant 0 : index
    %578 = vector.load %arg14[%c1_227, %c0_228, %c0_229] : memref<2x1x32xf32, #tpu.memory_space<vmem>>, vector<1x1x32xf32>
    %579 = vector.shape_cast %578 : vector<1x1x32xf32> to vector<1x32xf32>
    %580 = vector.broadcast %579 : vector<1x32xf32> to vector<16x32xf32>
    %581 = arith.addf %577, %580 : vector<16x32xf32>
    %582 = arith.addf %581, %552 : vector<16x32xf32>
    %c1_230 = arith.constant 1 : index
    %c0_231 = arith.constant 0 : index
    %c0_232 = arith.constant 0 : index
    %583 = vector.load %arg15[%c1_230, %c0_231, %c0_232] : memref<2x1x32xf32, #tpu.memory_space<vmem>>, vector<1x1x32xf32>
    %584 = vector.shape_cast %583 : vector<1x1x32xf32> to vector<1x32xf32>
    %c1_233 = arith.constant 1 : index
    %c0_234 = arith.constant 0 : index
    %c0_235 = arith.constant 0 : index
    %585 = vector.load %arg16[%c1_233, %c0_234, %c0_235] : memref<2x1x32xf32, #tpu.memory_space<vmem>>, vector<1x1x32xf32>
    %586 = vector.shape_cast %585 : vector<1x1x32xf32> to vector<1x32xf32>
    %cst_236 = arith.constant dense<0.000000e+00> : vector<16xf32>
    %587 = vector.multi_reduction <add>, %582, %cst_236 [1] : vector<16x32xf32> to vector<16xf32>
    %588 = vector.shape_cast %587 : vector<16xf32> to vector<16x1xf32>
    %cst_237 = arith.constant 3.200000e+01 : f32
    %589 = vector.broadcast %cst_237 : f32 to vector<16x1xf32>
    %590 = arith.divf %588, %589 : vector<16x1xf32>
    %591 = vector.broadcast %590 : vector<16x1xf32> to vector<16x32xf32>
    %592 = arith.subf %582, %591 : vector<16x32xf32>
    %593 = arith.mulf %592, %592 : vector<16x32xf32>
    %cst_238 = arith.constant dense<0.000000e+00> : vector<16xf32>
    %594 = vector.multi_reduction <add>, %593, %cst_238 [1] : vector<16x32xf32> to vector<16xf32>
    %595 = vector.shape_cast %594 : vector<16xf32> to vector<16x1xf32>
    %cst_239 = arith.constant 3.200000e+01 : f32
    %596 = vector.broadcast %cst_239 : f32 to vector<16x1xf32>
    %597 = arith.divf %595, %596 : vector<16x1xf32>
    %cst_240 = arith.constant 9.99999996E-13 : f32
    %598 = vector.broadcast %cst_240 : f32 to vector<16x1xf32>
    %599 = arith.addf %597, %598 : vector<16x1xf32>
    %600 = math.rsqrt %599 : vector<16x1xf32>
    %601 = vector.broadcast %600 : vector<16x1xf32> to vector<16x32xf32>
    %602 = arith.mulf %592, %601 : vector<16x32xf32>
    %603 = vector.broadcast %584 : vector<1x32xf32> to vector<16x32xf32>
    %604 = arith.mulf %602, %603 : vector<16x32xf32>
    %605 = vector.broadcast %586 : vector<1x32xf32> to vector<16x32xf32>
    %606 = arith.addf %604, %605 : vector<16x32xf32>
    %c0_241 = arith.constant 0 : index
    %c0_242 = arith.constant 0 : index
    %607 = vector.load %arg17[%c0_241, %c0_242] : memref<32x32xbf16, #tpu.memory_space<vmem>>, vector<32x32xbf16>
    %608 = arith.truncf %606 : vector<16x32xf32> to vector<16x32xbf16>
    %cst_243 = arith.constant dense<0.000000e+00> : vector<16x32xf32>
    %609 = tpu.matmul %608, %607, %cst_243 {dimension_numbers = #tpu.dot_dimension_numbers<[1], [0], [0], [1], [0, 0, 1, 1], [], []>} : vector<16x32xbf16>, vector<32x32xbf16>, vector<16x32xf32> -> vector<16x32xf32>
    %c0_244 = arith.constant 0 : index
    %c0_245 = arith.constant 0 : index
    %610 = vector.load %arg18[%c0_244, %c0_245] : memref<1x32xf32, #tpu.memory_space<vmem>>, vector<1x32xf32>
    %611 = vector.broadcast %610 : vector<1x32xf32> to vector<16x32xf32>
    %612 = arith.addf %609, %611 : vector<16x32xf32>
    %613 = math.tanh %612 : vector<16x32xf32>
    %c0_246 = arith.constant 0 : index
    %c0_247 = arith.constant 0 : index
    %614 = vector.load %arg19[%c0_246, %c0_247] : memref<32x128xbf16, #tpu.memory_space<vmem>>, vector<32x128xbf16>
    %615 = arith.truncf %613 : vector<16x32xf32> to vector<16x32xbf16>
    %cst_248 = arith.constant dense<0.000000e+00> : vector<16x128xf32>
    %616 = tpu.matmul %615, %614, %cst_248 {dimension_numbers = #tpu.dot_dimension_numbers<[1], [0], [0], [1], [0, 0, 1, 1], [], []>} : vector<16x32xbf16>, vector<32x128xbf16>, vector<16x128xf32> -> vector<16x128xf32>
    %c0_249 = arith.constant 0 : index
    %c0_250 = arith.constant 0 : index
    %617 = vector.load %arg20[%c0_249, %c0_250] : memref<1x128xf32, #tpu.memory_space<vmem>>, vector<1x128xf32>
    %618 = vector.broadcast %617 : vector<1x128xf32> to vector<16x128xf32>
    %619 = arith.addf %616, %618 : vector<16x128xf32>
    %c0_251 = arith.constant 0 : index
    %c0_252 = arith.constant 0 : index
    %620 = vector.load %arg21[%c0_251, %c0_252] : memref<16x128xf32, #tpu.memory_space<vmem>>, vector<16x128xf32>
    tpu.vector_store %arg21[%c0_251, %c0_252], %619 {strides = array<i32>} : memref<16x128xf32, #tpu.memory_space<vmem>>, vector<16x128xf32>,
    return
  }
  func.func @transform_0(%arg0: i32) -> (i32, i32) {
    %c0_i32 = arith.constant 0 : i32
    %c0_i32_0 = arith.constant 0 : i32
    %c0_i32_1 = arith.constant 0 : i32
    return %c0_i32, %c0_i32_0 : i32, i32
  }
  func.func @transform_1(%arg0: i32) -> (i32, i32, i32) {
    %c0_i32 = arith.constant 0 : i32
    %c0_i32_0 = arith.constant 0 : i32
    %c0_i32_1 = arith.constant 0 : i32
    %c0_i32_2 = arith.constant 0 : i32
    return %c0_i32, %c0_i32_0, %c0_i32_1 : i32, i32, i32
  }
  func.func @transform_2(%arg0: i32) -> (i32, i32) {
    %c0_i32 = arith.constant 0 : i32
    %c0_i32_0 = arith.constant 0 : i32
    %c0_i32_1 = arith.constant 0 : i32
    return %c0_i32, %c0_i32_0 : i32, i32
  }
  func.func @transform_3(%arg0: i32) -> (i32, i32) {
    %c0_i32 = arith.constant 0 : i32
    %c0_i32_0 = arith.constant 0 : i32
    %c0_i32_1 = arith.constant 0 : i32
    return %c0_i32, %c0_i32_0 : i32, i32
  }
  func.func @transform_4(%arg0: i32) -> (i32, i32, i32) {
    %c0_i32 = arith.constant 0 : i32
    %c0_i32_0 = arith.constant 0 : i32
    %c0_i32_1 = arith.constant 0 : i32
    %c0_i32_2 = arith.constant 0 : i32
    return %c0_i32, %c0_i32_0, %c0_i32_1 : i32, i32, i32
  }
  func.func @transform_5(%arg0: i32) -> (i32, i32, i32) {
    %c0_i32 = arith.constant 0 : i32
    %c0_i32_0 = arith.constant 0 : i32
    %c0_i32_1 = arith.constant 0 : i32
    %c0_i32_2 = arith.constant 0 : i32
    return %c0_i32, %c0_i32_0, %c0_i32_1 : i32, i32, i32
  }
  func.func @transform_6(%arg0: i32) -> (i32, i32, i32) {
    %c0_i32 = arith.constant 0 : i32
    %c0_i32_0 = arith.constant 0 : i32
    %c0_i32_1 = arith.constant 0 : i32
    %c0_i32_2 = arith.constant 0 : i32
    return %c0_i32, %c0_i32_0, %c0_i32_1 : i32, i32, i32
  }
  func.func @transform_7(%arg0: i32) -> (i32, i32, i32) {
    %c0_i32 = arith.constant 0 : i32
    %c0_i32_0 = arith.constant 0 : i32
    %c0_i32_1 = arith.constant 0 : i32
    %c0_i32_2 = arith.constant 0 : i32
    return %c0_i32, %c0_i32_0, %c0_i32_1 : i32, i32, i32
  }
  func.func @transform_8(%arg0: i32) -> (i32, i32, i32) {
    %c0_i32 = arith.constant 0 : i32
    %c0_i32_0 = arith.constant 0 : i32
    %c0_i32_1 = arith.constant 0 : i32
    %c0_i32_2 = arith.constant 0 : i32
    return %c0_i32, %c0_i32_0, %c0_i32_1 : i32, i32, i32
  }
  func.func @transform_9(%arg0: i32) -> (i32, i32, i32) {
    %c0_i32 = arith.constant 0 : i32
    %c0_i32_0 = arith.constant 0 : i32
    %c0_i32_1 = arith.constant 0 : i32
    %c0_i32_2 = arith.constant 0 : i32
    return %c0_i32, %c0_i32_0, %c0_i32_1 : i32, i32, i32
  }
  func.func @transform_10(%arg0: i32) -> (i32, i32, i32) {
    %c0_i32 = arith.constant 0 : i32
    %c0_i32_0 = arith.constant 0 : i32
    %c0_i32_1 = arith.constant 0 : i32
    %c0_i32_2 = arith.constant 0 : i32
    return %c0_i32, %c0_i32_0, %c0_i32_1 : i32, i32, i32
  }
  func.func @transform_11(%arg0: i32) -> (i32, i32, i32) {
    %c0_i32 = arith.constant 0 : i32
    %c0_i32_0 = arith.constant 0 : i32
    %c0_i32_1 = arith.constant 0 : i32
    %c0_i32_2 = arith.constant 0 : i32
    return %c0_i32, %c0_i32_0, %c0_i32_1 : i32, i32, i32
  }
  func.func @transform_12(%arg0: i32) -> (i32, i32, i32) {
    %c0_i32 = arith.constant 0 : i32
    %c0_i32_0 = arith.constant 0 : i32
    %c0_i32_1 = arith.constant 0 : i32
    %c0_i32_2 = arith.constant 0 : i32
    return %c0_i32, %c0_i32_0, %c0_i32_1 : i32, i32, i32
  }
  func.func @transform_13(%arg0: i32) -> (i32, i32, i32) {
    %c0_i32 = arith.constant 0 : i32
    %c0_i32_0 = arith.constant 0 : i32
    %c0_i32_1 = arith.constant 0 : i32
    %c0_i32_2 = arith.constant 0 : i32
    return %c0_i32, %c0_i32_0, %c0_i32_1 : i32, i32, i32
  }
  func.func @transform_14(%arg0: i32) -> (i32, i32, i32) {
    %c0_i32 = arith.constant 0 : i32
    %c0_i32_0 = arith.constant 0 : i32
    %c0_i32_1 = arith.constant 0 : i32
    %c0_i32_2 = arith.constant 0 : i32
    return %c0_i32, %c0_i32_0, %c0_i32_1 : i32, i32, i32
  }
  func.func @transform_15(%arg0: i32) -> (i32, i32, i32) {
    %c0_i32 = arith.constant 0 : i32
    %c0_i32_0 = arith.constant 0 : i32
    %c0_i32_1 = arith.constant 0 : i32
    %c0_i32_2 = arith.constant 0 : i32
    return %c0_i32, %c0_i32_0, %c0_i32_1 : i32, i32, i32
  }
  func.func @transform_16(%arg0: i32) -> (i32, i32) {
    %c0_i32 = arith.constant 0 : i32
    %c0_i32_0 = arith.constant 0 : i32
    %c0_i32_1 = arith.constant 0 : i32
    return %c0_i32, %c0_i32_0 : i32, i32
  }
  func.func @transform_17(%arg0: i32) -> (i32, i32) {
    %c0_i32 = arith.constant 0 : i32
    %c0_i32_0 = arith.constant 0 : i32
    %c0_i32_1 = arith.constant 0 : i32
    return %c0_i32, %c0_i32_0 : i32, i32
  }
  func.func @transform_18(%arg0: i32) -> (i32, i32) {
    %c0_i32 = arith.constant 0 : i32
    %c0_i32_0 = arith.constant 0 : i32
    %c0_i32_1 = arith.constant 0 : i32
    return %c0_i32, %c0_i32_0 : i32, i32
  }
  func.func @transform_19(%arg0: i32) -> (i32, i32) {
    %c0_i32 = arith.constant 0 : i32
    %c0_i32_0 = arith.constant 0 : i32
    %c0_i32_1 = arith.constant 0 : i32
    return %c0_i32, %c0_i32_0 : i32, i32
  }
  func.func @transform_20(%arg0: i32) -> (i32, i32) {
    %c0_i32 = arith.constant 0 : i32
    %c0_i32_0 = arith.constant 0 : i32
    %c0_i32_1 = arith.constant 0 : i32
    return %c0_i32, %c0_i32_0 : i32, i32
  }
}

</mosaic_0001>

<llo_original>
// kernel: bert_classifier_forward.1
$region0: #{bert_classifier_forward.1}
  #allocation0 [shape = 'u32[]', space=smem, size = 0x4, offset = 0x4, fixed_abs, tag = 'smem constant byte address 0x4 - core index']
  #allocation1 [shape = 'u32[144,128]{1,0:T(1,128)}', space=vmem, size = 0x12000, scoped, tag = 'internal scratch']
  #allocation2 [shape = 'f32[16,32]{1,0:T(8,128)}', space=vmem, size = 0x2000, scoped, tag = 'scratch operand']
  %s0 = inlined_call_operand.vmem [shape: f32[16,32], index: 0, kind: input, shape index: {}]
  %s1 = inlined_call_operand.vmem [shape: f32[2,1,8], index: 1, kind: input, shape index: {}]
  %s2 = inlined_call_operand.vmem [shape: f32[1,32], index: 2, kind: input, shape index: {}]
  %s3 = inlined_call_operand.vmem [shape: f32[1,32], index: 3, kind: input, shape index: {}]
  %s4 = inlined_call_operand.vmem [shape: bf16[2,32,96], index: 4, kind: input, shape index: {}]
  %s5 = inlined_call_operand.vmem [shape: f32[2,1,96], index: 5, kind: input, shape index: {}]
  %s6 = inlined_call_operand.vmem [shape: bf16[2,32,32], index: 6, kind: input, shape index: {}]
  %s7 = inlined_call_operand.vmem [shape: f32[2,1,32], index: 7, kind: input, shape index: {}]
  %s8 = inlined_call_operand.vmem [shape: f32[2,1,32], index: 8, kind: input, shape index: {}]
  %s9 = inlined_call_operand.vmem [shape: f32[2,1,32], index: 9, kind: input, shape index: {}]
  %s10 = inlined_call_operand.vmem [shape: bf16[2,32,64], index: 10, kind: input, shape index: {}]
  %s11 = inlined_call_operand.vmem [shape: f32[2,1,64], index: 11, kind: input, shape index: {}]
  %s12 = inlined_call_operand.vmem [shape: bf16[2,64,32], index: 12, kind: input, shape index: {}]
  %s13 = inlined_call_operand.vmem [shape: f32[2,1,32], index: 13, kind: input, shape index: {}]
  %s14 = inlined_call_operand.vmem [shape: f32[2,1,32], index: 14, kind: input, shape index: {}]
  %s15 = inlined_call_operand.vmem [shape: f32[2,1,32], index: 15, kind: input, shape index: {}]
  %s16 = inlined_call_operand.vmem [shape: bf16[32,32], index: 16, kind: input, shape index: {}]
  %s17 = inlined_call_operand.vmem [shape: f32[1,32], index: 17, kind: input, shape index: {}]
  %s18 = inlined_call_operand.vmem [shape: bf16[32,128], index: 18, kind: input, shape index: {}]
  %s19 = inlined_call_operand.vmem [shape: f32[1,128], index: 19, kind: input, shape index: {}]
  %s20 = inlined_call_operand.vmem [shape: f32[16,128], index: 20, kind: output, shape index: {}]
  %s21 = sld [smem:[#allocation0]]
  $region90: #{bert_classifier_forward.1} parent=0
    _
  %s23 = ssub.s32 1, %s21
  %s24 = scalar_select 0, %s23, %s21
  // Predicated region
  $region2: #{bert_classifier_forward.1} parent=0 // pred_check
    _
  $region3: #{bert_classifier_forward.1} parent=0 // pred_check_branch
    %26 = sbr.rel (0) target = $region5
  $region4: #{bert_classifier_forward.1} parent=0 // pred_region
    _
  $region5: #{bert_classifier_forward.1} parent=0 // pred_fallthru
    _
  // Predicated region
  $region6: #{bert_classifier_forward.1} parent=0 // pred_check
    _
  $region7: #{bert_classifier_forward.1} parent=0 // pred_check_branch
    %28 = sbr.rel (0) target = $region9
  $region8: #{bert_classifier_forward.1} parent=0 // pred_region
    _
  $region9: #{bert_classifier_forward.1} parent=0 // pred_fallthru
    _
  // Predicated region
  $region10: #{bert_classifier_forward.1} parent=0 // pred_check
    _
  $region11: #{bert_classifier_forward.1} parent=0 // pred_check_branch
    %30 = sbr.rel (0) target = $region13
  $region12: #{bert_classifier_forward.1} parent=0 // pred_region
    _
  $region13: #{bert_classifier_forward.1} parent=0 // pred_fallthru
    _
  // Predicated region
  $region14: #{bert_classifier_forward.1} parent=0 // pred_check
    _
  $region15: #{bert_classifier_forward.1} parent=0 // pred_check_branch
    %32 = sbr.rel (0) target = $region17
  $region16: #{bert_classifier_forward.1} parent=0 // pred_region
    _
  $region17: #{bert_classifier_forward.1} parent=0 // pred_fallthru
    _
  // Predicated region
  $region18: #{bert_classifier_forward.1} parent=0 // pred_check
    _
  $region19: #{bert_classifier_forward.1} parent=0 // pred_check_branch
    %34 = sbr.rel (0) target = $region21
  $region20: #{bert_classifier_forward.1} parent=0 // pred_region
    _
  $region21: #{bert_classifier_forward.1} parent=0 // pred_fallthru
    _
  // Predicated region
  $region22: #{bert_classifier_forward.1} parent=0 // pred_check
    _
  $region23: #{bert_classifier_forward.1} parent=0 // pred_check_branch
    %36 = sbr.rel (0) target = $region25
  $region24: #{bert_classifier_forward.1} parent=0 // pred_region
    _
  $region25: #{bert_classifier_forward.1} parent=0 // pred_fallthru
    _
  // Predicated region
  $region26: #{bert_classifier_forward.1} parent=0 // pred_check
    _
  $region27: #{bert_classifier_forward.1} parent=0 // pred_check_branch
    %38 = sbr.rel (0) target = $region29
  $region28: #{bert_classifier_forward.1} parent=0 // pred_region
    _
  $region29: #{bert_classifier_forward.1} parent=0 // pred_fallthru
    _
  // Predicated region
  $region30: #{bert_classifier_forward.1} parent=0 // pred_check
    _
  $region31: #{bert_classifier_forward.1} parent=0 // pred_check_branch
    %40 = sbr.rel (0) target = $region33
  $region32: #{bert_classifier_forward.1} parent=0 // pred_region
    _
  $region33: #{bert_classifier_forward.1} parent=0 // pred_fallthru
    _
  // Predicated region
  $region34: #{bert_classifier_forward.1} parent=0 // pred_check
    _
  $region35: #{bert_classifier_forward.1} parent=0 // pred_check_branch
    %42 = sbr.rel (0) target = $region37
  $region36: #{bert_classifier_forward.1} parent=0 // pred_region
    _
  $region37: #{bert_classifier_forward.1} parent=0 // pred_fallthru
    _
  // Predicated region
  $region38: #{bert_classifier_forward.1} parent=0 // pred_check
    _
  $region39: #{bert_classifier_forward.1} parent=0 // pred_check_branch
    %44 = sbr.rel (0) target = $region41
  $region40: #{bert_classifier_forward.1} parent=0 // pred_region
    _
  $region41: #{bert_classifier_forward.1} parent=0 // pred_fallthru
    _
  // Predicated region
  $region42: #{bert_classifier_forward.1} parent=0 // pred_check
    _
  $region43: #{bert_classifier_forward.1} parent=0 // pred_check_branch
    %46 = sbr.rel (0) target = $region45
  $region44: #{bert_classifier_forward.1} parent=0 // pred_region
    _
  $region45: #{bert_classifier_forward.1} parent=0 // pred_fallthru
    _
  // Predicated region
  $region46: #{bert_classifier_forward.1} parent=0 // pred_check
    _
  $region47: #{bert_classifier_forward.1} parent=0 // pred_check_branch
    %48 = sbr.rel (0) target = $region49
  $region48: #{bert_classifier_forward.1} parent=0 // pred_region
    _
  $region49: #{bert_classifier_forward.1} parent=0 // pred_fallthru
    _
  // Predicated region
  $region50: #{bert_classifier_forward.1} parent=0 // pred_check
    _
  $region51: #{bert_classifier_forward.1} parent=0 // pred_check_branch
    %50 = sbr.rel (0) target = $region53
  $region52: #{bert_classifier_forward.1} parent=0 // pred_region
    _
  $region53: #{bert_classifier_forward.1} parent=0 // pred_fallthru
    _
  // Predicated region
  $region54: #{bert_classifier_forward.1} parent=0 // pred_check
    _
  $region55: #{bert_classifier_forward.1} parent=0 // pred_check_branch
    %52 = sbr.rel (0) target = $region57
  $region56: #{bert_classifier_forward.1} parent=0 // pred_region
    _
  $region57: #{bert_classifier_forward.1} parent=0 // pred_fallthru
    _
  // Predicated region
  $region58: #{bert_classifier_forward.1} parent=0 // pred_check
    _
  $region59: #{bert_classifier_forward.1} parent=0 // pred_check_branch
    %54 = sbr.rel (0) target = $region61
  $region60: #{bert_classifier_forward.1} parent=0 // pred_region
    _
  $region61: #{bert_classifier_forward.1} parent=0 // pred_fallthru
    _
  // Predicated region
  $region62: #{bert_classifier_forward.1} parent=0 // pred_check
    _
  $region63: #{bert_classifier_forward.1} parent=0 // pred_check_branch
    %56 = sbr.rel (0) target = $region65
  $region64: #{bert_classifier_forward.1} parent=0 // pred_region
    _
  $region65: #{bert_classifier_forward.1} parent=0 // pred_fallthru
    _
  // Predicated region
  $region66: #{bert_classifier_forward.1} parent=0 // pred_check
    _
  $region67: #{bert_classifier_forward.1} parent=0 // pred_check_branch
    %58 = sbr.rel (0) target = $region69
  $region68: #{bert_classifier_forward.1} parent=0 // pred_region
    _
  $region69: #{bert_classifier_forward.1} parent=0 // pred_fallthru
    _
  // Predicated region
  $region70: #{bert_classifier_forward.1} parent=0 // pred_check
    _
  $region71: #{bert_classifier_forward.1} parent=0 // pred_check_branch
    %60 = sbr.rel (0) target = $region73
  $region72: #{bert_classifier_forward.1} parent=0 // pred_region
    _
  $region73: #{bert_classifier_forward.1} parent=0 // pred_fallthru
    _
  // Predicated region
  $region74: #{bert_classifier_forward.1} parent=0 // pred_check
    _
  $region75: #{bert_classifier_forward.1} parent=0 // pred_check_branch
    %62 = sbr.rel (0) target = $region77
  $region76: #{bert_classifier_forward.1} parent=0 // pred_region
    _
  $region77: #{bert_classifier_forward.1} parent=0 // pred_fallthru
    _
  // Predicated region
  $region78: #{bert_classifier_forward.1} parent=0 // pred_check
    _
  $region79: #{bert_classifier_forward.1} parent=0 // pred_check_branch
    %64 = sbr.rel (0) target = $region81
  $region80: #{bert_classifier_forward.1} parent=0 // pred_region
    _
  $region81: #{bert_classifier_forward.1} parent=0 // pred_fallthru
    _
  %v66 = vld [vmem:[%s0] sm:$0xff]
  %v67 = vld [vmem:[%s0 + $0x8] sm:$0xff]
  %v68 = vld [vmem:[%s2] sm:$0x1]
  %v69 = vld [vmem:[%s3] sm:$0x1]
  %vm70 = vcmask 261120
  %v71 = vsel %vm70, %v66, 0.0
  %72 = vadd.xlane.f32.xlu0 %v71
  %v73 = vpop.xlane.xlu0 %72
  %v74 = vsel %vm70, %v67, 0.0
  %75 = vadd.xlane.f32.xlu0 %v74
  %v76 = vpop.xlane.xlu0 %75
  %v77 = vrcp.pop 32.0
  %v78 = vmul.f32 %v73, %v77
  %v79 = vmul.f32 %v76, %v77
  %v80 = vsub.f32 %v66, %v78
  %v81 = vsub.f32 %v67, %v79
  %v82 = vmul.f32 %v80, %v80
  %v83 = vmul.f32 %v81, %v81
  %v84 = vsel %vm70, %v82, 0.0
  %85 = vadd.xlane.f32.xlu0 %v84
  %v86 = vpop.xlane.xlu0 %85
  %v87 = vsel %vm70, %v83, 0.0
  %88 = vadd.xlane.f32.xlu0 %v87
  %v89 = vpop.xlane.xlu0 %88
  %v90 = vmul.f32 %v86, %v77
  %v91 = vmul.f32 %v89, %v77
  %v92 = vadd.f32 %v90, 1e-12
  %v93 = vadd.f32 %v91, 1e-12
  %v94 = vrsqrt.pop %v92
  %v95 = vrsqrt.pop %v93
  %v96 = vmul.f32 %v80, %v94
  %v97 = vmul.f32 %v81, %v95
  %v99 = vlaneseq
  %v100 = vshrl.u32 %v99, 7
  %v101 = vsub.s32 0, %v100
  %v102 = vrot.slane %v68, %v101
  %v104 = vmul.f32 %v96, %v102
  %v105 = vmul.f32 %v97, %v102
  %v107 = vlaneseq
  %v108 = vshrl.u32 %v107, 7
  %v109 = vsub.s32 0, %v108
  %v110 = vrot.slane %v69, %v109
  %v112 = vadd.f32 %v104, %v110
  %v113 = vadd.f32 %v105, %v110
  %v114 = vld [vmem:[%s4] sm:$0xf]
  %v115 = vld [vmem:[%s4 + $0x4] sm:$0xf]
  %v116 = vld [vmem:[%s4 + $0x8] sm:$0xf]
  %v117 = vld [vmem:[%s4 + $0xc] sm:$0xf]
  %v118 = vpack.c.bf16 %v113, %v112
  %v119 = vld [vmem:[%s5] sm:$0x1]
  %v121 = vlaneseq
  %v122 = vshrl.u32 %v121, 7
  %v123 = vsub.s32 0, %v122
  %v124 = vrot.slane %v119, %v123
  %v130 = vunpack.c.l.b16 %v114
  %v131 = vunpack.c.l.b16 %v115
  %v132 = vunpack.c.l.b16 %v116
  %v133 = vunpack.c.l.b16 %v117
  %v134 = vpack.c.b16 %v131, %v130
  %v135 = vpack.c.b16 %v133, %v132
  %v139 = vsel %vm70, %v118, 0
  %141 = vmatprep.subr.bf16.mxu0 0
  %142 = vmatpush1.bf16.msra.mxu0 %v134
  %143 = vmatprep.subr.bf16.mxu0 0
  %144 = vmatpush1.bf16.msra.mxu0 %v135
  %145 = vmatprep.subr.bf16.mxu0 0
  %146 = vmatpush1.bf16.msra.mxu0 0
  %147 = vmatprep.subr.bf16.mxu0 0
  %148 = vmatpush1.bf16.msra.mxu0 0
  %149 = vmatprep.subr.bf16.mxu0 0
  %150 = vmatpush1.bf16.msra.mxu0 0
  %151 = vmatprep.subr.bf16.mxu0 0
  %152 = vmatpush1.bf16.msra.mxu0 0
  %153 = vmatprep.subr.bf16.mxu0 0
  %154 = vmatpush1.bf16.msra.mxu0 0
  %155 = vmatprep.subr.bf16.mxu0 0
  %156 = vmatpush1.bf16.msra.mxu0 0
  %157 = vmatprep.subr.bf16.mxu0 0
  %158 = vmatpush1.bf16.msra.mxu0 0
  %159 = vmatprep.subr.bf16.mxu0 0
  %160 = vmatpush1.bf16.msra.mxu0 0
  %161 = vmatprep.subr.bf16.mxu0 0
  %162 = vmatpush1.bf16.msra.mxu0 0
  %163 = vmatprep.subr.bf16.mxu0 0
  %164 = vmatpush1.bf16.msra.mxu0 0
  %165 = vmatprep.subr.bf16.mxu0 0
  %166 = vmatpush1.bf16.msra.mxu0 0
  %167 = vmatprep.subr.bf16.mxu0 0
  %168 = vmatpush1.bf16.msra.mxu0 0
  %169 = vmatprep.subr.bf16.mxu0 0
  %170 = vmatpush1.bf16.msra.mxu0 0
  %171 = vmatprep.subr.bf16.mxu0 0
  %172 = vmatpush1.bf16.msra.mxu0 0
  %173 = vmatprep.mubr.bf16.mxu0 0
  %174 = vmatmul.mubr.bf16.gmra.mrb[0].mxu0 %v139
  %v175 = vpop.f32.mrb[0].mxu0
  %v176 = vadd.f32 %v124, %v175
  %v177 = vpop.f32.mrb[0].mxu0
  %v178 = vpop.f32.mrb[0].mxu0
  %v179 = vadd.f32 %v124, %v178
  %v180 = vpop.f32.mrb[0].mxu0
  %181 = vdwg.mxu0
  %v182 = vld [vmem:[%s1] sm:$0x1]
  %v183 = vpack.c.bf16 %v176, %v176
  %185 = vrot.lane.b32.xlu0 %v183, 96
  %v186 = vpop.permute.xlu0 %185
  %vm187 = vcmask 64512
  %v189 = vsel %vm187, %v183, 0
  %v192 = vsel %vm187, %v186, 0
  %194 = vmatprep.subr.bf16.mxu0 0
  %195 = vmatpush1.bf16.xpose.msra.mxu0 %v192
  %196 = vmatprep.subr.bf16.mxu0 0
  %197 = vmatpush1.bf16.xpose.msra.mxu0 0
  %198 = vmatprep.subr.bf16.mxu0 0
  %199 = vmatpush1.bf16.xpose.msra.mxu0 0
  %200 = vmatprep.subr.bf16.mxu0 0
  %201 = vmatpush1.bf16.xpose.msra.mxu0 0
  %202 = vmatprep.subr.bf16.mxu0 0
  %203 = vmatpush1.bf16.xpose.msra.mxu0 0
  %204 = vmatprep.subr.bf16.mxu0 0
  %205 = vmatpush1.bf16.xpose.msra.mxu0 0
  %206 = vmatprep.subr.bf16.mxu0 0
  %207 = vmatpush1.bf16.xpose.msra.mxu0 0
  %208 = vmatprep.subr.bf16.mxu0 0
  %209 = vmatpush1.bf16.xpose.msra.mxu0 0
  %210 = vmatprep.subr.bf16.mxu0 0
  %211 = vmatpush1.bf16.xpose.msra.mxu0 0
  %212 = vmatprep.subr.bf16.mxu0 0
  %213 = vmatpush1.bf16.xpose.msra.mxu0 0
  %214 = vmatprep.subr.bf16.mxu0 0
  %215 = vmatpush1.bf16.xpose.msra.mxu0 0
  %216 = vmatprep.subr.bf16.mxu0 0
  %217 = vmatpush1.bf16.xpose.msra.mxu0 0
  %218 = vmatprep.subr.bf16.mxu0 0
  %219 = vmatpush1.bf16.xpose.msra.mxu0 0
  %220 = vmatprep.subr.bf16.mxu0 0
  %221 = vmatpush1.bf16.xpose.msra.mxu0 0
  %222 = vmatprep.subr.bf16.mxu0 0
  %223 = vmatpush1.bf16.xpose.msra.mxu0 0
  %224 = vmatprep.subr.bf16.mxu0 0
  %225 = vmatpush1.bf16.xpose.msra.mxu0 0
  %226 = vmatprep.mubr.bf16.mxu0 0
  %227 = vmatmul.mubr.bf16.gmra.mrb[0].mxu0 %v189
  %v228 = vpop.f32.mrb[0].mxu0
  %v229 = vadd.f32 0.0, %v228
  %v230 = vpop.f32.mrb[0].mxu0
  %v231 = vpop.f32.mrb[0].mxu0
  %v232 = vpop.f32.mrb[0].mxu0
  %233 = vdwg.mxu0
  %v234 = vmul.f32 %v229, 0.35355338
  %v236 = vlaneseq
  %v237 = vshrl.u32 %v236, 7
  %v238 = vsub.s32 0, %v237
  %v239 = vrot.slane %v182, %v238
  %v241 = vadd.f32 %v234, %v239
  %v242 = vsel %vm187, %v241, -inf
  %243 = vmax.xlane.f32.xlu0 %v242
  %v244 = vpop.xlane.xlu0 %243
  %v245 = vsub.f32 %v241, %v244
  %v246 = vmul.f32 %v245, 1.442695
  %v247 = vpow.pop %v246
  %v248 = vsel %vm187, %v247, 0.0
  %249 = vadd.xlane.f32.xlu0 %v248
  %v250 = vpop.xlane.xlu0 %249
  %v251 = vrcp.pop %v250
  %v252 = vmul.f32 %v247, %v251
  %v253 = vpack.c.bf16 %v252, %v252
  %254 = vrot.lane.b32.xlu0 %v183, 64
  %v255 = vpop.permute.xlu0 %254
  %v257 = vsel %vm187, %v253, 0
  %vm259 = vcmask 1043456
  %v261 = vsel %vm259, %v255, 0
  %263 = vmatprep.subr.bf16.mxu0 0
  %264 = vmatpush1.bf16.msra.mxu0 %v261
  %265 = vmatprep.subr.bf16.mxu0 0
  %266 = vmatpush1.bf16.msra.mxu0 0
  %267 = vmatprep.subr.bf16.mxu0 0
  %268 = vmatpush1.bf16.msra.mxu0 0
  %269 = vmatprep.subr.bf16.mxu0 0
  %270 = vmatpush1.bf16.msra.mxu0 0
  %271 = vmatprep.subr.bf16.mxu0 0
  %272 = vmatpush1.bf16.msra.mxu0 0
  %273 = vmatprep.subr.bf16.mxu0 0
  %274 = vmatpush1.bf16.msra.mxu0 0
  %275 = vmatprep.subr.bf16.mxu0 0
  %276 = vmatpush1.bf16.msra.mxu0 0
  %277 = vmatprep.subr.bf16.mxu0 0
  %278 = vmatpush1.bf16.msra.mxu0 0
  %279 = vmatprep.subr.bf16.mxu0 0
  %280 = vmatpush1.bf16.msra.mxu0 0
  %281 = vmatprep.subr.bf16.mxu0 0
  %282 = vmatpush1.bf16.msra.mxu0 0
  %283 = vmatprep.subr.bf16.mxu0 0
  %284 = vmatpush1.bf16.msra.mxu0 0
  %285 = vmatprep.subr.bf16.mxu0 0
  %286 = vmatpush1.bf16.msra.mxu0 0
  %287 = vmatprep.subr.bf16.mxu0 0
  %288 = vmatpush1.bf16.msra.mxu0 0
  %289 = vmatprep.subr.bf16.mxu0 0
  %290 = vmatpush1.bf16.msra.mxu0 0
  %291 = vmatprep.subr.bf16.mxu0 0
  %292 = vmatpush1.bf16.msra.mxu0 0
  %293 = vmatprep.subr.bf16.mxu0 0
  %294 = vmatpush1.bf16.msra.mxu0 0
  %295 = vmatprep.mubr.bf16.mxu0 0
  %296 = vmatmul.mubr.bf16.gmra.mrb[0].mxu0 %v257
  %v297 = vpop.f32.mrb[0].mxu0
  %v298 = vadd.f32 0.0, %v297
  %v299 = vpop.f32.mrb[0].mxu0
  %v300 = vpop.f32.mrb[0].mxu0
  %v301 = vpop.f32.mrb[0].mxu0
  %302 = vdwg.mxu0
  %303 = vst.msk [vmem:[#allocation2] sm:$0xff] %vm187, %v298
  %304 = vrot.lane.b32.xlu0 %v183, 120
  %v305 = vpop.permute.xlu0 %304
  %306 = vrot.lane.b32.xlu0 %v183, 88
  %v307 = vpop.permute.xlu0 %306
  %v309 = vsel %vm187, %v305, 0
  %v312 = vsel %vm187, %v307, 0
  %314 = vmatprep.subr.bf16.mxu0 0
  %315 = vmatpush1.bf16.xpose.msra.mxu0 %v312
  %316 = vmatprep.subr.bf16.mxu0 0
  %317 = vmatpush1.bf16.xpose.msra.mxu0 0
  %318 = vmatprep.subr.bf16.mxu0 0
  %319 = vmatpush1.bf16.xpose.msra.mxu0 0
  %320 = vmatprep.subr.bf16.mxu0 0
  %321 = vmatpush1.bf16.xpose.msra.mxu0 0
  %322 = vmatprep.subr.bf16.mxu0 0
  %323 = vmatpush1.bf16.xpose.msra.mxu0 0
  %324 = vmatprep.subr.bf16.mxu0 0
  %325 = vmatpush1.bf16.xpose.msra.mxu0 0
  %326 = vmatprep.subr.bf16.mxu0 0
  %327 = vmatpush1.bf16.xpose.msra.mxu0 0
  %328 = vmatprep.subr.bf16.mxu0 0
  %329 = vmatpush1.bf16.xpose.msra.mxu0 0
  %330 = vmatprep.subr.bf16.mxu0 0
  %331 = vmatpush1.bf16.xpose.msra.mxu0 0
  %332 = vmatprep.subr.bf16.mxu0 0
  %333 = vmatpush1.bf16.xpose.msra.mxu0 0
  %334 = vmatprep.subr.bf16.mxu0 0
  %335 = vmatpush1.bf16.xpose.msra.mxu0 0
  %336 = vmatprep.subr.bf16.mxu0 0
  %337 = vmatpush1.bf16.xpose.msra.mxu0 0
  %338 = vmatprep.subr.bf16.mxu0 0
  %339 = vmatpush1.bf16.xpose.msra.mxu0 0
  %340 = vmatprep.subr.bf16.mxu0 0
  %341 = vmatpush1.bf16.xpose.msra.mxu0 0
  %342 = vmatprep.subr.bf16.mxu0 0
  %343 = vmatpush1.bf16.xpose.msra.mxu0 0
  %344 = vmatprep.subr.bf16.mxu0 0
  %345 = vmatpush1.bf16.xpose.msra.mxu0 0
  %346 = vmatprep.mubr.bf16.mxu0 0
  %347 = vmatmul.mubr.bf16.gmra.mrb[0].mxu0 %v309
  %v348 = vpop.f32.mrb[0].mxu0
  %v349 = vadd.f32 0.0, %v348
  %v350 = vpop.f32.mrb[0].mxu0
  %v351 = vpop.f32.mrb[0].mxu0
  %v352 = vpop.f32.mrb[0].mxu0
  %353 = vdwg.mxu0
  %v354 = vmul.f32 %v349, 0.35355338
  %v355 = vadd.f32 %v354, %v239
  %v356 = vsel %vm187, %v355, -inf
  %357 = vmax.xlane.f32.xlu0 %v356
  %v358 = vpop.xlane.xlu0 %357
  %v359 = vsub.f32 %v355, %v358
  %v360 = vmul.f32 %v359, 1.442695
  %v361 = vpow.pop %v360
  %v362 = vsel %vm187, %v361, 0.0
  %363 = vadd.xlane.f32.xlu0 %v362
  %v364 = vpop.xlane.xlu0 %363
  %v365 = vrcp.pop %v364
  %v366 = vmul.f32 %v361, %v365
  %v367 = vpack.c.bf16 %v366, %v366
  %368 = vrot.lane.b32.xlu0 %v183, 56
  %v369 = vpop.permute.xlu0 %368
  %v371 = vsel %vm187, %v367, 0
  %v374 = vsel %vm259, %v369, 0
  %376 = vmatprep.subr.bf16.mxu0 0
  %377 = vmatpush1.bf16.msra.mxu0 %v374
  %378 = vmatprep.subr.bf16.mxu0 0
  %379 = vmatpush1.bf16.msra.mxu0 0
  %380 = vmatprep.subr.bf16.mxu0 0
  %381 = vmatpush1.bf16.msra.mxu0 0
  %382 = vmatprep.subr.bf16.mxu0 0
  %383 = vmatpush1.bf16.msra.mxu0 0
  %384 = vmatprep.subr.bf16.mxu0 0
  %385 = vmatpush1.bf16.msra.mxu0 0
  %386 = vmatprep.subr.bf16.mxu0 0
  %387 = vmatpush1.bf16.msra.mxu0 0
  %388 = vmatprep.subr.bf16.mxu0 0
  %389 = vmatpush1.bf16.msra.mxu0 0
  %390 = vmatprep.subr.bf16.mxu0 0
  %391 = vmatpush1.bf16.msra.mxu0 0
  %392 = vmatprep.subr.bf16.mxu0 0
  %393 = vmatpush1.bf16.msra.mxu0 0
  %394 = vmatprep.subr.bf16.mxu0 0
  %395 = vmatpush1.bf16.msra.mxu0 0
  %396 = vmatprep.subr.bf16.mxu0 0
  %397 = vmatpush1.bf16.msra.mxu0 0
  %398 = vmatprep.subr.bf16.mxu0 0
  %399 = vmatpush1.bf16.msra.mxu0 0
  %400 = vmatprep.subr.bf16.mxu0 0
  %401 = vmatpush1.bf16.msra.mxu0 0
  %402 = vmatprep.subr.bf16.mxu0 0
  %403 = vmatpush1.bf16.msra.mxu0 0
  %404 = vmatprep.subr.bf16.mxu0 0
  %405 = vmatpush1.bf16.msra.mxu0 0
  %406 = vmatprep.subr.bf16.mxu0 0
  %407 = vmatpush1.bf16.msra.mxu0 0
  %408 = vmatprep.mubr.bf16.mxu0 0
  %409 = vmatmul.mubr.bf16.gmra.mrb[0].mxu0 %v371
  %v410 = vpop.f32.mrb[0].mxu0
  %v411 = vadd.f32 0.0, %v410
  %v412 = vpop.f32.mrb[0].mxu0
  %v413 = vpop.f32.mrb[0].mxu0
  %v414 = vpop.f32.mrb[0].mxu0
  %415 = vdwg.mxu0
  %417 = vrot.lane.b32.xlu0 %v411, 8
  %v418 = vpop.permute.xlu0 %417
  %vm420 = vcmask 130112
  %421 = vst.msk [vmem:[#allocation2] sm:$0xff] %vm420, %v418
  %422 = vrot.lane.b32.xlu0 %v183, 112
  %v423 = vpop.permute.xlu0 %422
  %424 = vrot.lane.b32.xlu0 %v183, 80
  %v425 = vpop.permute.xlu0 %424
  %v427 = vsel %vm187, %v423, 0
  %v430 = vsel %vm187, %v425, 0
  %432 = vmatprep.subr.bf16.mxu0 0
  %433 = vmatpush1.bf16.xpose.msra.mxu0 %v430
  %434 = vmatprep.subr.bf16.mxu0 0
  %435 = vmatpush1.bf16.xpose.msra.mxu0 0
  %436 = vmatprep.subr.bf16.mxu0 0
  %437 = vmatpush1.bf16.xpose.msra.mxu0 0
  %438 = vmatprep.subr.bf16.mxu0 0
  %439 = vmatpush1.bf16.xpose.msra.mxu0 0
  %440 = vmatprep.subr.bf16.mxu0 0
  %441 = vmatpush1.bf16.xpose.msra.mxu0 0
  %442 = vmatprep.subr.bf16.mxu0 0
  %443 = vmatpush1.bf16.xpose.msra.mxu0 0
  %444 = vmatprep.subr.bf16.mxu0 0
  %445 = vmatpush1.bf16.xpose.msra.mxu0 0
  %446 = vmatprep.subr.bf16.mxu0 0
  %447 = vmatpush1.bf16.xpose.msra.mxu0 0
  %448 = vmatprep.subr.bf16.mxu0 0
  %449 = vmatpush1.bf16.xpose.msra.mxu0 0
  %450 = vmatprep.subr.bf16.mxu0 0
  %451 = vmatpush1.bf16.xpose.msra.mxu0 0
  %452 = vmatprep.subr.bf16.mxu0 0
  %453 = vmatpush1.bf16.xpose.msra.mxu0 0
  %454 = vmatprep.subr.bf16.mxu0 0
  %455 = vmatpush1.bf16.xpose.msra.mxu0 0
  %456 = vmatprep.subr.bf16.mxu0 0
  %457 = vmatpush1.bf16.xpose.msra.mxu0 0
  %458 = vmatprep.subr.bf16.mxu0 0
  %459 = vmatpush1.bf16.xpose.msra.mxu0 0
  %460 = vmatprep.subr.bf16.mxu0 0
  %461 = vmatpush1.bf16.xpose.msra.mxu0 0
  %462 = vmatprep.subr.bf16.mxu0 0
  %463 = vmatpush1.bf16.xpose.msra.mxu0 0
  %464 = vmatprep.mubr.bf16.mxu0 0
  %465 = vmatmul.mubr.bf16.gmra.mrb[0].mxu0 %v427
  %v466 = vpop.f32.mrb[0].mxu0
  %v467 = vadd.f32 0.0, %v466
  %v468 = vpop.f32.mrb[0].mxu0
  %v469 = vpop.f32.mrb[0].mxu0
  %v470 = vpop.f32.mrb[0].mxu0
  %471 = vdwg.mxu0
  %v472 = vmul.f32 %v467, 0.35355338
  %v473 = vadd.f32 %v472, %v239
  %v474 = vsel %vm187, %v473, -inf
  %475 = vmax.xlane.f32.xlu0 %v474
  %v476 = vpop.xlane.xlu0 %475
  %v477 = vsub.f32 %v473, %v476
  %v478 = vmul.f32 %v477, 1.442695
  %v479 = vpow.pop %v478
  %v480 = vsel %vm187, %v479, 0.0
  %481 = vadd.xlane.f32.xlu0 %v480
  %v482 = vpop.xlane.xlu0 %481
  %v483 = vrcp.pop %v482
  %v484 = vmul.f32 %v479, %v483
  %v485 = vpack.c.bf16 %v484, %v484
  %486 = vrot.lane.b32.xlu0 %v183, 48
  %v487 = vpop.permute.xlu0 %486
  %v489 = vsel %vm187, %v485, 0
  %v492 = vsel %vm259, %v487, 0
  %494 = vmatprep.subr.bf16.mxu0 0
  %495 = vmatpush1.bf16.msra.mxu0 %v492
  %496 = vmatprep.subr.bf16.mxu0 0
  %497 = vmatpush1.bf16.msra.mxu0 0
  %498 = vmatprep.subr.bf16.mxu0 0
  %499 = vmatpush1.bf16.msra.mxu0 0
  %500 = vmatprep.subr.bf16.mxu0 0
  %501 = vmatpush1.bf16.msra.mxu0 0
  %502 = vmatprep.subr.bf16.mxu0 0
  %503 = vmatpush1.bf16.msra.mxu0 0
  %504 = vmatprep.subr.bf16.mxu0 0
  %505 = vmatpush1.bf16.msra.mxu0 0
  %506 = vmatprep.subr.bf16.mxu0 0
  %507 = vmatpush1.bf16.msra.mxu0 0
  %508 = vmatprep.subr.bf16.mxu0 0
  %509 = vmatpush1.bf16.msra.mxu0 0
  %510 = vmatprep.subr.bf16.mxu0 0
  %511 = vmatpush1.bf16.msra.mxu0 0
  %512 = vmatprep.subr.bf16.mxu0 0
  %513 = vmatpush1.bf16.msra.mxu0 0
  %514 = vmatprep.subr.bf16.mxu0 0
  %515 = vmatpush1.bf16.msra.mxu0 0
  %516 = vmatprep.subr.bf16.mxu0 0
  %517 = vmatpush1.bf16.msra.mxu0 0
  %518 = vmatprep.subr.bf16.mxu0 0
  %519 = vmatpush1.bf16.msra.mxu0 0
  %520 = vmatprep.subr.bf16.mxu0 0
  %521 = vmatpush1.bf16.msra.mxu0 0
  %522 = vmatprep.subr.bf16.mxu0 0
  %523 = vmatpush1.bf16.msra.mxu0 0
  %524 = vmatprep.subr.bf16.mxu0 0
  %525 = vmatpush1.bf16.msra.mxu0 0
  %526 = vmatprep.mubr.bf16.mxu0 0
  %527 = vmatmul.mubr.bf16.gmra.mrb[0].mxu0 %v489
  %v528 = vpop.f32.mrb[0].mxu0
  %v529 = vadd.f32 0.0, %v528
  %v530 = vpop.f32.mrb[0].mxu0
  %v531 = vpop.f32.mrb[0].mxu0
  %v532 = vpop.f32.mrb[0].mxu0
  %533 = vdwg.mxu0
  %535 = vrot.lane.b32.xlu0 %v529, 16
  %v536 = vpop.permute.xlu0 %535
  %vm538 = vcmask 195712
  %539 = vst.msk [vmem:[#allocation2] sm:$0xff] %vm538, %v536
  %540 = vrot.lane.b32.xlu0 %v183, 104
  %v541 = vpop.permute.xlu0 %540
  %542 = vrot.lane.b32.xlu0 %v183, 72
  %v543 = vpop.permute.xlu0 %542
  %v545 = vsel %vm187, %v541, 0
  %v548 = vsel %vm187, %v543, 0
  %550 = vmatprep.subr.bf16.mxu0 0
  %551 = vmatpush1.bf16.xpose.msra.mxu0 %v548
  %552 = vmatprep.subr.bf16.mxu0 0
  %553 = vmatpush1.bf16.xpose.msra.mxu0 0
  %554 = vmatprep.subr.bf16.mxu0 0
  %555 = vmatpush1.bf16.xpose.msra.mxu0 0
  %556 = vmatprep.subr.bf16.mxu0 0
  %557 = vmatpush1.bf16.xpose.msra.mxu0 0
  %558 = vmatprep.subr.bf16.mxu0 0
  %559 = vmatpush1.bf16.xpose.msra.mxu0 0
  %560 = vmatprep.subr.bf16.mxu0 0
  %561 = vmatpush1.bf16.xpose.msra.mxu0 0
  %562 = vmatprep.subr.bf16.mxu0 0
  %563 = vmatpush1.bf16.xpose.msra.mxu0 0
  %564 = vmatprep.subr.bf16.mxu0 0
  %565 = vmatpush1.bf16.xpose.msra.mxu0 0
  %566 = vmatprep.subr.bf16.mxu0 0
  %567 = vmatpush1.bf16.xpose.msra.mxu0 0
  %568 = vmatprep.subr.bf16.mxu0 0
  %569 = vmatpush1.bf16.xpose.msra.mxu0 0
  %570 = vmatprep.subr.bf16.mxu0 0
  %571 = vmatpush1.bf16.xpose.msra.mxu0 0
  %572 = vmatprep.subr.bf16.mxu0 0
  %573 = vmatpush1.bf16.xpose.msra.mxu0 0
  %574 = vmatprep.subr.bf16.mxu0 0
  %575 = vmatpush1.bf16.xpose.msra.mxu0 0
  %576 = vmatprep.subr.bf16.mxu0 0
  %577 = vmatpush1.bf16.xpose.msra.mxu0 0
  %578 = vmatprep.subr.bf16.mxu0 0
  %579 = vmatpush1.bf16.xpose.msra.mxu0 0
  %580 = vmatprep.subr.bf16.mxu0 0
  %581 = vmatpush1.bf16.xpose.msra.mxu0 0
  %582 = vmatprep.mubr.bf16.mxu0 0
  %583 = vmatmul.mubr.bf16.gmra.mrb[0].mxu0 %v545
  %v584 = vpop.f32.mrb[0].mxu0
  %v585 = vadd.f32 0.0, %v584
  %v586 = vpop.f32.mrb[0].mxu0
  %v587 = vpop.f32.mrb[0].mxu0
  %v588 = vpop.f32.mrb[0].mxu0
  %589 = vdwg.mxu0
  %v590 = vmul.f32 %v585, 0.35355338
  %v591 = vadd.f32 %v590, %v239
  %v592 = vsel %vm187, %v591, -inf
  %593 = vmax.xlane.f32.xlu0 %v592
  %v594 = vpop.xlane.xlu0 %593
  %v595 = vsub.f32 %v591, %v594
  %v596 = vmul.f32 %v595, 1.442695
  %v597 = vpow.pop %v596
  %v598 = vsel %vm187, %v597, 0.0
  %599 = vadd.xlane.f32.xlu0 %v598
  %v600 = vpop.xlane.xlu0 %599
  %v601 = vrcp.pop %v600
  %v602 = vmul.f32 %v597, %v601
  %v603 = vpack.c.bf16 %v602, %v602
  %604 = vrot.lane.b32.xlu0 %v183, 40
  %v605 = vpop.permute.xlu0 %604
  %v607 = vsel %vm187, %v603, 0
  %v610 = vsel %vm259, %v605, 0
  %612 = vmatprep.subr.bf16.mxu0 0
  %613 = vmatpush1.bf16.msra.mxu0 %v610
  %614 = vmatprep.subr.bf16.mxu0 0
  %615 = vmatpush1.bf16.msra.mxu0 0
  %616 = vmatprep.subr.bf16.mxu0 0
  %617 = vmatpush1.bf16.msra.mxu0 0
  %618 = vmatprep.subr.bf16.mxu0 0
  %619 = vmatpush1.bf16.msra.mxu0 0
  %620 = vmatprep.subr.bf16.mxu0 0
  %621 = vmatpush1.bf16.msra.mxu0 0
  %622 = vmatprep.subr.bf16.mxu0 0
  %623 = vmatpush1.bf16.msra.mxu0 0
  %624 = vmatprep.subr.bf16.mxu0 0
  %625 = vmatpush1.bf16.msra.mxu0 0
  %626 = vmatprep.subr.bf16.mxu0 0
  %627 = vmatpush1.bf16.msra.mxu0 0
  %628 = vmatprep.subr.bf16.mxu0 0
  %629 = vmatpush1.bf16.msra.mxu0 0
  %630 = vmatprep.subr.bf16.mxu0 0
  %631 = vmatpush1.bf16.msra.mxu0 0
  %632 = vmatprep.subr.bf16.mxu0 0
  %633 = vmatpush1.bf16.msra.mxu0 0
  %634 = vmatprep.subr.bf16.mxu0 0
  %635 = vmatpush1.bf16.msra.mxu0 0
  %636 = vmatprep.subr.bf16.mxu0 0
  %637 = vmatpush1.bf16.msra.mxu0 0
  %638 = vmatprep.subr.bf16.mxu0 0
  %639 = vmatpush1.bf16.msra.mxu0 0
  %640 = vmatprep.subr.bf16.mxu0 0
  %641 = vmatpush1.bf16.msra.mxu0 0
  %642 = vmatprep.subr.bf16.mxu0 0
  %643 = vmatpush1.bf16.msra.mxu0 0
  %644 = vmatprep.mubr.bf16.mxu0 0
  %645 = vmatmul.mubr.bf16.gmra.mrb[0].mxu0 %v607
  %v646 = vpop.f32.mrb[0].mxu0
  %v647 = vadd.f32 0.0, %v646
  %v648 = vpop.f32.mrb[0].mxu0
  %v649 = vpop.f32.mrb[0].mxu0
  %v650 = vpop.f32.mrb[0].mxu0
  %651 = vdwg.mxu0
  %653 = vrot.lane.b32.xlu0 %v647, 24
  %v654 = vpop.permute.xlu0 %653
  %vm656 = vcmask 261312
  %657 = vst.msk [vmem:[#allocation2] sm:$0xff] %vm656, %v654
  %s658 = scalar_lea.vmem %s1, 1
  %v659 = vld [vmem:[%s658] sm:$0x1]
  %v660 = vpack.c.bf16 %v179, %v179
  %662 = vrot.lane.b32.xlu0 %v660, 96
  %v663 = vpop.permute.xlu0 %662
  %v665 = vsel %vm187, %v660, 0
  %v668 = vsel %vm187, %v663, 0
  %670 = vmatprep.subr.bf16.mxu0 0
  %671 = vmatpush1.bf16.xpose.msra.mxu0 %v668
  %672 = vmatprep.subr.bf16.mxu0 0
  %673 = vmatpush1.bf16.xpose.msra.mxu0 0
  %674 = vmatprep.subr.bf16.mxu0 0
  %675 = vmatpush1.bf16.xpose.msra.mxu0 0
  %676 = vmatprep.subr.bf16.mxu0 0
  %677 = vmatpush1.bf16.xpose.msra.mxu0 0
  %678 = vmatprep.subr.bf16.mxu0 0
  %679 = vmatpush1.bf16.xpose.msra.mxu0 0
  %680 = vmatprep.subr.bf16.mxu0 0
  %681 = vmatpush1.bf16.xpose.msra.mxu0 0
  %682 = vmatprep.subr.bf16.mxu0 0
  %683 = vmatpush1.bf16.xpose.msra.mxu0 0
  %684 = vmatprep.subr.bf16.mxu0 0
  %685 = vmatpush1.bf16.xpose.msra.mxu0 0
  %686 = vmatprep.subr.bf16.mxu0 0
  %687 = vmatpush1.bf16.xpose.msra.mxu0 0
  %688 = vmatprep.subr.bf16.mxu0 0
  %689 = vmatpush1.bf16.xpose.msra.mxu0 0
  %690 = vmatprep.subr.bf16.mxu0 0
  %691 = vmatpush1.bf16.xpose.msra.mxu0 0
  %692 = vmatprep.subr.bf16.mxu0 0
  %693 = vmatpush1.bf16.xpose.msra.mxu0 0
  %694 = vmatprep.subr.bf16.mxu0 0
  %695 = vmatpush1.bf16.xpose.msra.mxu0 0
  %696 = vmatprep.subr.bf16.mxu0 0
  %697 = vmatpush1.bf16.xpose.msra.mxu0 0
  %698 = vmatprep.subr.bf16.mxu0 0
  %699 = vmatpush1.bf16.xpose.msra.mxu0 0
  %700 = vmatprep.subr.bf16.mxu0 0
  %701 = vmatpush1.bf16.xpose.msra.mxu0 0
  %702 = vmatprep.mubr.bf16.mxu0 0
  %703 = vmatmul.mubr.bf16.gmra.mrb[0].mxu0 %v665
  %v704 = vpop.f32.mrb[0].mxu0
  %v705 = vadd.f32 0.0, %v704
  %v706 = vpop.f32.mrb[0].mxu0
  %v707 = vpop.f32.mrb[0].mxu0
  %v708 = vpop.f32.mrb[0].mxu0
  %709 = vdwg.mxu0
  %v710 = vmul.f32 %v705, 0.35355338
  %v712 = vlaneseq
  %v713 = vshrl.u32 %v712, 7
  %v714 = vsub.s32 0, %v713
  %v715 = vrot.slane %v659, %v714
  %v717 = vadd.f32 %v710, %v715
  %v718 = vsel %vm187, %v717, -inf
  %719 = vmax.xlane.f32.xlu0 %v718
  %v720 = vpop.xlane.xlu0 %719
  %v721 = vsub.f32 %v717, %v720
  %v722 = vmul.f32 %v721, 1.442695
  %v723 = vpow.pop %v722
  %v724 = vsel %vm187, %v723, 0.0
  %725 = vadd.xlane.f32.xlu0 %v724
  %v726 = vpop.xlane.xlu0 %725
  %v727 = vrcp.pop %v726
  %v728 = vmul.f32 %v723, %v727
  %v729 = vpack.c.bf16 %v728, %v728
  %730 = vrot.lane.b32.xlu0 %v660, 64
  %v731 = vpop.permute.xlu0 %730
  %v733 = vsel %vm187, %v729, 0
  %v736 = vsel %vm259, %v731, 0
  %738 = vmatprep.subr.bf16.mxu0 0
  %739 = vmatpush1.bf16.msra.mxu0 %v736
  %740 = vmatprep.subr.bf16.mxu0 0
  %741 = vmatpush1.bf16.msra.mxu0 0
  %742 = vmatprep.subr.bf16.mxu0 0
  %743 = vmatpush1.bf16.msra.mxu0 0
  %744 = vmatprep.subr.bf16.mxu0 0
  %745 = vmatpush1.bf16.msra.mxu0 0
  %746 = vmatprep.subr.bf16.mxu0 0
  %747 = vmatpush1.bf16.msra.mxu0 0
  %748 = vmatprep.subr.bf16.mxu0 0
  %749 = vmatpush1.bf16.msra.mxu0 0
  %750 = vmatprep.subr.bf16.mxu0 0
  %751 = vmatpush1.bf16.msra.mxu0 0
  %752 = vmatprep.subr.bf16.mxu0 0
  %753 = vmatpush1.bf16.msra.mxu0 0
  %754 = vmatprep.subr.bf16.mxu0 0
  %755 = vmatpush1.bf16.msra.mxu0 0
  %756 = vmatprep.subr.bf16.mxu0 0
  %757 = vmatpush1.bf16.msra.mxu0 0
  %758 = vmatprep.subr.bf16.mxu0 0
  %759 = vmatpush1.bf16.msra.mxu0 0
  %760 = vmatprep.subr.bf16.mxu0 0
  %761 = vmatpush1.bf16.msra.mxu0 0
  %762 = vmatprep.subr.bf16.mxu0 0
  %763 = vmatpush1.bf16.msra.mxu0 0
  %764 = vmatprep.subr.bf16.mxu0 0
  %765 = vmatpush1.bf16.msra.mxu0 0
  %766 = vmatprep.subr.bf16.mxu0 0
  %767 = vmatpush1.bf16.msra.mxu0 0
  %768 = vmatprep.subr.bf16.mxu0 0
  %769 = vmatpush1.bf16.msra.mxu0 0
  %770 = vmatprep.mubr.bf16.mxu0 0
  %771 = vmatmul.mubr.bf16.gmra.mrb[0].mxu0 %v733
  %v772 = vpop.f32.mrb[0].mxu0
  %v773 = vadd.f32 0.0, %v772
  %v774 = vpop.f32.mrb[0].mxu0
  %v775 = vpop.f32.mrb[0].mxu0
  %v776 = vpop.f32.mrb[0].mxu0
  %777 = vdwg.mxu0
  %778 = vst.msk [vmem:[#allocation2 + $0x8] sm:$0xff] %vm187, %v773
  %779 = vrot.lane.b32.xlu0 %v660, 120
  %v780 = vpop.permute.xlu0 %779
  %781 = vrot.lane.b32.xlu0 %v660, 88
  %v782 = vpop.permute.xlu0 %781
  %v784 = vsel %vm187, %v780, 0
  %v787 = vsel %vm187, %v782, 0
  %789 = vmatprep.subr.bf16.mxu0 0
  %790 = vmatpush1.bf16.xpose.msra.mxu0 %v787
  %791 = vmatprep.subr.bf16.mxu0 0
  %792 = vmatpush1.bf16.xpose.msra.mxu0 0
  %793 = vmatprep.subr.bf16.mxu0 0
  %794 = vmatpush1.bf16.xpose.msra.mxu0 0
  %795 = vmatprep.subr.bf16.mxu0 0
  %796 = vmatpush1.bf16.xpose.msra.mxu0 0
  %797 = vmatprep.subr.bf16.mxu0 0
  %798 = vmatpush1.bf16.xpose.msra.mxu0 0
  %799 = vmatprep.subr.bf16.mxu0 0
  %800 = vmatpush1.bf16.xpose.msra.mxu0 0
  %801 = vmatprep.subr.bf16.mxu0 0
  %802 = vmatpush1.bf16.xpose.msra.mxu0 0
  %803 = vmatprep.subr.bf16.mxu0 0
  %804 = vmatpush1.bf16.xpose.msra.mxu0 0
  %805 = vmatprep.subr.bf16.mxu0 0
  %806 = vmatpush1.bf16.xpose.msra.mxu0 0
  %807 = vmatprep.subr.bf16.mxu0 0
  %808 = vmatpush1.bf16.xpose.msra.mxu0 0
  %809 = vmatprep.subr.bf16.mxu0 0
  %810 = vmatpush1.bf16.xpose.msra.mxu0 0
  %811 = vmatprep.subr.bf16.mxu0 0
  %812 = vmatpush1.bf16.xpose.msra.mxu0 0
  %813 = vmatprep.subr.bf16.mxu0 0
  %814 = vmatpush1.bf16.xpose.msra.mxu0 0
  %815 = vmatprep.subr.bf16.mxu0 0
  %816 = vmatpush1.bf16.xpose.msra.mxu0 0
  %817 = vmatprep.subr.bf16.mxu0 0
  %818 = vmatpush1.bf16.xpose.msra.mxu0 0
  %819 = vmatprep.subr.bf16.mxu0 0
  %820 = vmatpush1.bf16.xpose.msra.mxu0 0
  %821 = vmatprep.mubr.bf16.mxu0 0
  %822 = vmatmul.mubr.bf16.gmra.mrb[0].mxu0 %v784
  %v823 = vpop.f32.mrb[0].mxu0
  %v824 = vadd.f32 0.0, %v823
  %v825 = vpop.f32.mrb[0].mxu0
  %v826 = vpop.f32.mrb[0].mxu0
  %v827 = vpop.f32.mrb[0].mxu0
  %828 = vdwg.mxu0
  %v829 = vmul.f32 %v824, 0.35355338
  %v830 = vadd.f32 %v829, %v715
  %v831 = vsel %vm187, %v830, -inf
  %832 = vmax.xlane.f32.xlu0 %v831
  %v833 = vpop.xlane.xlu0 %832
  %v834 = vsub.f32 %v830, %v833
  %v835 = vmul.f32 %v834, 1.442695
  %v836 = vpow.pop %v835
  %v837 = vsel %vm187, %v836, 0.0
  %838 = vadd.xlane.f32.xlu0 %v837
  %v839 = vpop.xlane.xlu0 %838
  %v840 = vrcp.pop %v839
  %v841 = vmul.f32 %v836, %v840
  %v842 = vpack.c.bf16 %v841, %v841
  %843 = vrot.lane.b32.xlu0 %v660, 56
  %v844 = vpop.permute.xlu0 %843
  %v846 = vsel %vm187, %v842, 0
  %v849 = vsel %vm259, %v844, 0
  %851 = vmatprep.subr.bf16.mxu0 0
  %852 = vmatpush1.bf16.msra.mxu0 %v849
  %853 = vmatprep.subr.bf16.mxu0 0
  %854 = vmatpush1.bf16.msra.mxu0 0
  %855 = vmatprep.subr.bf16.mxu0 0
  %856 = vmatpush1.bf16.msra.mxu0 0
  %857 = vmatprep.subr.bf16.mxu0 0
  %858 = vmatpush1.bf16.msra.mxu0 0
  %859 = vmatprep.subr.bf16.mxu0 0
  %860 = vmatpush1.bf16.msra.mxu0 0
  %861 = vmatprep.subr.bf16.mxu0 0
  %862 = vmatpush1.bf16.msra.mxu0 0
  %863 = vmatprep.subr.bf16.mxu0 0
  %864 = vmatpush1.bf16.msra.mxu0 0
  %865 = vmatprep.subr.bf16.mxu0 0
  %866 = vmatpush1.bf16.msra.mxu0 0
  %867 = vmatprep.subr.bf16.mxu0 0
  %868 = vmatpush1.bf16.msra.mxu0 0
  %869 = vmatprep.subr.bf16.mxu0 0
  %870 = vmatpush1.bf16.msra.mxu0 0
  %871 = vmatprep.subr.bf16.mxu0 0
  %872 = vmatpush1.bf16.msra.mxu0 0
  %873 = vmatprep.subr.bf16.mxu0 0
  %874 = vmatpush1.bf16.msra.mxu0 0
  %875 = vmatprep.subr.bf16.mxu0 0
  %876 = vmatpush1.bf16.msra.mxu0 0
  %877 = vmatprep.subr.bf16.mxu0 0
  %878 = vmatpush1.bf16.msra.mxu0 0
  %879 = vmatprep.subr.bf16.mxu0 0
  %880 = vmatpush1.bf16.msra.mxu0 0
  %881 = vmatprep.subr.bf16.mxu0 0
  %882 = vmatpush1.bf16.msra.mxu0 0
  %883 = vmatprep.mubr.bf16.mxu0 0
  %884 = vmatmul.mubr.bf16.gmra.mrb[0].mxu0 %v846
  %v885 = vpop.f32.mrb[0].mxu0
  %v886 = vadd.f32 0.0, %v885
  %v887 = vpop.f32.mrb[0].mxu0
  %v888 = vpop.f32.mrb[0].mxu0
  %v889 = vpop.f32.mrb[0].mxu0
  %890 = vdwg.mxu0
  %892 = vrot.lane.b32.xlu0 %v886, 8
  %v893 = vpop.permute.xlu0 %892
  %895 = vst.msk [vmem:[#allocation2 + $0x8] sm:$0xff] %vm420, %v893
  %896 = vrot.lane.b32.xlu0 %v660, 112
  %v897 = vpop.permute.xlu0 %896
  %898 = vrot.lane.b32.xlu0 %v660, 80
  %v899 = vpop.permute.xlu0 %898
  %v901 = vsel %vm187, %v897, 0
  %v904 = vsel %vm187, %v899, 0
  %906 = vmatprep.subr.bf16.mxu0 0
  %907 = vmatpush1.bf16.xpose.msra.mxu0 %v904
  %908 = vmatprep.subr.bf16.mxu0 0
  %909 = vmatpush1.bf16.xpose.msra.mxu0 0
  %910 = vmatprep.subr.bf16.mxu0 0
  %911 = vmatpush1.bf16.xpose.msra.mxu0 0
  %912 = vmatprep.subr.bf16.mxu0 0
  %913 = vmatpush1.bf16.xpose.msra.mxu0 0
  %914 = vmatprep.subr.bf16.mxu0 0
  %915 = vmatpush1.bf16.xpose.msra.mxu0 0
  %916 = vmatprep.subr.bf16.mxu0 0
  %917 = vmatpush1.bf16.xpose.msra.mxu0 0
  %918 = vmatprep.subr.bf16.mxu0 0
  %919 = vmatpush1.bf16.xpose.msra.mxu0 0
  %920 = vmatprep.subr.bf16.mxu0 0
  %921 = vmatpush1.bf16.xpose.msra.mxu0 0
  %922 = vmatprep.subr.bf16.mxu0 0
  %923 = vmatpush1.bf16.xpose.msra.mxu0 0
  %924 = vmatprep.subr.bf16.mxu0 0
  %925 = vmatpush1.bf16.xpose.msra.mxu0 0
  %926 = vmatprep.subr.bf16.mxu0 0
  %927 = vmatpush1.bf16.xpose.msra.mxu0 0
  %928 = vmatprep.subr.bf16.mxu0 0
  %929 = vmatpush1.bf16.xpose.msra.mxu0 0
  %930 = vmatprep.subr.bf16.mxu0 0
  %931 = vmatpush1.bf16.xpose.msra.mxu0 0
  %932 = vmatprep.subr.bf16.mxu0 0
  %933 = vmatpush1.bf16.xpose.msra.mxu0 0
  %934 = vmatprep.subr.bf16.mxu0 0
  %935 = vmatpush1.bf16.xpose.msra.mxu0 0
  %936 = vmatprep.subr.bf16.mxu0 0
  %937 = vmatpush1.bf16.xpose.msra.mxu0 0
  %938 = vmatprep.mubr.bf16.mxu0 0
  %939 = vmatmul.mubr.bf16.gmra.mrb[0].mxu0 %v901
  %v940 = vpop.f32.mrb[0].mxu0
  %v941 = vadd.f32 0.0, %v940
  %v942 = vpop.f32.mrb[0].mxu0
  %v943 = vpop.f32.mrb[0].mxu0
  %v944 = vpop.f32.mrb[0].mxu0
  %945 = vdwg.mxu0
  %v946 = vmul.f32 %v941, 0.35355338
  %v947 = vadd.f32 %v946, %v715
  %v948 = vsel %vm187, %v947, -inf
  %949 = vmax.xlane.f32.xlu0 %v948
  %v950 = vpop.xlane.xlu0 %949
  %v951 = vsub.f32 %v947, %v950
  %v952 = vmul.f32 %v951, 1.442695
  %v953 = vpow.pop %v952
  %v954 = vsel %vm187, %v953, 0.0
  %955 = vadd.xlane.f32.xlu0 %v954
  %v956 = vpop.xlane.xlu0 %955
  %v957 = vrcp.pop %v956
  %v958 = vmul.f32 %v953, %v957
  %v959 = vpack.c.bf16 %v958, %v958
  %960 = vrot.lane.b32.xlu0 %v660, 48
  %v961 = vpop.permute.xlu0 %960
  %v963 = vsel %vm187, %v959, 0
  %v966 = vsel %vm259, %v961, 0
  %968 = vmatprep.subr.bf16.mxu0 0
  %969 = vmatpush1.bf16.msra.mxu0 %v966
  %970 = vmatprep.subr.bf16.mxu0 0
  %971 = vmatpush1.bf16.msra.mxu0 0
  %972 = vmatprep.subr.bf16.mxu0 0
  %973 = vmatpush1.bf16.msra.mxu0 0
  %974 = vmatprep.subr.bf16.mxu0 0
  %975 = vmatpush1.bf16.msra.mxu0 0
  %976 = vmatprep.subr.bf16.mxu0 0
  %977 = vmatpush1.bf16.msra.mxu0 0
  %978 = vmatprep.subr.bf16.mxu0 0
  %979 = vmatpush1.bf16.msra.mxu0 0
  %980 = vmatprep.subr.bf16.mxu0 0
  %981 = vmatpush1.bf16.msra.mxu0 0
  %982 = vmatprep.subr.bf16.mxu0 0
  %983 = vmatpush1.bf16.msra.mxu0 0
  %984 = vmatprep.subr.bf16.mxu0 0
  %985 = vmatpush1.bf16.msra.mxu0 0
  %986 = vmatprep.subr.bf16.mxu0 0
  %987 = vmatpush1.bf16.msra.mxu0 0
  %988 = vmatprep.subr.bf16.mxu0 0
  %989 = vmatpush1.bf16.msra.mxu0 0
  %990 = vmatprep.subr.bf16.mxu0 0
  %991 = vmatpush1.bf16.msra.mxu0 0
  %992 = vmatprep.subr.bf16.mxu0 0
  %993 = vmatpush1.bf16.msra.mxu0 0
  %994 = vmatprep.subr.bf16.mxu0 0
  %995 = vmatpush1.bf16.msra.mxu0 0
  %996 = vmatprep.subr.bf16.mxu0 0
  %997 = vmatpush1.bf16.msra.mxu0 0
  %998 = vmatprep.subr.bf16.mxu0 0
  %999 = vmatpush1.bf16.msra.mxu0 0
  %1000 = vmatprep.mubr.bf16.mxu0 0
  %1001 = vmatmul.mubr.bf16.gmra.mrb[0].mxu0 %v963
  %v1002 = vpop.f32.mrb[0].mxu0
  %v1003 = vadd.f32 0.0, %v1002
  %v1004 = vpop.f32.mrb[0].mxu0
  %v1005 = vpop.f32.mrb[0].mxu0
  %v1006 = vpop.f32.mrb[0].mxu0
  %1007 = vdwg.mxu0
  %1009 = vrot.lane.b32.xlu0 %v1003, 16
  %v1010 = vpop.permute.xlu0 %1009
  %1012 = vst.msk [vmem:[#allocation2 + $0x8] sm:$0xff] %vm538, %v1010
  %1013 = vrot.lane.b32.xlu0 %v660, 104
  %v1014 = vpop.permute.xlu0 %1013
  %1015 = vrot.lane.b32.xlu0 %v660, 72
  %v1016 = vpop.permute.xlu0 %1015
  %v1018 = vsel %vm187, %v1014, 0
  %v1021 = vsel %vm187, %v1016, 0
  %1023 = vmatprep.subr.bf16.mxu0 0
  %1024 = vmatpush1.bf16.xpose.msra.mxu0 %v1021
  %1025 = vmatprep.subr.bf16.mxu0 0
  %1026 = vmatpush1.bf16.xpose.msra.mxu0 0
  %1027 = vmatprep.subr.bf16.mxu0 0
  %1028 = vmatpush1.bf16.xpose.msra.mxu0 0
  %1029 = vmatprep.subr.bf16.mxu0 0
  %1030 = vmatpush1.bf16.xpose.msra.mxu0 0
  %1031 = vmatprep.subr.bf16.mxu0 0
  %1032 = vmatpush1.bf16.xpose.msra.mxu0 0
  %1033 = vmatprep.subr.bf16.mxu0 0
  %1034 = vmatpush1.bf16.xpose.msra.mxu0 0
  %1035 = vmatprep.subr.bf16.mxu0 0
  %1036 = vmatpush1.bf16.xpose.msra.mxu0 0
  %1037 = vmatprep.subr.bf16.mxu0 0
  %1038 = vmatpush1.bf16.xpose.msra.mxu0 0
  %1039 = vmatprep.subr.bf16.mxu0 0
  %1040 = vmatpush1.bf16.xpose.msra.mxu0 0
  %1041 = vmatprep.subr.bf16.mxu0 0
  %1042 = vmatpush1.bf16.xpose.msra.mxu0 0
  %1043 = vmatprep.subr.bf16.mxu0 0
  %1044 = vmatpush1.bf16.xpose.msra.mxu0 0
  %1045 = vmatprep.subr.bf16.mxu0 0
  %1046 = vmatpush1.bf16.xpose.msra.mxu0 0
  %1047 = vmatprep.subr.bf16.mxu0 0
  %1048 = vmatpush1.bf16.xpose.msra.mxu0 0
  %1049 = vmatprep.subr.bf16.mxu0 0
  %1050 = vmatpush1.bf16.xpose.msra.mxu0 0
  %1051 = vmatprep.subr.bf16.mxu0 0
  %1052 = vmatpush1.bf16.xpose.msra.mxu0 0
  %1053 = vmatprep.subr.bf16.mxu0 0
  %1054 = vmatpush1.bf16.xpose.msra.mxu0 0
  %1055 = vmatprep.mubr.bf16.mxu0 0
  %1056 = vmatmul.mubr.bf16.gmra.mrb[0].mxu0 %v1018
  %v1057 = vpop.f32.mrb[0].mxu0
  %v1058 = vadd.f32 0.0, %v1057
  %v1059 = vpop.f32.mrb[0].mxu0
  %v1060 = vpop.f32.mrb[0].mxu0
  %v1061 = vpop.f32.mrb[0].mxu0
  %1062 = vdwg.mxu0
  %v1063 = vmul.f32 %v1058, 0.35355338
  %v1064 = vadd.f32 %v1063, %v715
  %v1065 = vsel %vm187, %v1064, -inf
  %1066 = vmax.xlane.f32.xlu0 %v1065
  %v1067 = vpop.xlane.xlu0 %1066
  %v1068 = vsub.f32 %v1064, %v1067
  %v1069 = vmul.f32 %v1068, 1.442695
  %v1070 = vpow.pop %v1069
  %v1071 = vsel %vm187, %v1070, 0.0
  %1072 = vadd.xlane.f32.xlu0 %v1071
  %v1073 = vpop.xlane.xlu0 %1072
  %v1074 = vrcp.pop %v1073
  %v1075 = vmul.f32 %v1070, %v1074
  %v1076 = vpack.c.bf16 %v1075, %v1075
  %1077 = vrot.lane.b32.xlu0 %v660, 40
  %v1078 = vpop.permute.xlu0 %1077
  %v1080 = vsel %vm187, %v1076, 0
  %v1083 = vsel %vm259, %v1078, 0
  %1085 = vmatprep.subr.bf16.mxu0 0
  %1086 = vmatpush1.bf16.msra.mxu0 %v1083
  %1087 = vmatprep.subr.bf16.mxu0 0
  %1088 = vmatpush1.bf16.msra.mxu0 0
  %1089 = vmatprep.subr.bf16.mxu0 0
  %1090 = vmatpush1.bf16.msra.mxu0 0
  %1091 = vmatprep.subr.bf16.mxu0 0
  %1092 = vmatpush1.bf16.msra.mxu0 0
  %1093 = vmatprep.subr.bf16.mxu0 0
  %1094 = vmatpush1.bf16.msra.mxu0 0
  %1095 = vmatprep.subr.bf16.mxu0 0
  %1096 = vmatpush1.bf16.msra.mxu0 0
  %1097 = vmatprep.subr.bf16.mxu0 0
  %1098 = vmatpush1.bf16.msra.mxu0 0
  %1099 = vmatprep.subr.bf16.mxu0 0
  %1100 = vmatpush1.bf16.msra.mxu0 0
  %1101 = vmatprep.subr.bf16.mxu0 0
  %1102 = vmatpush1.bf16.msra.mxu0 0
  %1103 = vmatprep.subr.bf16.mxu0 0
  %1104 = vmatpush1.bf16.msra.mxu0 0
  %1105 = vmatprep.subr.bf16.mxu0 0
  %1106 = vmatpush1.bf16.msra.mxu0 0
  %1107 = vmatprep.subr.bf16.mxu0 0
  %1108 = vmatpush1.bf16.msra.mxu0 0
  %1109 = vmatprep.subr.bf16.mxu0 0
  %1110 = vmatpush1.bf16.msra.mxu0 0
  %1111 = vmatprep.subr.bf16.mxu0 0
  %1112 = vmatpush1.bf16.msra.mxu0 0
  %1113 = vmatprep.subr.bf16.mxu0 0
  %1114 = vmatpush1.bf16.msra.mxu0 0
  %1115 = vmatprep.subr.bf16.mxu0 0
  %1116 = vmatpush1.bf16.msra.mxu0 0
  %1117 = vmatprep.mubr.bf16.mxu0 0
  %1118 = vmatmul.mubr.bf16.gmra.mrb[0].mxu0 %v1080
  %v1119 = vpop.f32.mrb[0].mxu0
  %v1120 = vadd.f32 0.0, %v1119
  %v1121 = vpop.f32.mrb[0].mxu0
  %v1122 = vpop.f32.mrb[0].mxu0
  %v1123 = vpop.f32.mrb[0].mxu0
  %1124 = vdwg.mxu0
  %1126 = vrot.lane.b32.xlu0 %v1120, 24
  %v1127 = vpop.permute.xlu0 %1126
  %1129 = vst.msk [vmem:[#allocation2 + $0x8] sm:$0xff] %vm656, %v1127
  %v1130 = vld [vmem:[#allocation2] sm:$0xff]
  %v1131 = vld [vmem:[#allocation2 + $0x8] sm:$0xff]
  %v1132 = vld [vmem:[%s6] sm:$0xf]
  %v1133 = vld [vmem:[%s6 + $0x4] sm:$0xf]
  %v1134 = vld [vmem:[%s6 + $0x8] sm:$0xf]
  %v1135 = vld [vmem:[%s6 + $0xc] sm:$0xf]
  %v1136 = vpack.c.bf16 %v1131, %v1130
  %v1137 = vld [vmem:[%s7] sm:$0x1]
  %v1139 = vlaneseq
  %v1140 = vshrl.u32 %v1139, 7
  %v1141 = vsub.s32 0, %v1140
  %v1142 = vrot.slane %v1137, %v1141
  %v1148 = vunpack.c.l.b16 %v1132
  %v1149 = vunpack.c.l.b16 %v1133
  %v1150 = vunpack.c.l.b16 %v1134
  %v1151 = vunpack.c.l.b16 %v1135
  %v1152 = vpack.c.b16 %v1149, %v1148
  %v1153 = vpack.c.b16 %v1151, %v1150
  %v1157 = vsel %vm70, %v1136, 0
  %1159 = vmatprep.subr.bf16.mxu0 0
  %1160 = vmatpush1.bf16.msra.mxu0 %v1152
  %1161 = vmatprep.subr.bf16.mxu0 0
  %1162 = vmatpush1.bf16.msra.mxu0 %v1153
  %1163 = vmatprep.subr.bf16.mxu0 0
  %1164 = vmatpush1.bf16.msra.mxu0 0
  %1165 = vmatprep.subr.bf16.mxu0 0
  %1166 = vmatpush1.bf16.msra.mxu0 0
  %1167 = vmatprep.subr.bf16.mxu0 0
  %1168 = vmatpush1.bf16.msra.mxu0 0
  %1169 = vmatprep.subr.bf16.mxu0 0
  %1170 = vmatpush1.bf16.msra.mxu0 0
  %1171 = vmatprep.subr.bf16.mxu0 0
  %1172 = vmatpush1.bf16.msra.mxu0 0
  %1173 = vmatprep.subr.bf16.mxu0 0
  %1174 = vmatpush1.bf16.msra.mxu0 0
  %1175 = vmatprep.subr.bf16.mxu0 0
  %1176 = vmatpush1.bf16.msra.mxu0 0
  %1177 = vmatprep.subr.bf16.mxu0 0
  %1178 = vmatpush1.bf16.msra.mxu0 0
  %1179 = vmatprep.subr.bf16.mxu0 0
  %1180 = vmatpush1.bf16.msra.mxu0 0
  %1181 = vmatprep.subr.bf16.mxu0 0
  %1182 = vmatpush1.bf16.msra.mxu0 0
  %1183 = vmatprep.subr.bf16.mxu0 0
  %1184 = vmatpush1.bf16.msra.mxu0 0
  %1185 = vmatprep.subr.bf16.mxu0 0
  %1186 = vmatpush1.bf16.msra.mxu0 0
  %1187 = vmatprep.subr.bf16.mxu0 0
  %1188 = vmatpush1.bf16.msra.mxu0 0
  %1189 = vmatprep.subr.bf16.mxu0 0
  %1190 = vmatpush1.bf16.msra.mxu0 0
  %1191 = vmatprep.mubr.bf16.mxu0 0
  %1192 = vmatmul.mubr.bf16.gmra.mrb[0].mxu0 %v1157
  %v1193 = vpop.f32.mrb[0].mxu0
  %v1194 = vadd.f32 %v1142, %v1193
  %v1195 = vpop.f32.mrb[0].mxu0
  %v1196 = vpop.f32.mrb[0].mxu0
  %v1197 = vadd.f32 %v1142, %v1196
  %v1198 = vpop.f32.mrb[0].mxu0
  %1199 = vdwg.mxu0
  %v1200 = vadd.f32 %v1194, %v112
  %v1201 = vadd.f32 %v1197, %v113
  %v1202 = vld [vmem:[%s8] sm:$0x1]
  %v1203 = vld [vmem:[%s9] sm:$0x1]
  %v1204 = vsel %vm70, %v1200, 0.0
  %1205 = vadd.xlane.f32.xlu0 %v1204
  %v1206 = vpop.xlane.xlu0 %1205
  %v1207 = vsel %vm70, %v1201, 0.0
  %1208 = vadd.xlane.f32.xlu0 %v1207
  %v1209 = vpop.xlane.xlu0 %1208
  %v1210 = vmul.f32 %v1206, %v77
  %v1211 = vmul.f32 %v1209, %v77
  %v1212 = vsub.f32 %v1200, %v1210
  %v1213 = vsub.f32 %v1201, %v1211
  %v1214 = vmul.f32 %v1212, %v1212
  %v1215 = vmul.f32 %v1213, %v1213
  %v1216 = vsel %vm70, %v1214, 0.0
  %1217 = vadd.xlane.f32.xlu0 %v1216
  %v1218 = vpop.xlane.xlu0 %1217
  %v1219 = vsel %vm70, %v1215, 0.0
  %1220 = vadd.xlane.f32.xlu0 %v1219
  %v1221 = vpop.xlane.xlu0 %1220
  %v1222 = vmul.f32 %v1218, %v77
  %v1223 = vmul.f32 %v1221, %v77
  %v1224 = vadd.f32 %v1222, 1e-12
  %v1225 = vadd.f32 %v1223, 1e-12
  %v1226 = vrsqrt.pop %v1224
  %v1227 = vrsqrt.pop %v1225
  %v1228 = vmul.f32 %v1212, %v1226
  %v1229 = vmul.f32 %v1213, %v1227
  %v1231 = vlaneseq
  %v1232 = vshrl.u32 %v1231, 7
  %v1233 = vsub.s32 0, %v1232
  %v1234 = vrot.slane %v1202, %v1233
  %v1236 = vmul.f32 %v1228, %v1234
  %v1237 = vmul.f32 %v1229, %v1234
  %v1239 = vlaneseq
  %v1240 = vshrl.u32 %v1239, 7
  %v1241 = vsub.s32 0, %v1240
  %v1242 = vrot.slane %v1203, %v1241
  %v1244 = vadd.f32 %v1236, %v1242
  %v1245 = vadd.f32 %v1237, %v1242
  %v1246 = vld [vmem:[%s10] sm:$0xf]
  %v1247 = vld [vmem:[%s10 + $0x4] sm:$0xf]
  %v1248 = vld [vmem:[%s10 + $0x8] sm:$0xf]
  %v1249 = vld [vmem:[%s10 + $0xc] sm:$0xf]
  %v1250 = vpack.c.bf16 %v1245, %v1244
  %v1251 = vld [vmem:[%s11] sm:$0x1]
  %v1253 = vlaneseq
  %v1254 = vshrl.u32 %v1253, 7
  %v1255 = vsub.s32 0, %v1254
  %v1256 = vrot.slane %v1251, %v1255
  %v1262 = vunpack.c.l.b16 %v1246
  %v1263 = vunpack.c.l.b16 %v1247
  %v1264 = vunpack.c.l.b16 %v1248
  %v1265 = vunpack.c.l.b16 %v1249
  %v1266 = vpack.c.b16 %v1263, %v1262
  %v1267 = vpack.c.b16 %v1265, %v1264
  %v1271 = vsel %vm70, %v1250, 0
  %1273 = vmatprep.subr.bf16.mxu0 0
  %1274 = vmatpush1.bf16.msra.mxu0 %v1266
  %1275 = vmatprep.subr.bf16.mxu0 0
  %1276 = vmatpush1.bf16.msra.mxu0 %v1267
  %1277 = vmatprep.subr.bf16.mxu0 0
  %1278 = vmatpush1.bf16.msra.mxu0 0
  %1279 = vmatprep.subr.bf16.mxu0 0
  %1280 = vmatpush1.bf16.msra.mxu0 0
  %1281 = vmatprep.subr.bf16.mxu0 0
  %1282 = vmatpush1.bf16.msra.mxu0 0
  %1283 = vmatprep.subr.bf16.mxu0 0
  %1284 = vmatpush1.bf16.msra.mxu0 0
  %1285 = vmatprep.subr.bf16.mxu0 0
  %1286 = vmatpush1.bf16.msra.mxu0 0
  %1287 = vmatprep.subr.bf16.mxu0 0
  %1288 = vmatpush1.bf16.msra.mxu0 0
  %1289 = vmatprep.subr.bf16.mxu0 0
  %1290 = vmatpush1.bf16.msra.mxu0 0
  %1291 = vmatprep.subr.bf16.mxu0 0
  %1292 = vmatpush1.bf16.msra.mxu0 0
  %1293 = vmatprep.subr.bf16.mxu0 0
  %1294 = vmatpush1.bf16.msra.mxu0 0
  %1295 = vmatprep.subr.bf16.mxu0 0
  %1296 = vmatpush1.bf16.msra.mxu0 0
  %1297 = vmatprep.subr.bf16.mxu0 0
  %1298 = vmatpush1.bf16.msra.mxu0 0
  %1299 = vmatprep.subr.bf16.mxu0 0
  %1300 = vmatpush1.bf16.msra.mxu0 0
  %1301 = vmatprep.subr.bf16.mxu0 0
  %1302 = vmatpush1.bf16.msra.mxu0 0
  %1303 = vmatprep.subr.bf16.mxu0 0
  %1304 = vmatpush1.bf16.msra.mxu0 0
  %1305 = vmatprep.mubr.bf16.mxu0 0
  %1306 = vmatmul.mubr.bf16.gmra.mrb[0].mxu0 %v1271
  %v1307 = vpop.f32.mrb[0].mxu0
  %v1308 = vadd.f32 %v1256, %v1307
  %v1309 = vpop.f32.mrb[0].mxu0
  %v1310 = vpop.f32.mrb[0].mxu0
  %v1311 = vadd.f32 %v1256, %v1310
  %v1312 = vpop.f32.mrb[0].mxu0
  %1313 = vdwg.mxu0
  %v1314 = vmul.f32 %v1308, 0.5
  %v1315 = vmul.f32 %v1311, 0.5
  %v1316 = vmul.f32 %v1308, 0.044715
  %v1317 = vmul.f32 %v1311, 0.044715
  %v1318 = vmul.f32 %v1316, %v1308
  %v1319 = vmul.f32 %v1317, %v1311
  %v1320 = vmul.f32 %v1318, %v1308
  %v1321 = vmul.f32 %v1319, %v1311
  %v1322 = vadd.f32 %v1308, %v1320
  %v1323 = vadd.f32 %v1311, %v1321
  %v1324 = vmul.f32 %v1322, 0.7978846
  %v1325 = vmul.f32 %v1323, 0.7978846
  %v1326 = vtanh.pop %v1324
  %v1327 = vtanh.pop %v1325
  %v1328 = vadd.f32 %v1326, 1.0
  %v1329 = vadd.f32 %v1327, 1.0
  %v1330 = vmul.f32 %v1314, %v1328
  %v1331 = vmul.f32 %v1315, %v1329
  %v1332 = vld [vmem:[%s12] sm:$0xf]
  %v1333 = vld [vmem:[%s12 + $0x4] sm:$0xf]
  %v1334 = vld [vmem:[%s12 + $0x8] sm:$0xf]
  %v1335 = vld [vmem:[%s12 + $0xc] sm:$0xf]
  %v1336 = vld [vmem:[%s12 + $0x10] sm:$0xf]
  %v1337 = vld [vmem:[%s12 + $0x14] sm:$0xf]
  %v1338 = vld [vmem:[%s12 + $0x18] sm:$0xf]
  %v1339 = vld [vmem:[%s12 + $0x1c] sm:$0xf]
  %v1340 = vpack.c.bf16 %v1331, %v1330
  %v1341 = vld [vmem:[%s13] sm:$0x1]
  %v1343 = vlaneseq
  %v1344 = vshrl.u32 %v1343, 7
  %v1345 = vsub.s32 0, %v1344
  %v1346 = vrot.slane %v1341, %v1345
  %v1356 = vunpack.c.l.b16 %v1332
  %v1357 = vunpack.c.l.b16 %v1333
  %v1358 = vunpack.c.l.b16 %v1334
  %v1359 = vunpack.c.l.b16 %v1335
  %v1360 = vunpack.c.l.b16 %v1336
  %v1361 = vunpack.c.l.b16 %v1337
  %v1362 = vunpack.c.l.b16 %v1338
  %v1363 = vunpack.c.l.b16 %v1339
  %v1364 = vpack.c.b16 %v1357, %v1356
  %v1365 = vpack.c.b16 %v1359, %v1358
  %v1366 = vpack.c.b16 %v1361, %v1360
  %v1367 = vpack.c.b16 %v1363, %v1362
  %vm1372 = vcmask 523264
  %v1374 = vsel %vm1372, %v1340, 0
  %1376 = vmatprep.subr.bf16.mxu0 0
  %1377 = vmatpush1.bf16.msra.mxu0 %v1364
  %1378 = vmatprep.subr.bf16.mxu0 0
  %1379 = vmatpush1.bf16.msra.mxu0 %v1365
  %1380 = vmatprep.subr.bf16.mxu0 0
  %1381 = vmatpush1.bf16.msra.mxu0 %v1366
  %1382 = vmatprep.subr.bf16.mxu0 0
  %1383 = vmatpush1.bf16.msra.mxu0 %v1367
  %1384 = vmatprep.subr.bf16.mxu0 0
  %1385 = vmatpush1.bf16.msra.mxu0 0
  %1386 = vmatprep.subr.bf16.mxu0 0
  %1387 = vmatpush1.bf16.msra.mxu0 0
  %1388 = vmatprep.subr.bf16.mxu0 0
  %1389 = vmatpush1.bf16.msra.mxu0 0
  %1390 = vmatprep.subr.bf16.mxu0 0
  %1391 = vmatpush1.bf16.msra.mxu0 0
  %1392 = vmatprep.subr.bf16.mxu0 0
  %1393 = vmatpush1.bf16.msra.mxu0 0
  %1394 = vmatprep.subr.bf16.mxu0 0
  %1395 = vmatpush1.bf16.msra.mxu0 0
  %1396 = vmatprep.subr.bf16.mxu0 0
  %1397 = vmatpush1.bf16.msra.mxu0 0
  %1398 = vmatprep.subr.bf16.mxu0 0
  %1399 = vmatpush1.bf16.msra.mxu0 0
  %1400 = vmatprep.subr.bf16.mxu0 0
  %1401 = vmatpush1.bf16.msra.mxu0 0
  %1402 = vmatprep.subr.bf16.mxu0 0
  %1403 = vmatpush1.bf16.msra.mxu0 0
  %1404 = vmatprep.subr.bf16.mxu0 0
  %1405 = vmatpush1.bf16.msra.mxu0 0
  %1406 = vmatprep.subr.bf16.mxu0 0
  %1407 = vmatpush1.bf16.msra.mxu0 0
  %1408 = vmatprep.mubr.bf16.mxu0 0
  %1409 = vmatmul.mubr.bf16.gmra.mrb[0].mxu0 %v1374
  %v1410 = vpop.f32.mrb[0].mxu0
  %v1411 = vadd.f32 %v1346, %v1410
  %v1412 = vpop.f32.mrb[0].mxu0
  %v1413 = vpop.f32.mrb[0].mxu0
  %v1414 = vadd.f32 %v1346, %v1413
  %v1415 = vpop.f32.mrb[0].mxu0
  %1416 = vdwg.mxu0
  %v1417 = vadd.f32 %v1411, %v1244
  %v1418 = vadd.f32 %v1414, %v1245
  %v1419 = vld [vmem:[%s14] sm:$0x1]
  %v1420 = vld [vmem:[%s15] sm:$0x1]
  %v1421 = vsel %vm70, %v1417, 0.0
  %1422 = vadd.xlane.f32.xlu0 %v1421
  %v1423 = vpop.xlane.xlu0 %1422
  %v1424 = vsel %vm70, %v1418, 0.0
  %1425 = vadd.xlane.f32.xlu0 %v1424
  %v1426 = vpop.xlane.xlu0 %1425
  %v1427 = vmul.f32 %v1423, %v77
  %v1428 = vmul.f32 %v1426, %v77
  %v1429 = vsub.f32 %v1417, %v1427
  %v1430 = vsub.f32 %v1418, %v1428
  %v1431 = vmul.f32 %v1429, %v1429
  %v1432 = vmul.f32 %v1430, %v1430
  %v1433 = vsel %vm70, %v1431, 0.0
  %1434 = vadd.xlane.f32.xlu0 %v1433
  %v1435 = vpop.xlane.xlu0 %1434
  %v1436 = vsel %vm70, %v1432, 0.0
  %1437 = vadd.xlane.f32.xlu0 %v1436
  %v1438 = vpop.xlane.xlu0 %1437
  %v1439 = vmul.f32 %v1435, %v77
  %v1440 = vmul.f32 %v1438, %v77
  %v1441 = vadd.f32 %v1439, 1e-12
  %v1442 = vadd.f32 %v1440, 1e-12
  %v1443 = vrsqrt.pop %v1441
  %v1444 = vrsqrt.pop %v1442
  %v1445 = vmul.f32 %v1429, %v1443
  %v1446 = vmul.f32 %v1430, %v1444
  %v1448 = vlaneseq
  %v1449 = vshrl.u32 %v1448, 7
  %v1450 = vsub.s32 0, %v1449
  %v1451 = vrot.slane %v1419, %v1450
  %v1453 = vmul.f32 %v1445, %v1451
  %v1454 = vmul.f32 %v1446, %v1451
  %v1456 = vlaneseq
  %v1457 = vshrl.u32 %v1456, 7
  %v1458 = vsub.s32 0, %v1457
  %v1459 = vrot.slane %v1420, %v1458
  %v1461 = vadd.f32 %v1453, %v1459
  %v1462 = vadd.f32 %v1454, %v1459
  %s1463 = scalar_lea.vmem %s4, 16
  %v1464 = vld [vmem:[%s1463] sm:$0xf]
  %v1465 = vld [vmem:[%s1463 + $0x4] sm:$0xf]
  %v1466 = vld [vmem:[%s1463 + $0x8] sm:$0xf]
  %v1467 = vld [vmem:[%s1463 + $0xc] sm:$0xf]
  %v1468 = vpack.c.bf16 %v1462, %v1461
  %s1469 = scalar_lea.vmem %s5, 1
  %v1470 = vld [vmem:[%s1469] sm:$0x1]
  %v1472 = vlaneseq
  %v1473 = vshrl.u32 %v1472, 7
  %v1474 = vsub.s32 0, %v1473
  %v1475 = vrot.slane %v1470, %v1474
  %v1481 = vunpack.c.l.b16 %v1464
  %v1482 = vunpack.c.l.b16 %v1465
  %v1483 = vunpack.c.l.b16 %v1466
  %v1484 = vunpack.c.l.b16 %v1467
  %v1485 = vpack.c.b16 %v1482, %v1481
  %v1486 = vpack.c.b16 %v1484, %v1483
  %v1490 = vsel %vm70, %v1468, 0
  %1492 = vmatprep.subr.bf16.mxu0 0
  %1493 = vmatpush1.bf16.msra.mxu0 %v1485
  %1494 = vmatprep.subr.bf16.mxu0 0
  %1495 = vmatpush1.bf16.msra.mxu0 %v1486
  %1496 = vmatprep.subr.bf16.mxu0 0
  %1497 = vmatpush1.bf16.msra.mxu0 0
  %1498 = vmatprep.subr.bf16.mxu0 0
  %1499 = vmatpush1.bf16.msra.mxu0 0
  %1500 = vmatprep.subr.bf16.mxu0 0
  %1501 = vmatpush1.bf16.msra.mxu0 0
  %1502 = vmatprep.subr.bf16.mxu0 0
  %1503 = vmatpush1.bf16.msra.mxu0 0
  %1504 = vmatprep.subr.bf16.mxu0 0
  %1505 = vmatpush1.bf16.msra.mxu0 0
  %1506 = vmatprep.subr.bf16.mxu0 0
  %1507 = vmatpush1.bf16.msra.mxu0 0
  %1508 = vmatprep.subr.bf16.mxu0 0
  %1509 = vmatpush1.bf16.msra.mxu0 0
  %1510 = vmatprep.subr.bf16.mxu0 0
  %1511 = vmatpush1.bf16.msra.mxu0 0
  %1512 = vmatprep.subr.bf16.mxu0 0
  %1513 = vmatpush1.bf16.msra.mxu0 0
  %1514 = vmatprep.subr.bf16.mxu0 0
  %1515 = vmatpush1.bf16.msra.mxu0 0
  %1516 = vmatprep.subr.bf16.mxu0 0
  %1517 = vmatpush1.bf16.msra.mxu0 0
  %1518 = vmatprep.subr.bf16.mxu0 0
  %1519 = vmatpush1.bf16.msra.mxu0 0
  %1520 = vmatprep.subr.bf16.mxu0 0
  %1521 = vmatpush1.bf16.msra.mxu0 0
  %1522 = vmatprep.subr.bf16.mxu0 0
  %1523 = vmatpush1.bf16.msra.mxu0 0
  %1524 = vmatprep.mubr.bf16.mxu0 0
  %1525 = vmatmul.mubr.bf16.gmra.mrb[0].mxu0 %v1490
  %v1526 = vpop.f32.mrb[0].mxu0
  %v1527 = vadd.f32 %v1475, %v1526
  %v1528 = vpop.f32.mrb[0].mxu0
  %v1529 = vpop.f32.mrb[0].mxu0
  %v1530 = vadd.f32 %v1475, %v1529
  %v1531 = vpop.f32.mrb[0].mxu0
  %1532 = vdwg.mxu0
  %v1533 = vld [vmem:[%s1] sm:$0x1]
  %v1534 = vpack.c.bf16 %v1527, %v1527
  %1536 = vrot.lane.b32.xlu0 %v1534, 96
  %v1537 = vpop.permute.xlu0 %1536
  %v1539 = vsel %vm187, %v1534, 0
  %v1542 = vsel %vm187, %v1537, 0
  %1544 = vmatprep.subr.bf16.mxu0 0
  %1545 = vmatpush1.bf16.xpose.msra.mxu0 %v1542
  %1546 = vmatprep.subr.bf16.mxu0 0
  %1547 = vmatpush1.bf16.xpose.msra.mxu0 0
  %1548 = vmatprep.subr.bf16.mxu0 0
  %1549 = vmatpush1.bf16.xpose.msra.mxu0 0
  %1550 = vmatprep.subr.bf16.mxu0 0
  %1551 = vmatpush1.bf16.xpose.msra.mxu0 0
  %1552 = vmatprep.subr.bf16.mxu0 0
  %1553 = vmatpush1.bf16.xpose.msra.mxu0 0
  %1554 = vmatprep.subr.bf16.mxu0 0
  %1555 = vmatpush1.bf16.xpose.msra.mxu0 0
  %1556 = vmatprep.subr.bf16.mxu0 0
  %1557 = vmatpush1.bf16.xpose.msra.mxu0 0
  %1558 = vmatprep.subr.bf16.mxu0 0
  %1559 = vmatpush1.bf16.xpose.msra.mxu0 0
  %1560 = vmatprep.subr.bf16.mxu0 0
  %1561 = vmatpush1.bf16.xpose.msra.mxu0 0
  %1562 = vmatprep.subr.bf16.mxu0 0
  %1563 = vmatpush1.bf16.xpose.msra.mxu0 0
  %1564 = vmatprep.subr.bf16.mxu0 0
  %1565 = vmatpush1.bf16.xpose.msra.mxu0 0
  %1566 = vmatprep.subr.bf16.mxu0 0
  %1567 = vmatpush1.bf16.xpose.msra.mxu0 0
  %1568 = vmatprep.subr.bf16.mxu0 0
  %1569 = vmatpush1.bf16.xpose.msra.mxu0 0
  %1570 = vmatprep.subr.bf16.mxu0 0
  %1571 = vmatpush1.bf16.xpose.msra.mxu0 0
  %1572 = vmatprep.subr.bf16.mxu0 0
  %1573 = vmatpush1.bf16.xpose.msra.mxu0 0
  %1574 = vmatprep.subr.bf16.mxu0 0
  %1575 = vmatpush1.bf16.xpose.msra.mxu0 0
  %1576 = vmatprep.mubr.bf16.mxu0 0
  %1577 = vmatmul.mubr.bf16.gmra.mrb[0].mxu0 %v1539
  %v1578 = vpop.f32.mrb[0].mxu0
  %v1579 = vadd.f32 0.0, %v1578
  %v1580 = vpop.f32.mrb[0].mxu0
  %v1581 = vpop.f32.mrb[0].mxu0
  %v1582 = vpop.f32.mrb[0].mxu0
  %1583 = vdwg.mxu0
  %v1584 = vmul.f32 %v1579, 0.35355338
  %v1586 = vlaneseq
  %v1587 = vshrl.u32 %v1586, 7
  %v1588 = vsub.s32 0, %v1587
  %v1589 = vrot.slane %v1533, %v1588
  %v1591 = vadd.f32 %v1584, %v1589
  %v1592 = vsel %vm187, %v1591, -inf
  %1593 = vmax.xlane.f32.xlu0 %v1592
  %v1594 = vpop.xlane.xlu0 %1593
  %v1595 = vsub.f32 %v1591, %v1594
  %v1596 = vmul.f32 %v1595, 1.442695
  %v1597 = vpow.pop %v1596
  %v1598 = vsel %vm187, %v1597, 0.0
  %1599 = vadd.xlane.f32.xlu0 %v1598
  %v1600 = vpop.xlane.xlu0 %1599
  %v1601 = vrcp.pop %v1600
  %v1602 = vmul.f32 %v1597, %v1601
  %v1603 = vpack.c.bf16 %v1602, %v1602
  %1604 = vrot.lane.b32.xlu0 %v1534, 64
  %v1605 = vpop.permute.xlu0 %1604
  %v1607 = vsel %vm187, %v1603, 0
  %v1610 = vsel %vm259, %v1605, 0
  %1612 = vmatprep.subr.bf16.mxu0 0
  %1613 = vmatpush1.bf16.msra.mxu0 %v1610
  %1614 = vmatprep.subr.bf16.mxu0 0
  %1615 = vmatpush1.bf16.msra.mxu0 0
  %1616 = vmatprep.subr.bf16.mxu0 0
  %1617 = vmatpush1.bf16.msra.mxu0 0
  %1618 = vmatprep.subr.bf16.mxu0 0
  %1619 = vmatpush1.bf16.msra.mxu0 0
  %1620 = vmatprep.subr.bf16.mxu0 0
  %1621 = vmatpush1.bf16.msra.mxu0 0
  %1622 = vmatprep.subr.bf16.mxu0 0
  %1623 = vmatpush1.bf16.msra.mxu0 0
  %1624 = vmatprep.subr.bf16.mxu0 0
  %1625 = vmatpush1.bf16.msra.mxu0 0
  %1626 = vmatprep.subr.bf16.mxu0 0
  %1627 = vmatpush1.bf16.msra.mxu0 0
  %1628 = vmatprep.subr.bf16.mxu0 0
  %1629 = vmatpush1.bf16.msra.mxu0 0
  %1630 = vmatprep.subr.bf16.mxu0 0
  %1631 = vmatpush1.bf16.msra.mxu0 0
  %1632 = vmatprep.subr.bf16.mxu0 0
  %1633 = vmatpush1.bf16.msra.mxu0 0
  %1634 = vmatprep.subr.bf16.mxu0 0
  %1635 = vmatpush1.bf16.msra.mxu0 0
  %1636 = vmatprep.subr.bf16.mxu0 0
  %1637 = vmatpush1.bf16.msra.mxu0 0
  %1638 = vmatprep.subr.bf16.mxu0 0
  %1639 = vmatpush1.bf16.msra.mxu0 0
  %1640 = vmatprep.subr.bf16.mxu0 0
  %1641 = vmatpush1.bf16.msra.mxu0 0
  %1642 = vmatprep.subr.bf16.mxu0 0
  %1643 = vmatpush1.bf16.msra.mxu0 0
  %1644 = vmatprep.mubr.bf16.mxu0 0
  %1645 = vmatmul.mubr.bf16.gmra.mrb[0].mxu0 %v1607
  %v1646 = vpop.f32.mrb[0].mxu0
  %v1647 = vadd.f32 0.0, %v1646
  %v1648 = vpop.f32.mrb[0].mxu0
  %v1649 = vpop.f32.mrb[0].mxu0
  %v1650 = vpop.f32.mrb[0].mxu0
  %1651 = vdwg.mxu0
  %1652 = vst.msk [vmem:[#allocation2] sm:$0xff] %vm187, %v1647
  %1653 = vrot.lane.b32.xlu0 %v1534, 120
  %v1654 = vpop.permute.xlu0 %1653
  %1655 = vrot.lane.b32.xlu0 %v1534, 88
  %v1656 = vpop.permute.xlu0 %1655
  %v1658 = vsel %vm187, %v1654, 0
  %v1661 = vsel %vm187, %v1656, 0
  %1663 = vmatprep.subr.bf16.mxu0 0
  %1664 = vmatpush1.bf16.xpose.msra.mxu0 %v1661
  %1665 = vmatprep.subr.bf16.mxu0 0
  %1666 = vmatpush1.bf16.xpose.msra.mxu0 0
  %1667 = vmatprep.subr.bf16.mxu0 0
  %1668 = vmatpush1.bf16.xpose.msra.mxu0 0
  %1669 = vmatprep.subr.bf16.mxu0 0
  %1670 = vmatpush1.bf16.xpose.msra.mxu0 0
  %1671 = vmatprep.subr.bf16.mxu0 0
  %1672 = vmatpush1.bf16.xpose.msra.mxu0 0
  %1673 = vmatprep.subr.bf16.mxu0 0
  %1674 = vmatpush1.bf16.xpose.msra.mxu0 0
  %1675 = vmatprep.subr.bf16.mxu0 0
  %1676 = vmatpush1.bf16.xpose.msra.mxu0 0
  %1677 = vmatprep.subr.bf16.mxu0 0
  %1678 = vmatpush1.bf16.xpose.msra.mxu0 0
  %1679 = vmatprep.subr.bf16.mxu0 0
  %1680 = vmatpush1.bf16.xpose.msra.mxu0 0
  %1681 = vmatprep.subr.bf16.mxu0 0
  %1682 = vmatpush1.bf16.xpose.msra.mxu0 0
  %1683 = vmatprep.subr.bf16.mxu0 0
  %1684 = vmatpush1.bf16.xpose.msra.mxu0 0
  %1685 = vmatprep.subr.bf16.mxu0 0
  %1686 = vmatpush1.bf16.xpose.msra.mxu0 0
  %1687 = vmatprep.subr.bf16.mxu0 0
  %1688 = vmatpush1.bf16.xpose.msra.mxu0 0
  %1689 = vmatprep.subr.bf16.mxu0 0
  %1690 = vmatpush1.bf16.xpose.msra.mxu0 0
  %1691 = vmatprep.subr.bf16.mxu0 0
  %1692 = vmatpush1.bf16.xpose.msra.mxu0 0
  %1693 = vmatprep.subr.bf16.mxu0 0
  %1694 = vmatpush1.bf16.xpose.msra.mxu0 0
  %1695 = vmatprep.mubr.bf16.mxu0 0
  %1696 = vmatmul.mubr.bf16.gmra.mrb[0].mxu0 %v1658
  %v1697 = vpop.f32.mrb[0].mxu0
  %v1698 = vadd.f32 0.0, %v1697
  %v1699 = vpop.f32.mrb[0].mxu0
  %v1700 = vpop.f32.mrb[0].mxu0
  %v1701 = vpop.f32.mrb[0].mxu0
  %1702 = vdwg.mxu0
  %v1703 = vmul.f32 %v1698, 0.35355338
  %v1704 = vadd.f32 %v1703, %v1589
  %v1705 = vsel %vm187, %v1704, -inf
  %1706 = vmax.xlane.f32.xlu0 %v1705
  %v1707 = vpop.xlane.xlu0 %1706
  %v1708 = vsub.f32 %v1704, %v1707
  %v1709 = vmul.f32 %v1708, 1.442695
  %v1710 = vpow.pop %v1709
  %v1711 = vsel %vm187, %v1710, 0.0
  %1712 = vadd.xlane.f32.xlu0 %v1711
  %v1713 = vpop.xlane.xlu0 %1712
  %v1714 = vrcp.pop %v1713
  %v1715 = vmul.f32 %v1710, %v1714
  %v1716 = vpack.c.bf16 %v1715, %v1715
  %1717 = vrot.lane.b32.xlu0 %v1534, 56
  %v1718 = vpop.permute.xlu0 %1717
  %v1720 = vsel %vm187, %v1716, 0
  %v1723 = vsel %vm259, %v1718, 0
  %1725 = vmatprep.subr.bf16.mxu0 0
  %1726 = vmatpush1.bf16.msra.mxu0 %v1723
  %1727 = vmatprep.subr.bf16.mxu0 0
  %1728 = vmatpush1.bf16.msra.mxu0 0
  %1729 = vmatprep.subr.bf16.mxu0 0
  %1730 = vmatpush1.bf16.msra.mxu0 0
  %1731 = vmatprep.subr.bf16.mxu0 0
  %1732 = vmatpush1.bf16.msra.mxu0 0
  %1733 = vmatprep.subr.bf16.mxu0 0
  %1734 = vmatpush1.bf16.msra.mxu0 0
  %1735 = vmatprep.subr.bf16.mxu0 0
  %1736 = vmatpush1.bf16.msra.mxu0 0
  %1737 = vmatprep.subr.bf16.mxu0 0
  %1738 = vmatpush1.bf16.msra.mxu0 0
  %1739 = vmatprep.subr.bf16.mxu0 0
  %1740 = vmatpush1.bf16.msra.mxu0 0
  %1741 = vmatprep.subr.bf16.mxu0 0
  %1742 = vmatpush1.bf16.msra.mxu0 0
  %1743 = vmatprep.subr.bf16.mxu0 0
  %1744 = vmatpush1.bf16.msra.mxu0 0
  %1745 = vmatprep.subr.bf16.mxu0 0
  %1746 = vmatpush1.bf16.msra.mxu0 0
  %1747 = vmatprep.subr.bf16.mxu0 0
  %1748 = vmatpush1.bf16.msra.mxu0 0
  %1749 = vmatprep.subr.bf16.mxu0 0
  %1750 = vmatpush1.bf16.msra.mxu0 0
  %1751 = vmatprep.subr.bf16.mxu0 0
  %1752 = vmatpush1.bf16.msra.mxu0 0
  %1753 = vmatprep.subr.bf16.mxu0 0
  %1754 = vmatpush1.bf16.msra.mxu0 0
  %1755 = vmatprep.subr.bf16.mxu0 0
  %1756 = vmatpush1.bf16.msra.mxu0 0
  %1757 = vmatprep.mubr.bf16.mxu0 0
  %1758 = vmatmul.mubr.bf16.gmra.mrb[0].mxu0 %v1720
  %v1759 = vpop.f32.mrb[0].mxu0
  %v1760 = vadd.f32 0.0, %v1759
  %v1761 = vpop.f32.mrb[0].mxu0
  %v1762 = vpop.f32.mrb[0].mxu0
  %v1763 = vpop.f32.mrb[0].mxu0
  %1764 = vdwg.mxu0
  %1766 = vrot.lane.b32.xlu0 %v1760, 8
  %v1767 = vpop.permute.xlu0 %1766
  %1769 = vst.msk [vmem:[#allocation2] sm:$0xff] %vm420, %v1767
  %1770 = vrot.lane.b32.xlu0 %v1534, 112
  %v1771 = vpop.permute.xlu0 %1770
  %1772 = vrot.lane.b32.xlu0 %v1534, 80
  %v1773 = vpop.permute.xlu0 %1772
  %v1775 = vsel %vm187, %v1771, 0
  %v1778 = vsel %vm187, %v1773, 0
  %1780 = vmatprep.subr.bf16.mxu0 0
  %1781 = vmatpush1.bf16.xpose.msra.mxu0 %v1778
  %1782 = vmatprep.subr.bf16.mxu0 0
  %1783 = vmatpush1.bf16.xpose.msra.mxu0 0
  %1784 = vmatprep.subr.bf16.mxu0 0
  %1785 = vmatpush1.bf16.xpose.msra.mxu0 0
  %1786 = vmatprep.subr.bf16.mxu0 0
  %1787 = vmatpush1.bf16.xpose.msra.mxu0 0
  %1788 = vmatprep.subr.bf16.mxu0 0
  %1789 = vmatpush1.bf16.xpose.msra.mxu0 0
  %1790 = vmatprep.subr.bf16.mxu0 0
  %1791 = vmatpush1.bf16.xpose.msra.mxu0 0
  %1792 = vmatprep.subr.bf16.mxu0 0
  %1793 = vmatpush1.bf16.xpose.msra.mxu0 0
  %1794 = vmatprep.subr.bf16.mxu0 0
  %1795 = vmatpush1.bf16.xpose.msra.mxu0 0
  %1796 = vmatprep.subr.bf16.mxu0 0
  %1797 = vmatpush1.bf16.xpose.msra.mxu0 0
  %1798 = vmatprep.subr.bf16.mxu0 0
  %1799 = vmatpush1.bf16.xpose.msra.mxu0 0
  %1800 = vmatprep.subr.bf16.mxu0 0
  %1801 = vmatpush1.bf16.xpose.msra.mxu0 0
  %1802 = vmatprep.subr.bf16.mxu0 0
  %1803 = vmatpush1.bf16.xpose.msra.mxu0 0
  %1804 = vmatprep.subr.bf16.mxu0 0
  %1805 = vmatpush1.bf16.xpose.msra.mxu0 0
  %1806 = vmatprep.subr.bf16.mxu0 0
  %1807 = vmatpush1.bf16.xpose.msra.mxu0 0
  %1808 = vmatprep.subr.bf16.mxu0 0
  %1809 = vmatpush1.bf16.xpose.msra.mxu0 0
  %1810 = vmatprep.subr.bf16.mxu0 0
  %1811 = vmatpush1.bf16.xpose.msra.mxu0 0
  %1812 = vmatprep.mubr.bf16.mxu0 0
  %1813 = vmatmul.mubr.bf16.gmra.mrb[0].mxu0 %v1775
  %v1814 = vpop.f32.mrb[0].mxu0
  %v1815 = vadd.f32 0.0, %v1814
  %v1816 = vpop.f32.mrb[0].mxu0
  %v1817 = vpop.f32.mrb[0].mxu0
  %v1818 = vpop.f32.mrb[0].mxu0
  %1819 = vdwg.mxu0
  %v1820 = vmul.f32 %v1815, 0.35355338
  %v1821 = vadd.f32 %v1820, %v1589
  %v1822 = vsel %vm187, %v1821, -inf
  %1823 = vmax.xlane.f32.xlu0 %v1822
  %v1824 = vpop.xlane.xlu0 %1823
  %v1825 = vsub.f32 %v1821, %v1824
  %v1826 = vmul.f32 %v1825, 1.442695
  %v1827 = vpow.pop %v1826
  %v1828 = vsel %vm187, %v1827, 0.0
  %1829 = vadd.xlane.f32.xlu0 %v1828
  %v1830 = vpop.xlane.xlu0 %1829
  %v1831 = vrcp.pop %v1830
  %v1832 = vmul.f32 %v1827, %v1831
  %v1833 = vpack.c.bf16 %v1832, %v1832
  %1834 = vrot.lane.b32.xlu0 %v1534, 48
  %v1835 = vpop.permute.xlu0 %1834
  %v1837 = vsel %vm187, %v1833, 0
  %v1840 = vsel %vm259, %v1835, 0
  %1842 = vmatprep.subr.bf16.mxu0 0
  %1843 = vmatpush1.bf16.msra.mxu0 %v1840
  %1844 = vmatprep.subr.bf16.mxu0 0
  %1845 = vmatpush1.bf16.msra.mxu0 0
  %1846 = vmatprep.subr.bf16.mxu0 0
  %1847 = vmatpush1.bf16.msra.mxu0 0
  %1848 = vmatprep.subr.bf16.mxu0 0
  %1849 = vmatpush1.bf16.msra.mxu0 0
  %1850 = vmatprep.subr.bf16.mxu0 0
  %1851 = vmatpush1.bf16.msra.mxu0 0
  %1852 = vmatprep.subr.bf16.mxu0 0
  %1853 = vmatpush1.bf16.msra.mxu0 0
  %1854 = vmatprep.subr.bf16.mxu0 0
  %1855 = vmatpush1.bf16.msra.mxu0 0
  %1856 = vmatprep.subr.bf16.mxu0 0
  %1857 = vmatpush1.bf16.msra.mxu0 0
  %1858 = vmatprep.subr.bf16.mxu0 0
  %1859 = vmatpush1.bf16.msra.mxu0 0
  %1860 = vmatprep.subr.bf16.mxu0 0
  %1861 = vmatpush1.bf16.msra.mxu0 0
  %1862 = vmatprep.subr.bf16.mxu0 0
  %1863 = vmatpush1.bf16.msra.mxu0 0
  %1864 = vmatprep.subr.bf16.mxu0 0
  %1865 = vmatpush1.bf16.msra.mxu0 0
  %1866 = vmatprep.subr.bf16.mxu0 0
  %1867 = vmatpush1.bf16.msra.mxu0 0
  %1868 = vmatprep.subr.bf16.mxu0 0
  %1869 = vmatpush1.bf16.msra.mxu0 0
  %1870 = vmatprep.subr.bf16.mxu0 0
  %1871 = vmatpush1.bf16.msra.mxu0 0
  %1872 = vmatprep.subr.bf16.mxu0 0
  %1873 = vmatpush1.bf16.msra.mxu0 0
  %1874 = vmatprep.mubr.bf16.mxu0 0
  %1875 = vmatmul.mubr.bf16.gmra.mrb[0].mxu0 %v1837
  %v1876 = vpop.f32.mrb[0].mxu0
  %v1877 = vadd.f32 0.0, %v1876
  %v1878 = vpop.f32.mrb[0].mxu0
  %v1879 = vpop.f32.mrb[0].mxu0
  %v1880 = vpop.f32.mrb[0].mxu0
  %1881 = vdwg.mxu0
  %1883 = vrot.lane.b32.xlu0 %v1877, 16
  %v1884 = vpop.permute.xlu0 %1883
  %1886 = vst.msk [vmem:[#allocation2] sm:$0xff] %vm538, %v1884
  %1887 = vrot.lane.b32.xlu0 %v1534, 104
  %v1888 = vpop.permute.xlu0 %1887
  %1889 = vrot.lane.b32.xlu0 %v1534, 72
  %v1890 = vpop.permute.xlu0 %1889
  %v1892 = vsel %vm187, %v1888, 0
  %v1895 = vsel %vm187, %v1890, 0
  %1897 = vmatprep.subr.bf16.mxu0 0
  %1898 = vmatpush1.bf16.xpose.msra.mxu0 %v1895
  %1899 = vmatprep.subr.bf16.mxu0 0
  %1900 = vmatpush1.bf16.xpose.msra.mxu0 0
  %1901 = vmatprep.subr.bf16.mxu0 0
  %1902 = vmatpush1.bf16.xpose.msra.mxu0 0
  %1903 = vmatprep.subr.bf16.mxu0 0
  %1904 = vmatpush1.bf16.xpose.msra.mxu0 0
  %1905 = vmatprep.subr.bf16.mxu0 0
  %1906 = vmatpush1.bf16.xpose.msra.mxu0 0
  %1907 = vmatprep.subr.bf16.mxu0 0
  %1908 = vmatpush1.bf16.xpose.msra.mxu0 0
  %1909 = vmatprep.subr.bf16.mxu0 0
  %1910 = vmatpush1.bf16.xpose.msra.mxu0 0
  %1911 = vmatprep.subr.bf16.mxu0 0
  %1912 = vmatpush1.bf16.xpose.msra.mxu0 0
  %1913 = vmatprep.subr.bf16.mxu0 0
  %1914 = vmatpush1.bf16.xpose.msra.mxu0 0
  %1915 = vmatprep.subr.bf16.mxu0 0
  %1916 = vmatpush1.bf16.xpose.msra.mxu0 0
  %1917 = vmatprep.subr.bf16.mxu0 0
  %1918 = vmatpush1.bf16.xpose.msra.mxu0 0
  %1919 = vmatprep.subr.bf16.mxu0 0
  %1920 = vmatpush1.bf16.xpose.msra.mxu0 0
  %1921 = vmatprep.subr.bf16.mxu0 0
  %1922 = vmatpush1.bf16.xpose.msra.mxu0 0
  %1923 = vmatprep.subr.bf16.mxu0 0
  %1924 = vmatpush1.bf16.xpose.msra.mxu0 0
  %1925 = vmatprep.subr.bf16.mxu0 0
  %1926 = vmatpush1.bf16.xpose.msra.mxu0 0
  %1927 = vmatprep.subr.bf16.mxu0 0
  %1928 = vmatpush1.bf16.xpose.msra.mxu0 0
  %1929 = vmatprep.mubr.bf16.mxu0 0
  %1930 = vmatmul.mubr.bf16.gmra.mrb[0].mxu0 %v1892
  %v1931 = vpop.f32.mrb[0].mxu0
  %v1932 = vadd.f32 0.0, %v1931
  %v1933 = vpop.f32.mrb[0].mxu0
  %v1934 = vpop.f32.mrb[0].mxu0
  %v1935 = vpop.f32.mrb[0].mxu0
  %1936 = vdwg.mxu0
  %v1937 = vmul.f32 %v1932, 0.35355338
  %v1938 = vadd.f32 %v1937, %v1589
  %v1939 = vsel %vm187, %v1938, -inf
  %1940 = vmax.xlane.f32.xlu0 %v1939
  %v1941 = vpop.xlane.xlu0 %1940
  %v1942 = vsub.f32 %v1938, %v1941
  %v1943 = vmul.f32 %v1942, 1.442695
  %v1944 = vpow.pop %v1943
  %v1945 = vsel %vm187, %v1944, 0.0
  %1946 = vadd.xlane.f32.xlu0 %v1945
  %v1947 = vpop.xlane.xlu0 %1946
  %v1948 = vrcp.pop %v1947
  %v1949 = vmul.f32 %v1944, %v1948
  %v1950 = vpack.c.bf16 %v1949, %v1949
  %1951 = vrot.lane.b32.xlu0 %v1534, 40
  %v1952 = vpop.permute.xlu0 %1951
  %v1954 = vsel %vm187, %v1950, 0
  %v1957 = vsel %vm259, %v1952, 0
  %1959 = vmatprep.subr.bf16.mxu0 0
  %1960 = vmatpush1.bf16.msra.mxu0 %v1957
  %1961 = vmatprep.subr.bf16.mxu0 0
  %1962 = vmatpush1.bf16.msra.mxu0 0
  %1963 = vmatprep.subr.bf16.mxu0 0
  %1964 = vmatpush1.bf16.msra.mxu0 0
  %1965 = vmatprep.subr.bf16.mxu0 0
  %1966 = vmatpush1.bf16.msra.mxu0 0
  %1967 = vmatprep.subr.bf16.mxu0 0
  %1968 = vmatpush1.bf16.msra.mxu0 0
  %1969 = vmatprep.subr.bf16.mxu0 0
  %1970 = vmatpush1.bf16.msra.mxu0 0
  %1971 = vmatprep.subr.bf16.mxu0 0
  %1972 = vmatpush1.bf16.msra.mxu0 0
  %1973 = vmatprep.subr.bf16.mxu0 0
  %1974 = vmatpush1.bf16.msra.mxu0 0
  %1975 = vmatprep.subr.bf16.mxu0 0
  %1976 = vmatpush1.bf16.msra.mxu0 0
  %1977 = vmatprep.subr.bf16.mxu0 0
  %1978 = vmatpush1.bf16.msra.mxu0 0
  %1979 = vmatprep.subr.bf16.mxu0 0
  %1980 = vmatpush1.bf16.msra.mxu0 0
  %1981 = vmatprep.subr.bf16.mxu0 0
  %1982 = vmatpush1.bf16.msra.mxu0 0
  %1983 = vmatprep.subr.bf16.mxu0 0
  %1984 = vmatpush1.bf16.msra.mxu0 0
  %1985 = vmatprep.subr.bf16.mxu0 0
  %1986 = vmatpush1.bf16.msra.mxu0 0
  %1987 = vmatprep.subr.bf16.mxu0 0
  %1988 = vmatpush1.bf16.msra.mxu0 0
  %1989 = vmatprep.subr.bf16.mxu0 0
  %1990 = vmatpush1.bf16.msra.mxu0 0
  %1991 = vmatprep.mubr.bf16.mxu0 0
  %1992 = vmatmul.mubr.bf16.gmra.mrb[0].mxu0 %v1954
  %v1993 = vpop.f32.mrb[0].mxu0
  %v1994 = vadd.f32 0.0, %v1993
  %v1995 = vpop.f32.mrb[0].mxu0
  %v1996 = vpop.f32.mrb[0].mxu0
  %v1997 = vpop.f32.mrb[0].mxu0
  %1998 = vdwg.mxu0
  %2000 = vrot.lane.b32.xlu0 %v1994, 24
  %v2001 = vpop.permute.xlu0 %2000
  %2003 = vst.msk [vmem:[#allocation2] sm:$0xff] %vm656, %v2001
  %v2004 = vld [vmem:[%s658] sm:$0x1]
  %v2005 = vpack.c.bf16 %v1530, %v1530
  %2007 = vrot.lane.b32.xlu0 %v2005, 96
  %v2008 = vpop.permute.xlu0 %2007
  %v2010 = vsel %vm187, %v2005, 0
  %v2013 = vsel %vm187, %v2008, 0
  %2015 = vmatprep.subr.bf16.mxu0 0
  %2016 = vmatpush1.bf16.xpose.msra.mxu0 %v2013
  %2017 = vmatprep.subr.bf16.mxu0 0
  %2018 = vmatpush1.bf16.xpose.msra.mxu0 0
  %2019 = vmatprep.subr.bf16.mxu0 0
  %2020 = vmatpush1.bf16.xpose.msra.mxu0 0
  %2021 = vmatprep.subr.bf16.mxu0 0
  %2022 = vmatpush1.bf16.xpose.msra.mxu0 0
  %2023 = vmatprep.subr.bf16.mxu0 0
  %2024 = vmatpush1.bf16.xpose.msra.mxu0 0
  %2025 = vmatprep.subr.bf16.mxu0 0
  %2026 = vmatpush1.bf16.xpose.msra.mxu0 0
  %2027 = vmatprep.subr.bf16.mxu0 0
  %2028 = vmatpush1.bf16.xpose.msra.mxu0 0
  %2029 = vmatprep.subr.bf16.mxu0 0
  %2030 = vmatpush1.bf16.xpose.msra.mxu0 0
  %2031 = vmatprep.subr.bf16.mxu0 0
  %2032 = vmatpush1.bf16.xpose.msra.mxu0 0
  %2033 = vmatprep.subr.bf16.mxu0 0
  %2034 = vmatpush1.bf16.xpose.msra.mxu0 0
  %2035 = vmatprep.subr.bf16.mxu0 0
  %2036 = vmatpush1.bf16.xpose.msra.mxu0 0
  %2037 = vmatprep.subr.bf16.mxu0 0
  %2038 = vmatpush1.bf16.xpose.msra.mxu0 0
  %2039 = vmatprep.subr.bf16.mxu0 0
  %2040 = vmatpush1.bf16.xpose.msra.mxu0 0
  %2041 = vmatprep.subr.bf16.mxu0 0
  %2042 = vmatpush1.bf16.xpose.msra.mxu0 0
  %2043 = vmatprep.subr.bf16.mxu0 0
  %2044 = vmatpush1.bf16.xpose.msra.mxu0 0
  %2045 = vmatprep.subr.bf16.mxu0 0
  %2046 = vmatpush1.bf16.xpose.msra.mxu0 0
  %2047 = vmatprep.mubr.bf16.mxu0 0
  %2048 = vmatmul.mubr.bf16.gmra.mrb[0].mxu0 %v2010
  %v2049 = vpop.f32.mrb[0].mxu0
  %v2050 = vadd.f32 0.0, %v2049
  %v2051 = vpop.f32.mrb[0].mxu0
  %v2052 = vpop.f32.mrb[0].mxu0
  %v2053 = vpop.f32.mrb[0].mxu0
  %2054 = vdwg.mxu0
  %v2055 = vmul.f32 %v2050, 0.35355338
  %v2057 = vlaneseq
  %v2058 = vshrl.u32 %v2057, 7
  %v2059 = vsub.s32 0, %v2058
  %v2060 = vrot.slane %v2004, %v2059
  %v2062 = vadd.f32 %v2055, %v2060
  %v2063 = vsel %vm187, %v2062, -inf
  %2064 = vmax.xlane.f32.xlu0 %v2063
  %v2065 = vpop.xlane.xlu0 %2064
  %v2066 = vsub.f32 %v2062, %v2065
  %v2067 = vmul.f32 %v2066, 1.442695
  %v2068 = vpow.pop %v2067
  %v2069 = vsel %vm187, %v2068, 0.0
  %2070 = vadd.xlane.f32.xlu0 %v2069
  %v2071 = vpop.xlane.xlu0 %2070
  %v2072 = vrcp.pop %v2071
  %v2073 = vmul.f32 %v2068, %v2072
  %v2074 = vpack.c.bf16 %v2073, %v2073
  %2075 = vrot.lane.b32.xlu0 %v2005, 64
  %v2076 = vpop.permute.xlu0 %2075
  %v2078 = vsel %vm187, %v2074, 0
  %v2081 = vsel %vm259, %v2076, 0
  %2083 = vmatprep.subr.bf16.mxu0 0
  %2084 = vmatpush1.bf16.msra.mxu0 %v2081
  %2085 = vmatprep.subr.bf16.mxu0 0
  %2086 = vmatpush1.bf16.msra.mxu0 0
  %2087 = vmatprep.subr.bf16.mxu0 0
  %2088 = vmatpush1.bf16.msra.mxu0 0
  %2089 = vmatprep.subr.bf16.mxu0 0
  %2090 = vmatpush1.bf16.msra.mxu0 0
  %2091 = vmatprep.subr.bf16.mxu0 0
  %2092 = vmatpush1.bf16.msra.mxu0 0
  %2093 = vmatprep.subr.bf16.mxu0 0
  %2094 = vmatpush1.bf16.msra.mxu0 0
  %2095 = vmatprep.subr.bf16.mxu0 0
  %2096 = vmatpush1.bf16.msra.mxu0 0
  %2097 = vmatprep.subr.bf16.mxu0 0
  %2098 = vmatpush1.bf16.msra.mxu0 0
  %2099 = vmatprep.subr.bf16.mxu0 0
  %2100 = vmatpush1.bf16.msra.mxu0 0
  %2101 = vmatprep.subr.bf16.mxu0 0
  %2102 = vmatpush1.bf16.msra.mxu0 0
  %2103 = vmatprep.subr.bf16.mxu0 0
  %2104 = vmatpush1.bf16.msra.mxu0 0
  %2105 = vmatprep.subr.bf16.mxu0 0
  %2106 = vmatpush1.bf16.msra.mxu0 0
  %2107 = vmatprep.subr.bf16.mxu0 0
  %2108 = vmatpush1.bf16.msra.mxu0 0
  %2109 = vmatprep.subr.bf16.mxu0 0
  %2110 = vmatpush1.bf16.msra.mxu0 0
  %2111 = vmatprep.subr.bf16.mxu0 0
  %2112 = vmatpush1.bf16.msra.mxu0 0
  %2113 = vmatprep.subr.bf16.mxu0 0
  %2114 = vmatpush1.bf16.msra.mxu0 0
  %2115 = vmatprep.mubr.bf16.mxu0 0
  %2116 = vmatmul.mubr.bf16.gmra.mrb[0].mxu0 %v2078
  %v2117 = vpop.f32.mrb[0].mxu0
  %v2118 = vadd.f32 0.0, %v2117
  %v2119 = vpop.f32.mrb[0].mxu0
  %v2120 = vpop.f32.mrb[0].mxu0
  %v2121 = vpop.f32.mrb[0].mxu0
  %2122 = vdwg.mxu0
  %2123 = vst.msk [vmem:[#allocation2 + $0x8] sm:$0xff] %vm187, %v2118
  %2124 = vrot.lane.b32.xlu0 %v2005, 120
  %v2125 = vpop.permute.xlu0 %2124
  %2126 = vrot.lane.b32.xlu0 %v2005, 88
  %v2127 = vpop.permute.xlu0 %2126
  %v2129 = vsel %vm187, %v2125, 0
  %v2132 = vsel %vm187, %v2127, 0
  %2134 = vmatprep.subr.bf16.mxu0 0
  %2135 = vmatpush1.bf16.xpose.msra.mxu0 %v2132
  %2136 = vmatprep.subr.bf16.mxu0 0
  %2137 = vmatpush1.bf16.xpose.msra.mxu0 0
  %2138 = vmatprep.subr.bf16.mxu0 0
  %2139 = vmatpush1.bf16.xpose.msra.mxu0 0
  %2140 = vmatprep.subr.bf16.mxu0 0
  %2141 = vmatpush1.bf16.xpose.msra.mxu0 0
  %2142 = vmatprep.subr.bf16.mxu0 0
  %2143 = vmatpush1.bf16.xpose.msra.mxu0 0
  %2144 = vmatprep.subr.bf16.mxu0 0
  %2145 = vmatpush1.bf16.xpose.msra.mxu0 0
  %2146 = vmatprep.subr.bf16.mxu0 0
  %2147 = vmatpush1.bf16.xpose.msra.mxu0 0
  %2148 = vmatprep.subr.bf16.mxu0 0
  %2149 = vmatpush1.bf16.xpose.msra.mxu0 0
  %2150 = vmatprep.subr.bf16.mxu0 0
  %2151 = vmatpush1.bf16.xpose.msra.mxu0 0
  %2152 = vmatprep.subr.bf16.mxu0 0
  %2153 = vmatpush1.bf16.xpose.msra.mxu0 0
  %2154 = vmatprep.subr.bf16.mxu0 0
  %2155 = vmatpush1.bf16.xpose.msra.mxu0 0
  %2156 = vmatprep.subr.bf16.mxu0 0
  %2157 = vmatpush1.bf16.xpose.msra.mxu0 0
  %2158 = vmatprep.subr.bf16.mxu0 0
  %2159 = vmatpush1.bf16.xpose.msra.mxu0 0
  %2160 = vmatprep.subr.bf16.mxu0 0
  %2161 = vmatpush1.bf16.xpose.msra.mxu0 0
  %2162 = vmatprep.subr.bf16.mxu0 0
  %2163 = vmatpush1.bf16.xpose.msra.mxu0 0
  %2164 = vmatprep.subr.bf16.mxu0 0
  %2165 = vmatpush1.bf16.xpose.msra.mxu0 0
  %2166 = vmatprep.mubr.bf16.mxu0 0
  %2167 = vmatmul.mubr.bf16.gmra.mrb[0].mxu0 %v2129
  %v2168 = vpop.f32.mrb[0].mxu0
  %v2169 = vadd.f32 0.0, %v2168
  %v2170 = vpop.f32.mrb[0].mxu0
  %v2171 = vpop.f32.mrb[0].mxu0
  %v2172 = vpop.f32.mrb[0].mxu0
  %2173 = vdwg.mxu0
  %v2174 = vmul.f32 %v2169, 0.35355338
  %v2175 = vadd.f32 %v2174, %v2060
  %v2176 = vsel %vm187, %v2175, -inf
  %2177 = vmax.xlane.f32.xlu0 %v2176
  %v2178 = vpop.xlane.xlu0 %2177
  %v2179 = vsub.f32 %v2175, %v2178
  %v2180 = vmul.f32 %v2179, 1.442695
  %v2181 = vpow.pop %v2180
  %v2182 = vsel %vm187, %v2181, 0.0
  %2183 = vadd.xlane.f32.xlu0 %v2182
  %v2184 = vpop.xlane.xlu0 %2183
  %v2185 = vrcp.pop %v2184
  %v2186 = vmul.f32 %v2181, %v2185
  %v2187 = vpack.c.bf16 %v2186, %v2186
  %2188 = vrot.lane.b32.xlu0 %v2005, 56
  %v2189 = vpop.permute.xlu0 %2188
  %v2191 = vsel %vm187, %v2187, 0
  %v2194 = vsel %vm259, %v2189, 0
  %2196 = vmatprep.subr.bf16.mxu0 0
  %2197 = vmatpush1.bf16.msra.mxu0 %v2194
  %2198 = vmatprep.subr.bf16.mxu0 0
  %2199 = vmatpush1.bf16.msra.mxu0 0
  %2200 = vmatprep.subr.bf16.mxu0 0
  %2201 = vmatpush1.bf16.msra.mxu0 0
  %2202 = vmatprep.subr.bf16.mxu0 0
  %2203 = vmatpush1.bf16.msra.mxu0 0
  %2204 = vmatprep.subr.bf16.mxu0 0
  %2205 = vmatpush1.bf16.msra.mxu0 0
  %2206 = vmatprep.subr.bf16.mxu0 0
  %2207 = vmatpush1.bf16.msra.mxu0 0
  %2208 = vmatprep.subr.bf16.mxu0 0
  %2209 = vmatpush1.bf16.msra.mxu0 0
  %2210 = vmatprep.subr.bf16.mxu0 0
  %2211 = vmatpush1.bf16.msra.mxu0 0
  %2212 = vmatprep.subr.bf16.mxu0 0
  %2213 = vmatpush1.bf16.msra.mxu0 0
  %2214 = vmatprep.subr.bf16.mxu0 0
  %2215 = vmatpush1.bf16.msra.mxu0 0
  %2216 = vmatprep.subr.bf16.mxu0 0
  %2217 = vmatpush1.bf16.msra.mxu0 0
  %2218 = vmatprep.subr.bf16.mxu0 0
  %2219 = vmatpush1.bf16.msra.mxu0 0
  %2220 = vmatprep.subr.bf16.mxu0 0
  %2221 = vmatpush1.bf16.msra.mxu0 0
  %2222 = vmatprep.subr.bf16.mxu0 0
  %2223 = vmatpush1.bf16.msra.mxu0 0
  %2224 = vmatprep.subr.bf16.mxu0 0
  %2225 = vmatpush1.bf16.msra.mxu0 0
  %2226 = vmatprep.subr.bf16.mxu0 0
  %2227 = vmatpush1.bf16.msra.mxu0 0
  %2228 = vmatprep.mubr.bf16.mxu0 0
  %2229 = vmatmul.mubr.bf16.gmra.mrb[0].mxu0 %v2191
  %v2230 = vpop.f32.mrb[0].mxu0
  %v2231 = vadd.f32 0.0, %v2230
  %v2232 = vpop.f32.mrb[0].mxu0
  %v2233 = vpop.f32.mrb[0].mxu0
  %v2234 = vpop.f32.mrb[0].mxu0
  %2235 = vdwg.mxu0
  %2237 = vrot.lane.b32.xlu0 %v2231, 8
  %v2238 = vpop.permute.xlu0 %2237
  %2240 = vst.msk [vmem:[#allocation2 + $0x8] sm:$0xff] %vm420, %v2238
  %2241 = vrot.lane.b32.xlu0 %v2005, 112
  %v2242 = vpop.permute.xlu0 %2241
  %2243 = vrot.lane.b32.xlu0 %v2005, 80
  %v2244 = vpop.permute.xlu0 %2243
  %v2246 = vsel %vm187, %v2242, 0
  %v2249 = vsel %vm187, %v2244, 0
  %2251 = vmatprep.subr.bf16.mxu0 0
  %2252 = vmatpush1.bf16.xpose.msra.mxu0 %v2249
  %2253 = vmatprep.subr.bf16.mxu0 0
  %2254 = vmatpush1.bf16.xpose.msra.mxu0 0
  %2255 = vmatprep.subr.bf16.mxu0 0
  %2256 = vmatpush1.bf16.xpose.msra.mxu0 0
  %2257 = vmatprep.subr.bf16.mxu0 0
  %2258 = vmatpush1.bf16.xpose.msra.mxu0 0
  %2259 = vmatprep.subr.bf16.mxu0 0
  %2260 = vmatpush1.bf16.xpose.msra.mxu0 0
  %2261 = vmatprep.subr.bf16.mxu0 0
  %2262 = vmatpush1.bf16.xpose.msra.mxu0 0
  %2263 = vmatprep.subr.bf16.mxu0 0
  %2264 = vmatpush1.bf16.xpose.msra.mxu0 0
  %2265 = vmatprep.subr.bf16.mxu0 0
  %2266 = vmatpush1.bf16.xpose.msra.mxu0 0
  %2267 = vmatprep.subr.bf16.mxu0 0
  %2268 = vmatpush1.bf16.xpose.msra.mxu0 0
  %2269 = vmatprep.subr.bf16.mxu0 0
  %2270 = vmatpush1.bf16.xpose.msra.mxu0 0
  %2271 = vmatprep.subr.bf16.mxu0 0
  %2272 = vmatpush1.bf16.xpose.msra.mxu0 0
  %2273 = vmatprep.subr.bf16.mxu0 0
  %2274 = vmatpush1.bf16.xpose.msra.mxu0 0
  %2275 = vmatprep.subr.bf16.mxu0 0
  %2276 = vmatpush1.bf16.xpose.msra.mxu0 0
  %2277 = vmatprep.subr.bf16.mxu0 0
  %2278 = vmatpush1.bf16.xpose.msra.mxu0 0
  %2279 = vmatprep.subr.bf16.mxu0 0
  %2280 = vmatpush1.bf16.xpose.msra.mxu0 0
  %2281 = vmatprep.subr.bf16.mxu0 0
  %2282 = vmatpush1.bf16.xpose.msra.mxu0 0
  %2283 = vmatprep.mubr.bf16.mxu0 0
  %2284 = vmatmul.mubr.bf16.gmra.mrb[0].mxu0 %v2246
  %v2285 = vpop.f32.mrb[0].mxu0
  %v2286 = vadd.f32 0.0, %v2285
  %v2287 = vpop.f32.mrb[0].mxu0
  %v2288 = vpop.f32.mrb[0].mxu0
  %v2289 = vpop.f32.mrb[0].mxu0
  %2290 = vdwg.mxu0
  %v2291 = vmul.f32 %v2286, 0.35355338
  %v2292 = vadd.f32 %v2291, %v2060
  %v2293 = vsel %vm187, %v2292, -inf
  %2294 = vmax.xlane.f32.xlu0 %v2293
  %v2295 = vpop.xlane.xlu0 %2294
  %v2296 = vsub.f32 %v2292, %v2295
  %v2297 = vmul.f32 %v2296, 1.442695
  %v2298 = vpow.pop %v2297
  %v2299 = vsel %vm187, %v2298, 0.0
  %2300 = vadd.xlane.f32.xlu0 %v2299
  %v2301 = vpop.xlane.xlu0 %2300
  %v2302 = vrcp.pop %v2301
  %v2303 = vmul.f32 %v2298, %v2302
  %v2304 = vpack.c.bf16 %v2303, %v2303
  %2305 = vrot.lane.b32.xlu0 %v2005, 48
  %v2306 = vpop.permute.xlu0 %2305
  %v2308 = vsel %vm187, %v2304, 0
  %v2311 = vsel %vm259, %v2306, 0
  %2313 = vmatprep.subr.bf16.mxu0 0
  %2314 = vmatpush1.bf16.msra.mxu0 %v2311
  %2315 = vmatprep.subr.bf16.mxu0 0
  %2316 = vmatpush1.bf16.msra.mxu0 0
  %2317 = vmatprep.subr.bf16.mxu0 0
  %2318 = vmatpush1.bf16.msra.mxu0 0
  %2319 = vmatprep.subr.bf16.mxu0 0
  %2320 = vmatpush1.bf16.msra.mxu0 0
  %2321 = vmatprep.subr.bf16.mxu0 0
  %2322 = vmatpush1.bf16.msra.mxu0 0
  %2323 = vmatprep.subr.bf16.mxu0 0
  %2324 = vmatpush1.bf16.msra.mxu0 0
  %2325 = vmatprep.subr.bf16.mxu0 0
  %2326 = vmatpush1.bf16.msra.mxu0 0
  %2327 = vmatprep.subr.bf16.mxu0 0
  %2328 = vmatpush1.bf16.msra.mxu0 0
  %2329 = vmatprep.subr.bf16.mxu0 0
  %2330 = vmatpush1.bf16.msra.mxu0 0
  %2331 = vmatprep.subr.bf16.mxu0 0
  %2332 = vmatpush1.bf16.msra.mxu0 0
  %2333 = vmatprep.subr.bf16.mxu0 0
  %2334 = vmatpush1.bf16.msra.mxu0 0
  %2335 = vmatprep.subr.bf16.mxu0 0
  %2336 = vmatpush1.bf16.msra.mxu0 0
  %2337 = vmatprep.subr.bf16.mxu0 0
  %2338 = vmatpush1.bf16.msra.mxu0 0
  %2339 = vmatprep.subr.bf16.mxu0 0
  %2340 = vmatpush1.bf16.msra.mxu0 0
  %2341 = vmatprep.subr.bf16.mxu0 0
  %2342 = vmatpush1.bf16.msra.mxu0 0
  %2343 = vmatprep.subr.bf16.mxu0 0
  %2344 = vmatpush1.bf16.msra.mxu0 0
  %2345 = vmatprep.mubr.bf16.mxu0 0
  %2346 = vmatmul.mubr.bf16.gmra.mrb[0].mxu0 %v2308
  %v2347 = vpop.f32.mrb[0].mxu0
  %v2348 = vadd.f32 0.0, %v2347
  %v2349 = vpop.f32.mrb[0].mxu0
  %v2350 = vpop.f32.mrb[0].mxu0
  %v2351 = vpop.f32.mrb[0].mxu0
  %2352 = vdwg.mxu0
  %2354 = vrot.lane.b32.xlu0 %v2348, 16
  %v2355 = vpop.permute.xlu0 %2354
  %2357 = vst.msk [vmem:[#allocation2 + $0x8] sm:$0xff] %vm538, %v2355
  %2358 = vrot.lane.b32.xlu0 %v2005, 104
  %v2359 = vpop.permute.xlu0 %2358
  %2360 = vrot.lane.b32.xlu0 %v2005, 72
  %v2361 = vpop.permute.xlu0 %2360
  %v2363 = vsel %vm187, %v2359, 0
  %v2366 = vsel %vm187, %v2361, 0
  %2368 = vmatprep.subr.bf16.mxu0 0
  %2369 = vmatpush1.bf16.xpose.msra.mxu0 %v2366
  %2370 = vmatprep.subr.bf16.mxu0 0
  %2371 = vmatpush1.bf16.xpose.msra.mxu0 0
  %2372 = vmatprep.subr.bf16.mxu0 0
  %2373 = vmatpush1.bf16.xpose.msra.mxu0 0
  %2374 = vmatprep.subr.bf16.mxu0 0
  %2375 = vmatpush1.bf16.xpose.msra.mxu0 0
  %2376 = vmatprep.subr.bf16.mxu0 0
  %2377 = vmatpush1.bf16.xpose.msra.mxu0 0
  %2378 = vmatprep.subr.bf16.mxu0 0
  %2379 = vmatpush1.bf16.xpose.msra.mxu0 0
  %2380 = vmatprep.subr.bf16.mxu0 0
  %2381 = vmatpush1.bf16.xpose.msra.mxu0 0
  %2382 = vmatprep.subr.bf16.mxu0 0
  %2383 = vmatpush1.bf16.xpose.msra.mxu0 0
  %2384 = vmatprep.subr.bf16.mxu0 0
  %2385 = vmatpush1.bf16.xpose.msra.mxu0 0
  %2386 = vmatprep.subr.bf16.mxu0 0
  %2387 = vmatpush1.bf16.xpose.msra.mxu0 0
  %2388 = vmatprep.subr.bf16.mxu0 0
  %2389 = vmatpush1.bf16.xpose.msra.mxu0 0
  %2390 = vmatprep.subr.bf16.mxu0 0
  %2391 = vmatpush1.bf16.xpose.msra.mxu0 0
  %2392 = vmatprep.subr.bf16.mxu0 0
  %2393 = vmatpush1.bf16.xpose.msra.mxu0 0
  %2394 = vmatprep.subr.bf16.mxu0 0
  %2395 = vmatpush1.bf16.xpose.msra.mxu0 0
  %2396 = vmatprep.subr.bf16.mxu0 0
  %2397 = vmatpush1.bf16.xpose.msra.mxu0 0
  %2398 = vmatprep.subr.bf16.mxu0 0
  %2399 = vmatpush1.bf16.xpose.msra.mxu0 0
  %2400 = vmatprep.mubr.bf16.mxu0 0
  %2401 = vmatmul.mubr.bf16.gmra.mrb[0].mxu0 %v2363
  %v2402 = vpop.f32.mrb[0].mxu0
  %v2403 = vadd.f32 0.0, %v2402
  %v2404 = vpop.f32.mrb[0].mxu0
  %v2405 = vpop.f32.mrb[0].mxu0
  %v2406 = vpop.f32.mrb[0].mxu0
  %2407 = vdwg.mxu0
  %v2408 = vmul.f32 %v2403, 0.35355338
  %v2409 = vadd.f32 %v2408, %v2060
  %v2410 = vsel %vm187, %v2409, -inf
  %2411 = vmax.xlane.f32.xlu0 %v2410
  %v2412 = vpop.xlane.xlu0 %2411
  %v2413 = vsub.f32 %v2409, %v2412
  %v2414 = vmul.f32 %v2413, 1.442695
  %v2415 = vpow.pop %v2414
  %v2416 = vsel %vm187, %v2415, 0.0
  %2417 = vadd.xlane.f32.xlu0 %v2416
  %v2418 = vpop.xlane.xlu0 %2417
  %v2419 = vrcp.pop %v2418
  %v2420 = vmul.f32 %v2415, %v2419
  %v2421 = vpack.c.bf16 %v2420, %v2420
  %2422 = vrot.lane.b32.xlu0 %v2005, 40
  %v2423 = vpop.permute.xlu0 %2422
  %v2425 = vsel %vm187, %v2421, 0
  %v2428 = vsel %vm259, %v2423, 0
  %2430 = vmatprep.subr.bf16.mxu0 0
  %2431 = vmatpush1.bf16.msra.mxu0 %v2428
  %2432 = vmatprep.subr.bf16.mxu0 0
  %2433 = vmatpush1.bf16.msra.mxu0 0
  %2434 = vmatprep.subr.bf16.mxu0 0
  %2435 = vmatpush1.bf16.msra.mxu0 0
  %2436 = vmatprep.subr.bf16.mxu0 0
  %2437 = vmatpush1.bf16.msra.mxu0 0
  %2438 = vmatprep.subr.bf16.mxu0 0
  %2439 = vmatpush1.bf16.msra.mxu0 0
  %2440 = vmatprep.subr.bf16.mxu0 0
  %2441 = vmatpush1.bf16.msra.mxu0 0
  %2442 = vmatprep.subr.bf16.mxu0 0
  %2443 = vmatpush1.bf16.msra.mxu0 0
  %2444 = vmatprep.subr.bf16.mxu0 0
  %2445 = vmatpush1.bf16.msra.mxu0 0
  %2446 = vmatprep.subr.bf16.mxu0 0
  %2447 = vmatpush1.bf16.msra.mxu0 0
  %2448 = vmatprep.subr.bf16.mxu0 0
  %2449 = vmatpush1.bf16.msra.mxu0 0
  %2450 = vmatprep.subr.bf16.mxu0 0
  %2451 = vmatpush1.bf16.msra.mxu0 0
  %2452 = vmatprep.subr.bf16.mxu0 0
  %2453 = vmatpush1.bf16.msra.mxu0 0
  %2454 = vmatprep.subr.bf16.mxu0 0
  %2455 = vmatpush1.bf16.msra.mxu0 0
  %2456 = vmatprep.subr.bf16.mxu0 0
  %2457 = vmatpush1.bf16.msra.mxu0 0
  %2458 = vmatprep.subr.bf16.mxu0 0
  %2459 = vmatpush1.bf16.msra.mxu0 0
  %2460 = vmatprep.subr.bf16.mxu0 0
  %2461 = vmatpush1.bf16.msra.mxu0 0
  %2462 = vmatprep.mubr.bf16.mxu0 0
  %2463 = vmatmul.mubr.bf16.gmra.mrb[0].mxu0 %v2425
  %v2464 = vpop.f32.mrb[0].mxu0
  %v2465 = vadd.f32 0.0, %v2464
  %v2466 = vpop.f32.mrb[0].mxu0
  %v2467 = vpop.f32.mrb[0].mxu0
  %v2468 = vpop.f32.mrb[0].mxu0
  %2469 = vdwg.mxu0
  %2471 = vrot.lane.b32.xlu0 %v2465, 24
  %v2472 = vpop.permute.xlu0 %2471
  %2474 = vst.msk [vmem:[#allocation2 + $0x8] sm:$0xff] %vm656, %v2472
  %v2475 = vld [vmem:[#allocation2] sm:$0xff]
  %v2476 = vld [vmem:[#allocation2 + $0x8] sm:$0xff]
  %s2477 = scalar_lea.vmem %s6, 16
  %v2478 = vld [vmem:[%s2477] sm:$0xf]
  %v2479 = vld [vmem:[%s2477 + $0x4] sm:$0xf]
  %v2480 = vld [vmem:[%s2477 + $0x8] sm:$0xf]
  %v2481 = vld [vmem:[%s2477 + $0xc] sm:$0xf]
  %v2482 = vpack.c.bf16 %v2476, %v2475
  %s2483 = scalar_lea.vmem %s7, 1
  %v2484 = vld [vmem:[%s2483] sm:$0x1]
  %v2486 = vlaneseq
  %v2487 = vshrl.u32 %v2486, 7
  %v2488 = vsub.s32 0, %v2487
  %v2489 = vrot.slane %v2484, %v2488
  %v2495 = vunpack.c.l.b16 %v2478
  %v2496 = vunpack.c.l.b16 %v2479
  %v2497 = vunpack.c.l.b16 %v2480
  %v2498 = vunpack.c.l.b16 %v2481
  %v2499 = vpack.c.b16 %v2496, %v2495
  %v2500 = vpack.c.b16 %v2498, %v2497
  %v2504 = vsel %vm70, %v2482, 0
  %2506 = vmatprep.subr.bf16.mxu0 0
  %2507 = vmatpush1.bf16.msra.mxu0 %v2499
  %2508 = vmatprep.subr.bf16.mxu0 0
  %2509 = vmatpush1.bf16.msra.mxu0 %v2500
  %2510 = vmatprep.subr.bf16.mxu0 0
  %2511 = vmatpush1.bf16.msra.mxu0 0
  %2512 = vmatprep.subr.bf16.mxu0 0
  %2513 = vmatpush1.bf16.msra.mxu0 0
  %2514 = vmatprep.subr.bf16.mxu0 0
  %2515 = vmatpush1.bf16.msra.mxu0 0
  %2516 = vmatprep.subr.bf16.mxu0 0
  %2517 = vmatpush1.bf16.msra.mxu0 0
  %2518 = vmatprep.subr.bf16.mxu0 0
  %2519 = vmatpush1.bf16.msra.mxu0 0
  %2520 = vmatprep.subr.bf16.mxu0 0
  %2521 = vmatpush1.bf16.msra.mxu0 0
  %2522 = vmatprep.subr.bf16.mxu0 0
  %2523 = vmatpush1.bf16.msra.mxu0 0
  %2524 = vmatprep.subr.bf16.mxu0 0
  %2525 = vmatpush1.bf16.msra.mxu0 0
  %2526 = vmatprep.subr.bf16.mxu0 0
  %2527 = vmatpush1.bf16.msra.mxu0 0
  %2528 = vmatprep.subr.bf16.mxu0 0
  %2529 = vmatpush1.bf16.msra.mxu0 0
  %2530 = vmatprep.subr.bf16.mxu0 0
  %2531 = vmatpush1.bf16.msra.mxu0 0
  %2532 = vmatprep.subr.bf16.mxu0 0
  %2533 = vmatpush1.bf16.msra.mxu0 0
  %2534 = vmatprep.subr.bf16.mxu0 0
  %2535 = vmatpush1.bf16.msra.mxu0 0
  %2536 = vmatprep.subr.bf16.mxu0 0
  %2537 = vmatpush1.bf16.msra.mxu0 0
  %2538 = vmatprep.mubr.bf16.mxu0 0
  %2539 = vmatmul.mubr.bf16.gmra.mrb[0].mxu0 %v2504
  %v2540 = vpop.f32.mrb[0].mxu0
  %v2541 = vadd.f32 %v2489, %v2540
  %v2542 = vpop.f32.mrb[0].mxu0
  %v2543 = vpop.f32.mrb[0].mxu0
  %v2544 = vadd.f32 %v2489, %v2543
  %v2545 = vpop.f32.mrb[0].mxu0
  %2546 = vdwg.mxu0
  %v2547 = vadd.f32 %v2541, %v1461
  %v2548 = vadd.f32 %v2544, %v1462
  %s2549 = scalar_lea.vmem %s8, 1
  %v2550 = vld [vmem:[%s2549] sm:$0x1]
  %s2551 = scalar_lea.vmem %s9, 1
  %v2552 = vld [vmem:[%s2551] sm:$0x1]
  %v2553 = vsel %vm70, %v2547, 0.0
  %2554 = vadd.xlane.f32.xlu0 %v2553
  %v2555 = vpop.xlane.xlu0 %2554
  %v2556 = vsel %vm70, %v2548, 0.0
  %2557 = vadd.xlane.f32.xlu0 %v2556
  %v2558 = vpop.xlane.xlu0 %2557
  %v2559 = vmul.f32 %v2555, %v77
  %v2560 = vmul.f32 %v2558, %v77
  %v2561 = vsub.f32 %v2547, %v2559
  %v2562 = vsub.f32 %v2548, %v2560
  %v2563 = vmul.f32 %v2561, %v2561
  %v2564 = vmul.f32 %v2562, %v2562
  %v2565 = vsel %vm70, %v2563, 0.0
  %2566 = vadd.xlane.f32.xlu0 %v2565
  %v2567 = vpop.xlane.xlu0 %2566
  %v2568 = vsel %vm70, %v2564, 0.0
  %2569 = vadd.xlane.f32.xlu0 %v2568
  %v2570 = vpop.xlane.xlu0 %2569
  %v2571 = vmul.f32 %v2567, %v77
  %v2572 = vmul.f32 %v2570, %v77
  %v2573 = vadd.f32 %v2571, 1e-12
  %v2574 = vadd.f32 %v2572, 1e-12
  %v2575 = vrsqrt.pop %v2573
  %v2576 = vrsqrt.pop %v2574
  %v2577 = vmul.f32 %v2561, %v2575
  %v2578 = vmul.f32 %v2562, %v2576
  %v2580 = vlaneseq
  %v2581 = vshrl.u32 %v2580, 7
  %v2582 = vsub.s32 0, %v2581
  %v2583 = vrot.slane %v2550, %v2582
  %v2585 = vmul.f32 %v2577, %v2583
  %v2586 = vmul.f32 %v2578, %v2583
  %v2588 = vlaneseq
  %v2589 = vshrl.u32 %v2588, 7
  %v2590 = vsub.s32 0, %v2589
  %v2591 = vrot.slane %v2552, %v2590
  %v2593 = vadd.f32 %v2585, %v2591
  %v2594 = vadd.f32 %v2586, %v2591
  %s2595 = scalar_lea.vmem %s10, 16
  %v2596 = vld [vmem:[%s2595] sm:$0xf]
  %v2597 = vld [vmem:[%s2595 + $0x4] sm:$0xf]
  %v2598 = vld [vmem:[%s2595 + $0x8] sm:$0xf]
  %v2599 = vld [vmem:[%s2595 + $0xc] sm:$0xf]
  %v2600 = vpack.c.bf16 %v2594, %v2593
  %s2601 = scalar_lea.vmem %s11, 1
  %v2602 = vld [vmem:[%s2601] sm:$0x1]
  %v2604 = vlaneseq
  %v2605 = vshrl.u32 %v2604, 7
  %v2606 = vsub.s32 0, %v2605
  %v2607 = vrot.slane %v2602, %v2606
  %v2613 = vunpack.c.l.b16 %v2596
  %v2614 = vunpack.c.l.b16 %v2597
  %v2615 = vunpack.c.l.b16 %v2598
  %v2616 = vunpack.c.l.b16 %v2599
  %v2617 = vpack.c.b16 %v2614, %v2613
  %v2618 = vpack.c.b16 %v2616, %v2615
  %v2622 = vsel %vm70, %v2600, 0
  %2624 = vmatprep.subr.bf16.mxu0 0
  %2625 = vmatpush1.bf16.msra.mxu0 %v2617
  %2626 = vmatprep.subr.bf16.mxu0 0
  %2627 = vmatpush1.bf16.msra.mxu0 %v2618
  %2628 = vmatprep.subr.bf16.mxu0 0
  %2629 = vmatpush1.bf16.msra.mxu0 0
  %2630 = vmatprep.subr.bf16.mxu0 0
  %2631 = vmatpush1.bf16.msra.mxu0 0
  %2632 = vmatprep.subr.bf16.mxu0 0
  %2633 = vmatpush1.bf16.msra.mxu0 0
  %2634 = vmatprep.subr.bf16.mxu0 0
  %2635 = vmatpush1.bf16.msra.mxu0 0
  %2636 = vmatprep.subr.bf16.mxu0 0
  %2637 = vmatpush1.bf16.msra.mxu0 0
  %2638 = vmatprep.subr.bf16.mxu0 0
  %2639 = vmatpush1.bf16.msra.mxu0 0
  %2640 = vmatprep.subr.bf16.mxu0 0
  %2641 = vmatpush1.bf16.msra.mxu0 0
  %2642 = vmatprep.subr.bf16.mxu0 0
  %2643 = vmatpush1.bf16.msra.mxu0 0
  %2644 = vmatprep.subr.bf16.mxu0 0
  %2645 = vmatpush1.bf16.msra.mxu0 0
  %2646 = vmatprep.subr.bf16.mxu0 0
  %2647 = vmatpush1.bf16.msra.mxu0 0
  %2648 = vmatprep.subr.bf16.mxu0 0
  %2649 = vmatpush1.bf16.msra.mxu0 0
  %2650 = vmatprep.subr.bf16.mxu0 0
  %2651 = vmatpush1.bf16.msra.mxu0 0
  %2652 = vmatprep.subr.bf16.mxu0 0
  %2653 = vmatpush1.bf16.msra.mxu0 0
  %2654 = vmatprep.subr.bf16.mxu0 0
  %2655 = vmatpush1.bf16.msra.mxu0 0
  %2656 = vmatprep.mubr.bf16.mxu0 0
  %2657 = vmatmul.mubr.bf16.gmra.mrb[0].mxu0 %v2622
  %v2658 = vpop.f32.mrb[0].mxu0
  %v2659 = vadd.f32 %v2607, %v2658
  %v2660 = vpop.f32.mrb[0].mxu0
  %v2661 = vpop.f32.mrb[0].mxu0
  %v2662 = vadd.f32 %v2607, %v2661
  %v2663 = vpop.f32.mrb[0].mxu0
  %2664 = vdwg.mxu0
  %v2665 = vmul.f32 %v2659, 0.5
  %v2666 = vmul.f32 %v2662, 0.5
  %v2667 = vmul.f32 %v2659, 0.044715
  %v2668 = vmul.f32 %v2662, 0.044715
  %v2669 = vmul.f32 %v2667, %v2659
  %v2670 = vmul.f32 %v2668, %v2662
  %v2671 = vmul.f32 %v2669, %v2659
  %v2672 = vmul.f32 %v2670, %v2662
  %v2673 = vadd.f32 %v2659, %v2671
  %v2674 = vadd.f32 %v2662, %v2672
  %v2675 = vmul.f32 %v2673, 0.7978846
  %v2676 = vmul.f32 %v2674, 0.7978846
  %v2677 = vtanh.pop %v2675
  %v2678 = vtanh.pop %v2676
  %v2679 = vadd.f32 %v2677, 1.0
  %v2680 = vadd.f32 %v2678, 1.0
  %v2681 = vmul.f32 %v2665, %v2679
  %v2682 = vmul.f32 %v2666, %v2680
  %s2683 = scalar_lea.vmem %s12, 32
  %v2684 = vld [vmem:[%s2683] sm:$0xf]
  %v2685 = vld [vmem:[%s2683 + $0x4] sm:$0xf]
  %v2686 = vld [vmem:[%s2683 + $0x8] sm:$0xf]
  %v2687 = vld [vmem:[%s2683 + $0xc] sm:$0xf]
  %v2688 = vld [vmem:[%s2683 + $0x10] sm:$0xf]
  %v2689 = vld [vmem:[%s2683 + $0x14] sm:$0xf]
  %v2690 = vld [vmem:[%s2683 + $0x18] sm:$0xf]
  %v2691 = vld [vmem:[%s2683 + $0x1c] sm:$0xf]
  %v2692 = vpack.c.bf16 %v2682, %v2681
  %s2693 = scalar_lea.vmem %s13, 1
  %v2694 = vld [vmem:[%s2693] sm:$0x1]
  %v2696 = vlaneseq
  %v2697 = vshrl.u32 %v2696, 7
  %v2698 = vsub.s32 0, %v2697
  %v2699 = vrot.slane %v2694, %v2698
  %v2709 = vunpack.c.l.b16 %v2684
  %v2710 = vunpack.c.l.b16 %v2685
  %v2711 = vunpack.c.l.b16 %v2686
  %v2712 = vunpack.c.l.b16 %v2687
  %v2713 = vunpack.c.l.b16 %v2688
  %v2714 = vunpack.c.l.b16 %v2689
  %v2715 = vunpack.c.l.b16 %v2690
  %v2716 = vunpack.c.l.b16 %v2691
  %v2717 = vpack.c.b16 %v2710, %v2709
  %v2718 = vpack.c.b16 %v2712, %v2711
  %v2719 = vpack.c.b16 %v2714, %v2713
  %v2720 = vpack.c.b16 %v2716, %v2715
  %v2726 = vsel %vm1372, %v2692, 0
  %2728 = vmatprep.subr.bf16.mxu0 0
  %2729 = vmatpush1.bf16.msra.mxu0 %v2717
  %2730 = vmatprep.subr.bf16.mxu0 0
  %2731 = vmatpush1.bf16.msra.mxu0 %v2718
  %2732 = vmatprep.subr.bf16.mxu0 0
  %2733 = vmatpush1.bf16.msra.mxu0 %v2719
  %2734 = vmatprep.subr.bf16.mxu0 0
  %2735 = vmatpush1.bf16.msra.mxu0 %v2720
  %2736 = vmatprep.subr.bf16.mxu0 0
  %2737 = vmatpush1.bf16.msra.mxu0 0
  %2738 = vmatprep.subr.bf16.mxu0 0
  %2739 = vmatpush1.bf16.msra.mxu0 0
  %2740 = vmatprep.subr.bf16.mxu0 0
  %2741 = vmatpush1.bf16.msra.mxu0 0
  %2742 = vmatprep.subr.bf16.mxu0 0
  %2743 = vmatpush1.bf16.msra.mxu0 0
  %2744 = vmatprep.subr.bf16.mxu0 0
  %2745 = vmatpush1.bf16.msra.mxu0 0
  %2746 = vmatprep.subr.bf16.mxu0 0
  %2747 = vmatpush1.bf16.msra.mxu0 0
  %2748 = vmatprep.subr.bf16.mxu0 0
  %2749 = vmatpush1.bf16.msra.mxu0 0
  %2750 = vmatprep.subr.bf16.mxu0 0
  %2751 = vmatpush1.bf16.msra.mxu0 0
  %2752 = vmatprep.subr.bf16.mxu0 0
  %2753 = vmatpush1.bf16.msra.mxu0 0
  %2754 = vmatprep.subr.bf16.mxu0 0
  %2755 = vmatpush1.bf16.msra.mxu0 0
  %2756 = vmatprep.subr.bf16.mxu0 0
  %2757 = vmatpush1.bf16.msra.mxu0 0
  %2758 = vmatprep.subr.bf16.mxu0 0
  %2759 = vmatpush1.bf16.msra.mxu0 0
  %2760 = vmatprep.mubr.bf16.mxu0 0
  %2761 = vmatmul.mubr.bf16.gmra.mrb[0].mxu0 %v2726
  %v2762 = vpop.f32.mrb[0].mxu0
  %v2763 = vadd.f32 %v2699, %v2762
  %v2764 = vpop.f32.mrb[0].mxu0
  %v2765 = vpop.f32.mrb[0].mxu0
  %v2766 = vadd.f32 %v2699, %v2765
  %v2767 = vpop.f32.mrb[0].mxu0
  %2768 = vdwg.mxu0
  %v2769 = vadd.f32 %v2763, %v2593
  %v2770 = vadd.f32 %v2766, %v2594
  %s2771 = scalar_lea.vmem %s14, 1
  %v2772 = vld [vmem:[%s2771] sm:$0x1]
  %s2773 = scalar_lea.vmem %s15, 1
  %v2774 = vld [vmem:[%s2773] sm:$0x1]
  %v2775 = vsel %vm70, %v2769, 0.0
  %2776 = vadd.xlane.f32.xlu0 %v2775
  %v2777 = vpop.xlane.xlu0 %2776
  %v2778 = vsel %vm70, %v2770, 0.0
  %2779 = vadd.xlane.f32.xlu0 %v2778
  %v2780 = vpop.xlane.xlu0 %2779
  %v2781 = vmul.f32 %v2777, %v77
  %v2782 = vmul.f32 %v2780, %v77
  %v2783 = vsub.f32 %v2769, %v2781
  %v2784 = vsub.f32 %v2770, %v2782
  %v2785 = vmul.f32 %v2783, %v2783
  %v2786 = vmul.f32 %v2784, %v2784
  %v2787 = vsel %vm70, %v2785, 0.0
  %2788 = vadd.xlane.f32.xlu0 %v2787
  %v2789 = vpop.xlane.xlu0 %2788
  %v2790 = vsel %vm70, %v2786, 0.0
  %2791 = vadd.xlane.f32.xlu0 %v2790
  %v2792 = vpop.xlane.xlu0 %2791
  %v2793 = vmul.f32 %v2789, %v77
  %v2794 = vmul.f32 %v2792, %v77
  %v2795 = vadd.f32 %v2793, 1e-12
  %v2796 = vadd.f32 %v2794, 1e-12
  %v2797 = vrsqrt.pop %v2795
  %v2798 = vrsqrt.pop %v2796
  %v2799 = vmul.f32 %v2783, %v2797
  %v2800 = vmul.f32 %v2784, %v2798
  %v2802 = vlaneseq
  %v2803 = vshrl.u32 %v2802, 7
  %v2804 = vsub.s32 0, %v2803
  %v2805 = vrot.slane %v2772, %v2804
  %v2807 = vmul.f32 %v2799, %v2805
  %v2808 = vmul.f32 %v2800, %v2805
  %v2810 = vlaneseq
  %v2811 = vshrl.u32 %v2810, 7
  %v2812 = vsub.s32 0, %v2811
  %v2813 = vrot.slane %v2774, %v2812
  %v2815 = vadd.f32 %v2807, %v2813
  %v2816 = vadd.f32 %v2808, %v2813
  %v2817 = vld [vmem:[%s16] sm:$0xf]
  %v2818 = vld [vmem:[%s16 + $0x4] sm:$0xf]
  %v2819 = vld [vmem:[%s16 + $0x8] sm:$0xf]
  %v2820 = vld [vmem:[%s16 + $0xc] sm:$0xf]
  %v2821 = vpack.c.bf16 %v2816, %v2815
  %v2822 = vld [vmem:[%s17] sm:$0x1]
  %v2824 = vlaneseq
  %v2825 = vshrl.u32 %v2824, 7
  %v2826 = vsub.s32 0, %v2825
  %v2827 = vrot.slane %v2822, %v2826
  %v2833 = vunpack.c.l.b16 %v2817
  %v2834 = vunpack.c.l.b16 %v2818
  %v2835 = vunpack.c.l.b16 %v2819
  %v2836 = vunpack.c.l.b16 %v2820
  %v2837 = vpack.c.b16 %v2834, %v2833
  %v2838 = vpack.c.b16 %v2836, %v2835
  %v2842 = vsel %vm70, %v2821, 0
  %2844 = vmatprep.subr.bf16.mxu0 0
  %2845 = vmatpush1.bf16.msra.mxu0 %v2837
  %2846 = vmatprep.subr.bf16.mxu0 0
  %2847 = vmatpush1.bf16.msra.mxu0 %v2838
  %2848 = vmatprep.subr.bf16.mxu0 0
  %2849 = vmatpush1.bf16.msra.mxu0 0
  %2850 = vmatprep.subr.bf16.mxu0 0
  %2851 = vmatpush1.bf16.msra.mxu0 0
  %2852 = vmatprep.subr.bf16.mxu0 0
  %2853 = vmatpush1.bf16.msra.mxu0 0
  %2854 = vmatprep.subr.bf16.mxu0 0
  %2855 = vmatpush1.bf16.msra.mxu0 0
  %2856 = vmatprep.subr.bf16.mxu0 0
  %2857 = vmatpush1.bf16.msra.mxu0 0
  %2858 = vmatprep.subr.bf16.mxu0 0
  %2859 = vmatpush1.bf16.msra.mxu0 0
  %2860 = vmatprep.subr.bf16.mxu0 0
  %2861 = vmatpush1.bf16.msra.mxu0 0
  %2862 = vmatprep.subr.bf16.mxu0 0
  %2863 = vmatpush1.bf16.msra.mxu0 0
  %2864 = vmatprep.subr.bf16.mxu0 0
  %2865 = vmatpush1.bf16.msra.mxu0 0
  %2866 = vmatprep.subr.bf16.mxu0 0
  %2867 = vmatpush1.bf16.msra.mxu0 0
  %2868 = vmatprep.subr.bf16.mxu0 0
  %2869 = vmatpush1.bf16.msra.mxu0 0
  %2870 = vmatprep.subr.bf16.mxu0 0
  %2871 = vmatpush1.bf16.msra.mxu0 0
  %2872 = vmatprep.subr.bf16.mxu0 0
  %2873 = vmatpush1.bf16.msra.mxu0 0
  %2874 = vmatprep.subr.bf16.mxu0 0
  %2875 = vmatpush1.bf16.msra.mxu0 0
  %2876 = vmatprep.mubr.bf16.mxu0 0
  %2877 = vmatmul.mubr.bf16.gmra.mrb[0].mxu0 %v2842
  %v2878 = vpop.f32.mrb[0].mxu0
  %v2879 = vadd.f32 %v2827, %v2878
  %v2880 = vpop.f32.mrb[0].mxu0
  %v2881 = vpop.f32.mrb[0].mxu0
  %v2882 = vadd.f32 %v2827, %v2881
  %v2883 = vpop.f32.mrb[0].mxu0
  %2884 = vdwg.mxu0
  %v2885 = vtanh.pop %v2879
  %v2886 = vtanh.pop %v2882
  %v2887 = vld [vmem:[%s18] sm:$0xf]
  %v2888 = vld [vmem:[%s18 + $0x4] sm:$0xf]
  %v2889 = vld [vmem:[%s18 + $0x8] sm:$0xf]
  %v2890 = vld [vmem:[%s18 + $0xc] sm:$0xf]
  %v2891 = vpack.c.bf16 %v2886, %v2885
  %v2892 = vld [vmem:[%s19] sm:$0x1]
  %v2894 = vlaneseq
  %v2895 = vshrl.u32 %v2894, 7
  %v2896 = vsub.s32 0, %v2895
  %v2897 = vrot.slane %v2892, %v2896
  %v2903 = vunpack.c.l.b16 %v2887
  %v2904 = vunpack.c.l.b16 %v2888
  %v2905 = vunpack.c.l.b16 %v2889
  %v2906 = vunpack.c.l.b16 %v2890
  %v2907 = vpack.c.b16 %v2904, %v2903
  %v2908 = vpack.c.b16 %v2906, %v2905
  %v2912 = vsel %vm70, %v2891, 0
  %2914 = vmatprep.subr.bf16.mxu0 0
  %2915 = vmatpush1.bf16.msra.mxu0 %v2907
  %2916 = vmatprep.subr.bf16.mxu0 0
  %2917 = vmatpush1.bf16.msra.mxu0 %v2908
  %2918 = vmatprep.subr.bf16.mxu0 0
  %2919 = vmatpush1.bf16.msra.mxu0 0
  %2920 = vmatprep.subr.bf16.mxu0 0
  %2921 = vmatpush1.bf16.msra.mxu0 0
  %2922 = vmatprep.subr.bf16.mxu0 0
  %2923 = vmatpush1.bf16.msra.mxu0 0
  %2924 = vmatprep.subr.bf16.mxu0 0
  %2925 = vmatpush1.bf16.msra.mxu0 0
  %2926 = vmatprep.subr.bf16.mxu0 0
  %2927 = vmatpush1.bf16.msra.mxu0 0
  %2928 = vmatprep.subr.bf16.mxu0 0
  %2929 = vmatpush1.bf16.msra.mxu0 0
  %2930 = vmatprep.subr.bf16.mxu0 0
  %2931 = vmatpush1.bf16.msra.mxu0 0
  %2932 = vmatprep.subr.bf16.mxu0 0
  %2933 = vmatpush1.bf16.msra.mxu0 0
  %2934 = vmatprep.subr.bf16.mxu0 0
  %2935 = vmatpush1.bf16.msra.mxu0 0
  %2936 = vmatprep.subr.bf16.mxu0 0
  %2937 = vmatpush1.bf16.msra.mxu0 0
  %2938 = vmatprep.subr.bf16.mxu0 0
  %2939 = vmatpush1.bf16.msra.mxu0 0
  %2940 = vmatprep.subr.bf16.mxu0 0
  %2941 = vmatpush1.bf16.msra.mxu0 0
  %2942 = vmatprep.subr.bf16.mxu0 0
  %2943 = vmatpush1.bf16.msra.mxu0 0
  %2944 = vmatprep.subr.bf16.mxu0 0
  %2945 = vmatpush1.bf16.msra.mxu0 0
  %2946 = vmatprep.mubr.bf16.mxu0 0
  %2947 = vmatmul.mubr.bf16.gmra.mrb[0].mxu0 %v2912
  %v2948 = vpop.f32.mrb[0].mxu0
  %v2949 = vadd.f32 %v2897, %v2948
  %v2950 = vpop.f32.mrb[0].mxu0
  %v2951 = vpop.f32.mrb[0].mxu0
  %v2952 = vadd.f32 %v2897, %v2951
  %v2953 = vpop.f32.mrb[0].mxu0
  %2954 = vdwg.mxu0
  %2955 = vst [vmem:[%s20] sm:$0xff] %v2949
  %2956 = vst [vmem:[%s20 + $0x8] sm:$0xff] %v2952
  // Predicated region
  $region82: #{bert_classifier_forward.1} parent=0 // pred_check
    _
  $region83: #{bert_classifier_forward.1} parent=0 // pred_check_branch
    %2958 = sbr.rel (0) target = $region85
  $region84: #{bert_classifier_forward.1} parent=0 // pred_region
    _
  $region85: #{bert_classifier_forward.1} parent=0 // pred_fallthru
    _
  // Predicated region
  $region86: #{bert_classifier_forward.1} parent=0 // pred_check
    _
  $region87: #{bert_classifier_forward.1} parent=0 // pred_check_branch
    %2960 = sbr.rel (0) target = $region89
  $region88: #{bert_classifier_forward.1} parent=0 // pred_region
    _
  $region89: #{bert_classifier_forward.1} parent=0 // pred_fallthru
    _

</llo_original>
